<compile_context>
chip_gen: v6e
topology: v6e:2x2x1
jax: 0.10.0
libtpu: 0.0.40
codegen_flags: <defaults>
</compile_context>

<pallas_src>
import functools

import jax
import jax.numpy as jnp
from jax.experimental import pallas as pl
from jax.experimental.pallas import tpu as pltpu


def deep_rnn_kernel(x_ref,                                           # (T, Bp, D) time-major
                    w0rz_ref, b0rz_ref, w0n_ref, b0in_ref,           # GRU L0 input proj
                    w0hrz_ref, w0hn_ref, b0hn_ref,                   # GRU L0 recurrent
                    w1rzk_ref, b1rz_ref, w1in_ref, b1in_ref,         # GRU L1 (K-stacked rz)
                    w1hn_ref, b1hn_ref,                              # GRU L1 n-gate recurrent
                    w3_ref, b3_ref,                                  # fc3 head
                    out_ref):                                        # (Bp, n_actions)
    T, B, D = x_ref.shape
    H = w0hn_ref.shape[0]
    f32 = jnp.float32

    # ---- hoisted, off-chain layer-0 input projections (lane-dense) ----
    # b0rz already holds b_ih + b_hh for the r/z gates; b0in holds b_in only.
    x2d = x_ref[...].reshape(T * B, D)
    gi0_rz = jnp.dot(x2d, w0rz_ref[...], preferred_element_type=f32) + b0rz_ref[...]   # (T*B, 2H)
    gi0_n = jnp.dot(x2d, w0n_ref[...], preferred_element_type=f32) + b0in_ref[...]     # (T*B, H)

    # Hoisted small broadcasts (JAX does not CSE broadcast_in_dim inside loops).
    b0hn = jnp.broadcast_to(b0hn_ref[...], (B, H))
    b1hn = jnp.broadcast_to(b1hn_ref[...], (B, H))
    b1rz = b1rz_ref[...]
    b1in = b1in_ref[...]

    h0 = jnp.zeros((B, H), f32)
    h1 = jnp.zeros((B, H), f32)

    # T is small & static -> fully unrolled; both layers interleaved so the
    # serial chain is ~T GRU cells, not 2T.
    for t in range(T):
        lo = t * B                                   # contiguous sublane block
        girz = gi0_rz[lo:lo + B, :]                  # (B, 2H), lane-dense
        gin = gi0_n[lo:lo + B, :]                    # (B, H)

        # -------- layer 0 cell --------
        if t == 0:
            # h0 == 0: skip the recurrent matmuls; gh_rz = b_hh (already folded
            # into girz), hn = b_hn.
            rz0 = jax.nn.sigmoid(girz)
            r0, z0 = rz0[:, :H], rz0[:, H:]
            n0 = jnp.tanh(gin + r0 * b0hn)
            h0 = (1.0 - z0) * n0
        else:
            hrz0 = jnp.dot(h0, w0hrz_ref[...], preferred_element_type=f32)   # (B, 2H)
            hn0 = jnp.dot(h0, w0hn_ref[...], preferred_element_type=f32) + b0hn
            rz0 = jax.nn.sigmoid(girz + hrz0)
            r0, z0 = rz0[:, :H], rz0[:, H:]
            n0 = jnp.tanh(gin + r0 * hn0)
            h0 = (1.0 - z0) * n0 + z0 * h0

        # -------- layer 1 cell (interleaved) --------
        gin1 = jnp.dot(h0, w1in_ref[...], preferred_element_type=f32) + b1in  # (B, H)
        if t == 0:
            # h1 == 0: only the input-projection half of the K-stacked weight
            # is needed, and hn1 = b_hn1.
            rz1 = jax.nn.sigmoid(
                jnp.dot(h0, w1rzk_ref[:H, :], preferred_element_type=f32) + b1rz)
            r1, z1 = rz1[:, :H], rz1[:, H:]
            n1 = jnp.tanh(gin1 + r1 * b1hn)
            h1 = (1.0 - z1) * n1
        else:
            # K-stacked r/z: one (B,2H)@(2H,2H) matmul yields gi_rz + gh_rz.
            stk = jnp.concatenate([h0, h1], axis=1)                           # (B, 2H)
            rz1 = jax.nn.sigmoid(
                jnp.dot(stk, w1rzk_ref[...], preferred_element_type=f32) + b1rz)
            hn1 = jnp.dot(h1, w1hn_ref[...], preferred_element_type=f32) + b1hn
            r1, z1 = rz1[:, :H], rz1[:, H:]
            n1 = jnp.tanh(gin1 + r1 * hn1)
            h1 = (1.0 - z1) * n1 + z1 * h1

    # actions = fc3(relu(out[:, -1]));  out[:, -1] == final h1
    feat = jnp.maximum(h1, 0.0)
    out_ref[...] = (jnp.dot(feat, w3_ref[...], preferred_element_type=f32)
                    + b3_ref[...])


def prep_gru_params(params):
    """One-time weight prep (transposes / gate splits / bias folds).

    Called ONCE at init so none of these tiny XLA ops sit on the per-call
    hot path.  PyTorch gate order is (r, z, n); b_hh folds into the input
    projection for r/z only (b_hn must stay inside the r*(...) term).
    """
    H = params["whh0"].shape[1]

    def layer0(wih, whh, bih, bhh):
        w_rz = jnp.transpose(wih[:2 * H])                       # (D, 2H) lane-dense r|z
        b_rz = (bih[:2 * H] + bhh[:2 * H]).reshape(1, 2 * H)
        w_n = jnp.transpose(wih[2 * H:])                        # (D, H)
        b_in = bih[2 * H:].reshape(1, H)
        w_hrz = jnp.transpose(whh[:2 * H])                      # (H, 2H) fused r|z recurrent
        w_hn = jnp.transpose(whh[2 * H:])                       # (H, H)
        b_hn = bhh[2 * H:].reshape(1, H)
        return w_rz, b_rz, w_n, b_in, w_hrz, w_hn, b_hn

    def layer1(wih, whh, bih, bhh):
        # K-stacked r/z weight: [h0 | h1_prev] @ [[Wih_rz^T],[Whh_rz^T]]
        w_rz_stk = jnp.concatenate(
            [jnp.transpose(wih[:2 * H]), jnp.transpose(whh[:2 * H])], axis=0)  # (2H, 2H)
        b_rz = (bih[:2 * H] + bhh[:2 * H]).reshape(1, 2 * H)
        w_in = jnp.transpose(wih[2 * H:])                       # (H, H)
        b_in = bih[2 * H:].reshape(1, H)
        w_hn = jnp.transpose(whh[2 * H:])                       # (H, H)
        b_hn = bhh[2 * H:].reshape(1, H)
        return w_rz_stk, b_rz, w_in, b_in, w_hn, b_hn

    l0 = layer0(params["wih0"], params["whh0"], params["bih0"], params["bhh0"])
    l1 = layer1(params["wih1"], params["whh1"], params["bih1"], params["bhh1"])
    w3t = jnp.transpose(params["w3"])                           # (H, n_actions)
    b3 = params["b3"].reshape(1, -1)
    return (*l0, *l1, w3t, b3)


@functools.partial(jax.jit, static_argnames=("n_actions",))
def deep_rnn_forward(state, prepped, n_actions):
    """state: (batch, seq, input_dim); prepped: output of prep_gru_params."""
    B, T, D = state.shape
    Bp = max(8, ((B + 7) // 8) * 8)                 # pad batch to whole sublane tiles

    # Only the time-major transpose + batch pad remain on the per-call path.
    x_tm = jnp.transpose(state.astype(jnp.float32), (1, 0, 2))  # (T, B, D)
    if Bp != B:
        x_tm = jnp.pad(x_tm, ((0, 0), (0, Bp - B), (0, 0)))

    inputs = (x_tm, *prepped)
    vmem = pl.BlockSpec(memory_space=pltpu.MemorySpace.VMEM)
    out = pl.pallas_call(
        deep_rnn_kernel,
        out_shape=jax.ShapeDtypeStruct((Bp, n_actions), jnp.float32),
        in_specs=[vmem] * len(inputs),
        out_specs=vmem,
    )(*inputs)
    return out[:B]


def init_params(key, input_dim, hidden, n_actions):
    """Deterministic init matching PyTorch GRU/Linear parameter shapes."""
    ks = jax.random.split(key, 11)
    bound = 1.0 / jnp.sqrt(hidden)
    u = lambda k, shape: jax.random.uniform(
        k, shape, jnp.float32, minval=-bound, maxval=bound)
    return {
        # GRU layer 0: weight_ih_l0 (3H, D), weight_hh_l0 (3H, H), biases (3H,)
        "wih0": u(ks[0], (3 * hidden, input_dim)),
        "whh0": u(ks[1], (3 * hidden, hidden)),
        "bih0": u(ks[2], (3 * hidden,)),
        "bhh0": u(ks[3], (3 * hidden,)),
        # GRU layer 1: weight_ih_l1 (3H, H)
        "wih1": u(ks[4], (3 * hidden, hidden)),
        "whh1": u(ks[5], (3 * hidden, hidden)),
        "bih1": u(ks[6], (3 * hidden,)),
        "bhh1": u(ks[7], (3 * hidden,)),
        # fc3: Linear(hidden, n_actions)
        "w3": u(ks[8], (n_actions, hidden)),
        "b3": u(ks[9], (n_actions,)),
    }


def reference_forward(state, params, n_actions):
    """Pure-JAX reference reproducing torch.nn.GRU(num_layers=2) + fc3."""
    B, T, D = state.shape
    H = params["whh0"].shape[1]

    def cell(x_t, h_prev, wih, whh, bih, bhh):
        gi = x_t @ wih.T + bih
        gh = h_prev @ whh.T + bhh
        i_r, i_z, i_n = jnp.split(gi, 3, axis=-1)
        h_r, h_z, h_n = jnp.split(gh, 3, axis=-1)
        r = jax.nn.sigmoid(i_r + h_r)
        z = jax.nn.sigmoid(i_z + h_z)
        n = jnp.tanh(i_n + r * h_n)
        return (1.0 - z) * n + z * h_prev

    h0 = jnp.zeros((B, H), jnp.float32)
    h1 = jnp.zeros((B, H), jnp.float32)
    for t in range(T):
        x_t = state[:, t, :]
        h0 = cell(x_t, h0, params["wih0"], params["whh0"],
                  params["bih0"], params["bhh0"])
        h1 = cell(h0, h1, params["wih1"], params["whh1"],
                  params["bih1"], params["bhh1"])
    feat = jnp.maximum(h1, 0.0)
    return feat @ params["w3"].T + params["b3"]


if __name__ == "__main__":
    # small shapes consistent with the module: state (batch, seq, input_dims[0])
    batch, seq, input_dim = 4, 8, 16
    hidden, n_actions = 64, 8          # hid_size default of the module

    key = jax.random.PRNGKey(0)
    k_x, k_p = jax.random.split(key)
    state = jax.random.normal(k_x, (batch, seq, input_dim), jnp.float32)
    params = init_params(k_p, input_dim, hidden, n_actions)

    # One-time weight prep (hoisted out of the per-call path).
    prepped = jax.tree_util.tree_map(jax.block_until_ready, prep_gru_params(params))

    actions = deep_rnn_forward(state, prepped, n_actions)
    actions = jax.block_until_ready(actions)

    ref = reference_forward(state, params, n_actions)
    assert actions.shape == (batch, n_actions)
    assert jnp.allclose(actions, ref, atol=1e-4, rtol=1e-4)

    print("KERNEL_OK")
</pallas_src>

<mosaic_0001>
module attributes {stable_mosaic.version = 11 : i64} {
  func.func @deep_rnn_kernel(%arg0: memref<8x8x16xf32, #tpu.memory_space<vmem>>, %arg1: memref<16x128xf32, #tpu.memory_space<vmem>>, %arg2: memref<1x128xf32, #tpu.memory_space<vmem>>, %arg3: memref<16x64xf32, #tpu.memory_space<vmem>>, %arg4: memref<1x64xf32, #tpu.memory_space<vmem>>, %arg5: memref<64x128xf32, #tpu.memory_space<vmem>>, %arg6: memref<64x64xf32, #tpu.memory_space<vmem>>, %arg7: memref<1x64xf32, #tpu.memory_space<vmem>>, %arg8: memref<128x128xf32, #tpu.memory_space<vmem>>, %arg9: memref<1x128xf32, #tpu.memory_space<vmem>>, %arg10: memref<64x64xf32, #tpu.memory_space<vmem>>, %arg11: memref<1x64xf32, #tpu.memory_space<vmem>>, %arg12: memref<64x64xf32, #tpu.memory_space<vmem>>, %arg13: memref<1x64xf32, #tpu.memory_space<vmem>>, %arg14: memref<64x8xf32, #tpu.memory_space<vmem>>, %arg15: memref<1x8xf32, #tpu.memory_space<vmem>>, %arg16: memref<8x8xf32, #tpu.memory_space<vmem>>) attributes {dimension_semantics = [], scalar_prefetch = 0 : i64, scratch_operands = 0 : i64, tpu.core_type = #tpu.core_type<tc>} {
    %c0 = arith.constant 0 : index
    %c0_0 = arith.constant 0 : index
    %c0_1 = arith.constant 0 : index
    %0 = vector.load %arg0[%c0, %c0_0, %c0_1] : memref<8x8x16xf32, #tpu.memory_space<vmem>>, vector<8x8x16xf32>
    %1 = vector.shape_cast %0 : vector<8x8x16xf32> to vector<64x16xf32>
    %c0_2 = arith.constant 0 : index
    %c0_3 = arith.constant 0 : index
    %2 = vector.load %arg1[%c0_2, %c0_3] : memref<16x128xf32, #tpu.memory_space<vmem>>, vector<16x128xf32>
    %cst = arith.constant dense<0.000000e+00> : vector<64x128xf32>
    %3 = tpu.matmul %1, %2, %cst {dimension_numbers = #tpu.dot_dimension_numbers<[1], [0], [0], [1], [0, 0, 1, 1], [], []>} : vector<64x16xf32>, vector<16x128xf32>, vector<64x128xf32> -> vector<64x128xf32>
    %c0_4 = arith.constant 0 : index
    %c0_5 = arith.constant 0 : index
    %4 = vector.load %arg2[%c0_4, %c0_5] : memref<1x128xf32, #tpu.memory_space<vmem>>, vector<1x128xf32>
    %5 = vector.broadcast %4 : vector<1x128xf32> to vector<64x128xf32>
    %6 = arith.addf %3, %5 : vector<64x128xf32>
    %c0_6 = arith.constant 0 : index
    %c0_7 = arith.constant 0 : index
    %7 = vector.load %arg3[%c0_6, %c0_7] : memref<16x64xf32, #tpu.memory_space<vmem>>, vector<16x64xf32>
    %cst_8 = arith.constant dense<0.000000e+00> : vector<64x64xf32>
    %8 = tpu.matmul %1, %7, %cst_8 {dimension_numbers = #tpu.dot_dimension_numbers<[1], [0], [0], [1], [0, 0, 1, 1], [], []>} : vector<64x16xf32>, vector<16x64xf32>, vector<64x64xf32> -> vector<64x64xf32>
    %c0_9 = arith.constant 0 : index
    %c0_10 = arith.constant 0 : index
    %9 = vector.load %arg4[%c0_9, %c0_10] : memref<1x64xf32, #tpu.memory_space<vmem>>, vector<1x64xf32>
    %10 = vector.broadcast %9 : vector<1x64xf32> to vector<64x64xf32>
    %11 = arith.addf %8, %10 : vector<64x64xf32>
    %c0_11 = arith.constant 0 : index
    %c0_12 = arith.constant 0 : index
    %12 = vector.load %arg7[%c0_11, %c0_12] : memref<1x64xf32, #tpu.memory_space<vmem>>, vector<1x64xf32>
    %13 = vector.shape_cast %12 : vector<1x64xf32> to vector<1x64xf32>
    %14 = vector.broadcast %13 : vector<1x64xf32> to vector<8x64xf32>
    %c0_13 = arith.constant 0 : index
    %c0_14 = arith.constant 0 : index
    %15 = vector.load %arg13[%c0_13, %c0_14] : memref<1x64xf32, #tpu.memory_space<vmem>>, vector<1x64xf32>
    %16 = vector.shape_cast %15 : vector<1x64xf32> to vector<1x64xf32>
    %17 = vector.broadcast %16 : vector<1x64xf32> to vector<8x64xf32>
    %c0_15 = arith.constant 0 : index
    %c0_16 = arith.constant 0 : index
    %18 = vector.load %arg9[%c0_15, %c0_16] : memref<1x128xf32, #tpu.memory_space<vmem>>, vector<1x128xf32>
    %c0_17 = arith.constant 0 : index
    %c0_18 = arith.constant 0 : index
    %19 = vector.load %arg11[%c0_17, %c0_18] : memref<1x64xf32, #tpu.memory_space<vmem>>, vector<1x64xf32>
    %20 = vector.extract_strided_slice %6 {offsets = [0, 0], sizes = [8, 128], strides = [1, 1]} : vector<64x128xf32> to vector<8x128xf32>
    %21 = vector.extract_strided_slice %11 {offsets = [0, 0], sizes = [8, 64], strides = [1, 1]} : vector<64x64xf32> to vector<8x64xf32>
    %22 = arith.negf %20 : vector<8x128xf32>
    %23 = math.exp %22 : vector<8x128xf32>
    %cst_19 = arith.constant 1.000000e+00 : f32
    %24 = vector.broadcast %cst_19 : f32 to vector<8x128xf32>
    %25 = arith.addf %24, %23 : vector<8x128xf32>
    %26 = arith.divf %24, %25 : vector<8x128xf32>
    %27 = vector.extract_strided_slice %26 {offsets = [0, 0], sizes = [8, 64], strides = [1, 1]} : vector<8x128xf32> to vector<8x64xf32>
    %28 = vector.extract_strided_slice %26 {offsets = [0, 64], sizes = [8, 64], strides = [1, 1]} : vector<8x128xf32> to vector<8x64xf32>
    %29 = arith.mulf %27, %14 : vector<8x64xf32>
    %30 = arith.addf %21, %29 : vector<8x64xf32>
    %31 = math.tanh %30 : vector<8x64xf32>
    %cst_20 = arith.constant 1.000000e+00 : f32
    %32 = vector.broadcast %cst_20 : f32 to vector<8x64xf32>
    %33 = arith.subf %32, %28 : vector<8x64xf32>
    %34 = arith.mulf %33, %31 : vector<8x64xf32>
    %c0_21 = arith.constant 0 : index
    %c0_22 = arith.constant 0 : index
    %35 = vector.load %arg10[%c0_21, %c0_22] : memref<64x64xf32, #tpu.memory_space<vmem>>, vector<64x64xf32>
    %cst_23 = arith.constant dense<0.000000e+00> : vector<8x64xf32>
    %36 = tpu.matmul %34, %35, %cst_23 {dimension_numbers = #tpu.dot_dimension_numbers<[1], [0], [0], [1], [0, 0, 1, 1], [], []>} : vector<8x64xf32>, vector<64x64xf32>, vector<8x64xf32> -> vector<8x64xf32>
    %37 = vector.broadcast %19 : vector<1x64xf32> to vector<8x64xf32>
    %38 = arith.addf %36, %37 : vector<8x64xf32>
    %c0_24 = arith.constant 0 : index
    %c0_25 = arith.constant 0 : index
    %39 = vector.load %arg8[%c0_24, %c0_25] : memref<128x128xf32, #tpu.memory_space<vmem>>, vector<64x128xf32>
    %cst_26 = arith.constant dense<0.000000e+00> : vector<8x128xf32>
    %40 = tpu.matmul %34, %39, %cst_26 {dimension_numbers = #tpu.dot_dimension_numbers<[1], [0], [0], [1], [0, 0, 1, 1], [], []>} : vector<8x64xf32>, vector<64x128xf32>, vector<8x128xf32> -> vector<8x128xf32>
    %41 = vector.broadcast %18 : vector<1x128xf32> to vector<8x128xf32>
    %42 = arith.addf %40, %41 : vector<8x128xf32>
    %43 = arith.negf %42 : vector<8x128xf32>
    %44 = math.exp %43 : vector<8x128xf32>
    %cst_27 = arith.constant 1.000000e+00 : f32
    %45 = vector.broadcast %cst_27 : f32 to vector<8x128xf32>
    %46 = arith.addf %45, %44 : vector<8x128xf32>
    %47 = arith.divf %45, %46 : vector<8x128xf32>
    %48 = vector.extract_strided_slice %47 {offsets = [0, 0], sizes = [8, 64], strides = [1, 1]} : vector<8x128xf32> to vector<8x64xf32>
    %49 = vector.extract_strided_slice %47 {offsets = [0, 64], sizes = [8, 64], strides = [1, 1]} : vector<8x128xf32> to vector<8x64xf32>
    %50 = arith.mulf %48, %17 : vector<8x64xf32>
    %51 = arith.addf %38, %50 : vector<8x64xf32>
    %52 = math.tanh %51 : vector<8x64xf32>
    %cst_28 = arith.constant 1.000000e+00 : f32
    %53 = vector.broadcast %cst_28 : f32 to vector<8x64xf32>
    %54 = arith.subf %53, %49 : vector<8x64xf32>
    %55 = arith.mulf %54, %52 : vector<8x64xf32>
    %56 = vector.extract_strided_slice %6 {offsets = [8, 0], sizes = [8, 128], strides = [1, 1]} : vector<64x128xf32> to vector<8x128xf32>
    %57 = vector.extract_strided_slice %11 {offsets = [8, 0], sizes = [8, 64], strides = [1, 1]} : vector<64x64xf32> to vector<8x64xf32>
    %c0_29 = arith.constant 0 : index
    %c0_30 = arith.constant 0 : index
    %58 = vector.load %arg5[%c0_29, %c0_30] : memref<64x128xf32, #tpu.memory_space<vmem>>, vector<64x128xf32>
    %cst_31 = arith.constant dense<0.000000e+00> : vector<8x128xf32>
    %59 = tpu.matmul %34, %58, %cst_31 {dimension_numbers = #tpu.dot_dimension_numbers<[1], [0], [0], [1], [0, 0, 1, 1], [], []>} : vector<8x64xf32>, vector<64x128xf32>, vector<8x128xf32> -> vector<8x128xf32>
    %c0_32 = arith.constant 0 : index
    %c0_33 = arith.constant 0 : index
    %60 = vector.load %arg6[%c0_32, %c0_33] : memref<64x64xf32, #tpu.memory_space<vmem>>, vector<64x64xf32>
    %cst_34 = arith.constant dense<0.000000e+00> : vector<8x64xf32>
    %61 = tpu.matmul %34, %60, %cst_34 {dimension_numbers = #tpu.dot_dimension_numbers<[1], [0], [0], [1], [0, 0, 1, 1], [], []>} : vector<8x64xf32>, vector<64x64xf32>, vector<8x64xf32> -> vector<8x64xf32>
    %62 = arith.addf %61, %14 : vector<8x64xf32>
    %63 = arith.addf %56, %59 : vector<8x128xf32>
    %64 = arith.negf %63 : vector<8x128xf32>
    %65 = math.exp %64 : vector<8x128xf32>
    %cst_35 = arith.constant 1.000000e+00 : f32
    %66 = vector.broadcast %cst_35 : f32 to vector<8x128xf32>
    %67 = arith.addf %66, %65 : vector<8x128xf32>
    %68 = arith.divf %66, %67 : vector<8x128xf32>
    %69 = vector.extract_strided_slice %68 {offsets = [0, 0], sizes = [8, 64], strides = [1, 1]} : vector<8x128xf32> to vector<8x64xf32>
    %70 = vector.extract_strided_slice %68 {offsets = [0, 64], sizes = [8, 64], strides = [1, 1]} : vector<8x128xf32> to vector<8x64xf32>
    %71 = arith.mulf %69, %62 : vector<8x64xf32>
    %72 = arith.addf %57, %71 : vector<8x64xf32>
    %73 = math.tanh %72 : vector<8x64xf32>
    %cst_36 = arith.constant 1.000000e+00 : f32
    %74 = vector.broadcast %cst_36 : f32 to vector<8x64xf32>
    %75 = arith.subf %74, %70 : vector<8x64xf32>
    %76 = arith.mulf %75, %73 : vector<8x64xf32>
    %77 = arith.mulf %70, %34 : vector<8x64xf32>
    %78 = arith.addf %76, %77 : vector<8x64xf32>
    %c0_37 = arith.constant 0 : index
    %c0_38 = arith.constant 0 : index
    %79 = vector.load %arg10[%c0_37, %c0_38] : memref<64x64xf32, #tpu.memory_space<vmem>>, vector<64x64xf32>
    %cst_39 = arith.constant dense<0.000000e+00> : vector<8x64xf32>
    %80 = tpu.matmul %78, %79, %cst_39 {dimension_numbers = #tpu.dot_dimension_numbers<[1], [0], [0], [1], [0, 0, 1, 1], [], []>} : vector<8x64xf32>, vector<64x64xf32>, vector<8x64xf32> -> vector<8x64xf32>
    %81 = vector.broadcast %19 : vector<1x64xf32> to vector<8x64xf32>
    %82 = arith.addf %80, %81 : vector<8x64xf32>
    %83 = tpu.concatenate %78, %55 in 1 : vector<8x64xf32>, vector<8x64xf32> -> vector<8x128xf32>
    %c0_40 = arith.constant 0 : index
    %c0_41 = arith.constant 0 : index
    %84 = vector.load %arg8[%c0_40, %c0_41] : memref<128x128xf32, #tpu.memory_space<vmem>>, vector<128x128xf32>
    %cst_42 = arith.constant dense<0.000000e+00> : vector<8x128xf32>
    %85 = tpu.matmul %83, %84, %cst_42 {dimension_numbers = #tpu.dot_dimension_numbers<[1], [0], [0], [1], [0, 0, 1, 1], [], []>} : vector<8x128xf32>, vector<128x128xf32>, vector<8x128xf32> -> vector<8x128xf32>
    %86 = vector.broadcast %18 : vector<1x128xf32> to vector<8x128xf32>
    %87 = arith.addf %85, %86 : vector<8x128xf32>
    %88 = arith.negf %87 : vector<8x128xf32>
    %89 = math.exp %88 : vector<8x128xf32>
    %cst_43 = arith.constant 1.000000e+00 : f32
    %90 = vector.broadcast %cst_43 : f32 to vector<8x128xf32>
    %91 = arith.addf %90, %89 : vector<8x128xf32>
    %92 = arith.divf %90, %91 : vector<8x128xf32>
    %c0_44 = arith.constant 0 : index
    %c0_45 = arith.constant 0 : index
    %93 = vector.load %arg12[%c0_44, %c0_45] : memref<64x64xf32, #tpu.memory_space<vmem>>, vector<64x64xf32>
    %cst_46 = arith.constant dense<0.000000e+00> : vector<8x64xf32>
    %94 = tpu.matmul %55, %93, %cst_46 {dimension_numbers = #tpu.dot_dimension_numbers<[1], [0], [0], [1], [0, 0, 1, 1], [], []>} : vector<8x64xf32>, vector<64x64xf32>, vector<8x64xf32> -> vector<8x64xf32>
    %95 = arith.addf %94, %17 : vector<8x64xf32>
    %96 = vector.extract_strided_slice %92 {offsets = [0, 0], sizes = [8, 64], strides = [1, 1]} : vector<8x128xf32> to vector<8x64xf32>
    %97 = vector.extract_strided_slice %92 {offsets = [0, 64], sizes = [8, 64], strides = [1, 1]} : vector<8x128xf32> to vector<8x64xf32>
    %98 = arith.mulf %96, %95 : vector<8x64xf32>
    %99 = arith.addf %82, %98 : vector<8x64xf32>
    %100 = math.tanh %99 : vector<8x64xf32>
    %cst_47 = arith.constant 1.000000e+00 : f32
    %101 = vector.broadcast %cst_47 : f32 to vector<8x64xf32>
    %102 = arith.subf %101, %97 : vector<8x64xf32>
    %103 = arith.mulf %102, %100 : vector<8x64xf32>
    %104 = arith.mulf %97, %55 : vector<8x64xf32>
    %105 = arith.addf %103, %104 : vector<8x64xf32>
    %106 = vector.extract_strided_slice %6 {offsets = [16, 0], sizes = [8, 128], strides = [1, 1]} : vector<64x128xf32> to vector<8x128xf32>
    %107 = vector.extract_strided_slice %11 {offsets = [16, 0], sizes = [8, 64], strides = [1, 1]} : vector<64x64xf32> to vector<8x64xf32>
    %c0_48 = arith.constant 0 : index
    %c0_49 = arith.constant 0 : index
    %108 = vector.load %arg5[%c0_48, %c0_49] : memref<64x128xf32, #tpu.memory_space<vmem>>, vector<64x128xf32>
    %cst_50 = arith.constant dense<0.000000e+00> : vector<8x128xf32>
    %109 = tpu.matmul %78, %108, %cst_50 {dimension_numbers = #tpu.dot_dimension_numbers<[1], [0], [0], [1], [0, 0, 1, 1], [], []>} : vector<8x64xf32>, vector<64x128xf32>, vector<8x128xf32> -> vector<8x128xf32>
    %c0_51 = arith.constant 0 : index
    %c0_52 = arith.constant 0 : index
    %110 = vector.load %arg6[%c0_51, %c0_52] : memref<64x64xf32, #tpu.memory_space<vmem>>, vector<64x64xf32>
    %cst_53 = arith.constant dense<0.000000e+00> : vector<8x64xf32>
    %111 = tpu.matmul %78, %110, %cst_53 {dimension_numbers = #tpu.dot_dimension_numbers<[1], [0], [0], [1], [0, 0, 1, 1], [], []>} : vector<8x64xf32>, vector<64x64xf32>, vector<8x64xf32> -> vector<8x64xf32>
    %112 = arith.addf %111, %14 : vector<8x64xf32>
    %113 = arith.addf %106, %109 : vector<8x128xf32>
    %114 = arith.negf %113 : vector<8x128xf32>
    %115 = math.exp %114 : vector<8x128xf32>
    %cst_54 = arith.constant 1.000000e+00 : f32
    %116 = vector.broadcast %cst_54 : f32 to vector<8x128xf32>
    %117 = arith.addf %116, %115 : vector<8x128xf32>
    %118 = arith.divf %116, %117 : vector<8x128xf32>
    %119 = vector.extract_strided_slice %118 {offsets = [0, 0], sizes = [8, 64], strides = [1, 1]} : vector<8x128xf32> to vector<8x64xf32>
    %120 = vector.extract_strided_slice %118 {offsets = [0, 64], sizes = [8, 64], strides = [1, 1]} : vector<8x128xf32> to vector<8x64xf32>
    %121 = arith.mulf %119, %112 : vector<8x64xf32>
    %122 = arith.addf %107, %121 : vector<8x64xf32>
    %123 = math.tanh %122 : vector<8x64xf32>
    %cst_55 = arith.constant 1.000000e+00 : f32
    %124 = vector.broadcast %cst_55 : f32 to vector<8x64xf32>
    %125 = arith.subf %124, %120 : vector<8x64xf32>
    %126 = arith.mulf %125, %123 : vector<8x64xf32>
    %127 = arith.mulf %120, %78 : vector<8x64xf32>
    %128 = arith.addf %126, %127 : vector<8x64xf32>
    %c0_56 = arith.constant 0 : index
    %c0_57 = arith.constant 0 : index
    %129 = vector.load %arg10[%c0_56, %c0_57] : memref<64x64xf32, #tpu.memory_space<vmem>>, vector<64x64xf32>
    %cst_58 = arith.constant dense<0.000000e+00> : vector<8x64xf32>
    %130 = tpu.matmul %128, %129, %cst_58 {dimension_numbers = #tpu.dot_dimension_numbers<[1], [0], [0], [1], [0, 0, 1, 1], [], []>} : vector<8x64xf32>, vector<64x64xf32>, vector<8x64xf32> -> vector<8x64xf32>
    %131 = vector.broadcast %19 : vector<1x64xf32> to vector<8x64xf32>
    %132 = arith.addf %130, %131 : vector<8x64xf32>
    %133 = tpu.concatenate %128, %105 in 1 : vector<8x64xf32>, vector<8x64xf32> -> vector<8x128xf32>
    %c0_59 = arith.constant 0 : index
    %c0_60 = arith.constant 0 : index
    %134 = vector.load %arg8[%c0_59, %c0_60] : memref<128x128xf32, #tpu.memory_space<vmem>>, vector<128x128xf32>
    %cst_61 = arith.constant dense<0.000000e+00> : vector<8x128xf32>
    %135 = tpu.matmul %133, %134, %cst_61 {dimension_numbers = #tpu.dot_dimension_numbers<[1], [0], [0], [1], [0, 0, 1, 1], [], []>} : vector<8x128xf32>, vector<128x128xf32>, vector<8x128xf32> -> vector<8x128xf32>
    %136 = vector.broadcast %18 : vector<1x128xf32> to vector<8x128xf32>
    %137 = arith.addf %135, %136 : vector<8x128xf32>
    %138 = arith.negf %137 : vector<8x128xf32>
    %139 = math.exp %138 : vector<8x128xf32>
    %cst_62 = arith.constant 1.000000e+00 : f32
    %140 = vector.broadcast %cst_62 : f32 to vector<8x128xf32>
    %141 = arith.addf %140, %139 : vector<8x128xf32>
    %142 = arith.divf %140, %141 : vector<8x128xf32>
    %c0_63 = arith.constant 0 : index
    %c0_64 = arith.constant 0 : index
    %143 = vector.load %arg12[%c0_63, %c0_64] : memref<64x64xf32, #tpu.memory_space<vmem>>, vector<64x64xf32>
    %cst_65 = arith.constant dense<0.000000e+00> : vector<8x64xf32>
    %144 = tpu.matmul %105, %143, %cst_65 {dimension_numbers = #tpu.dot_dimension_numbers<[1], [0], [0], [1], [0, 0, 1, 1], [], []>} : vector<8x64xf32>, vector<64x64xf32>, vector<8x64xf32> -> vector<8x64xf32>
    %145 = arith.addf %144, %17 : vector<8x64xf32>
    %146 = vector.extract_strided_slice %142 {offsets = [0, 0], sizes = [8, 64], strides = [1, 1]} : vector<8x128xf32> to vector<8x64xf32>
    %147 = vector.extract_strided_slice %142 {offsets = [0, 64], sizes = [8, 64], strides = [1, 1]} : vector<8x128xf32> to vector<8x64xf32>
    %148 = arith.mulf %146, %145 : vector<8x64xf32>
    %149 = arith.addf %132, %148 : vector<8x64xf32>
    %150 = math.tanh %149 : vector<8x64xf32>
    %cst_66 = arith.constant 1.000000e+00 : f32
    %151 = vector.broadcast %cst_66 : f32 to vector<8x64xf32>
    %152 = arith.subf %151, %147 : vector<8x64xf32>
    %153 = arith.mulf %152, %150 : vector<8x64xf32>
    %154 = arith.mulf %147, %105 : vector<8x64xf32>
    %155 = arith.addf %153, %154 : vector<8x64xf32>
    %156 = vector.extract_strided_slice %6 {offsets = [24, 0], sizes = [8, 128], strides = [1, 1]} : vector<64x128xf32> to vector<8x128xf32>
    %157 = vector.extract_strided_slice %11 {offsets = [24, 0], sizes = [8, 64], strides = [1, 1]} : vector<64x64xf32> to vector<8x64xf32>
    %c0_67 = arith.constant 0 : index
    %c0_68 = arith.constant 0 : index
    %158 = vector.load %arg5[%c0_67, %c0_68] : memref<64x128xf32, #tpu.memory_space<vmem>>, vector<64x128xf32>
    %cst_69 = arith.constant dense<0.000000e+00> : vector<8x128xf32>
    %159 = tpu.matmul %128, %158, %cst_69 {dimension_numbers = #tpu.dot_dimension_numbers<[1], [0], [0], [1], [0, 0, 1, 1], [], []>} : vector<8x64xf32>, vector<64x128xf32>, vector<8x128xf32> -> vector<8x128xf32>
    %c0_70 = arith.constant 0 : index
    %c0_71 = arith.constant 0 : index
    %160 = vector.load %arg6[%c0_70, %c0_71] : memref<64x64xf32, #tpu.memory_space<vmem>>, vector<64x64xf32>
    %cst_72 = arith.constant dense<0.000000e+00> : vector<8x64xf32>
    %161 = tpu.matmul %128, %160, %cst_72 {dimension_numbers = #tpu.dot_dimension_numbers<[1], [0], [0], [1], [0, 0, 1, 1], [], []>} : vector<8x64xf32>, vector<64x64xf32>, vector<8x64xf32> -> vector<8x64xf32>
    %162 = arith.addf %161, %14 : vector<8x64xf32>
    %163 = arith.addf %156, %159 : vector<8x128xf32>
    %164 = arith.negf %163 : vector<8x128xf32>
    %165 = math.exp %164 : vector<8x128xf32>
    %cst_73 = arith.constant 1.000000e+00 : f32
    %166 = vector.broadcast %cst_73 : f32 to vector<8x128xf32>
    %167 = arith.addf %166, %165 : vector<8x128xf32>
    %168 = arith.divf %166, %167 : vector<8x128xf32>
    %169 = vector.extract_strided_slice %168 {offsets = [0, 0], sizes = [8, 64], strides = [1, 1]} : vector<8x128xf32> to vector<8x64xf32>
    %170 = vector.extract_strided_slice %168 {offsets = [0, 64], sizes = [8, 64], strides = [1, 1]} : vector<8x128xf32> to vector<8x64xf32>
    %171 = arith.mulf %169, %162 : vector<8x64xf32>
    %172 = arith.addf %157, %171 : vector<8x64xf32>
    %173 = math.tanh %172 : vector<8x64xf32>
    %cst_74 = arith.constant 1.000000e+00 : f32
    %174 = vector.broadcast %cst_74 : f32 to vector<8x64xf32>
    %175 = arith.subf %174, %170 : vector<8x64xf32>
    %176 = arith.mulf %175, %173 : vector<8x64xf32>
    %177 = arith.mulf %170, %128 : vector<8x64xf32>
    %178 = arith.addf %176, %177 : vector<8x64xf32>
    %c0_75 = arith.constant 0 : index
    %c0_76 = arith.constant 0 : index
    %179 = vector.load %arg10[%c0_75, %c0_76] : memref<64x64xf32, #tpu.memory_space<vmem>>, vector<64x64xf32>
    %cst_77 = arith.constant dense<0.000000e+00> : vector<8x64xf32>
    %180 = tpu.matmul %178, %179, %cst_77 {dimension_numbers = #tpu.dot_dimension_numbers<[1], [0], [0], [1], [0, 0, 1, 1], [], []>} : vector<8x64xf32>, vector<64x64xf32>, vector<8x64xf32> -> vector<8x64xf32>
    %181 = vector.broadcast %19 : vector<1x64xf32> to vector<8x64xf32>
    %182 = arith.addf %180, %181 : vector<8x64xf32>
    %183 = tpu.concatenate %178, %155 in 1 : vector<8x64xf32>, vector<8x64xf32> -> vector<8x128xf32>
    %c0_78 = arith.constant 0 : index
    %c0_79 = arith.constant 0 : index
    %184 = vector.load %arg8[%c0_78, %c0_79] : memref<128x128xf32, #tpu.memory_space<vmem>>, vector<128x128xf32>
    %cst_80 = arith.constant dense<0.000000e+00> : vector<8x128xf32>
    %185 = tpu.matmul %183, %184, %cst_80 {dimension_numbers = #tpu.dot_dimension_numbers<[1], [0], [0], [1], [0, 0, 1, 1], [], []>} : vector<8x128xf32>, vector<128x128xf32>, vector<8x128xf32> -> vector<8x128xf32>
    %186 = vector.broadcast %18 : vector<1x128xf32> to vector<8x128xf32>
    %187 = arith.addf %185, %186 : vector<8x128xf32>
    %188 = arith.negf %187 : vector<8x128xf32>
    %189 = math.exp %188 : vector<8x128xf32>
    %cst_81 = arith.constant 1.000000e+00 : f32
    %190 = vector.broadcast %cst_81 : f32 to vector<8x128xf32>
    %191 = arith.addf %190, %189 : vector<8x128xf32>
    %192 = arith.divf %190, %191 : vector<8x128xf32>
    %c0_82 = arith.constant 0 : index
    %c0_83 = arith.constant 0 : index
    %193 = vector.load %arg12[%c0_82, %c0_83] : memref<64x64xf32, #tpu.memory_space<vmem>>, vector<64x64xf32>
    %cst_84 = arith.constant dense<0.000000e+00> : vector<8x64xf32>
    %194 = tpu.matmul %155, %193, %cst_84 {dimension_numbers = #tpu.dot_dimension_numbers<[1], [0], [0], [1], [0, 0, 1, 1], [], []>} : vector<8x64xf32>, vector<64x64xf32>, vector<8x64xf32> -> vector<8x64xf32>
    %195 = arith.addf %194, %17 : vector<8x64xf32>
    %196 = vector.extract_strided_slice %192 {offsets = [0, 0], sizes = [8, 64], strides = [1, 1]} : vector<8x128xf32> to vector<8x64xf32>
    %197 = vector.extract_strided_slice %192 {offsets = [0, 64], sizes = [8, 64], strides = [1, 1]} : vector<8x128xf32> to vector<8x64xf32>
    %198 = arith.mulf %196, %195 : vector<8x64xf32>
    %199 = arith.addf %182, %198 : vector<8x64xf32>
    %200 = math.tanh %199 : vector<8x64xf32>
    %cst_85 = arith.constant 1.000000e+00 : f32
    %201 = vector.broadcast %cst_85 : f32 to vector<8x64xf32>
    %202 = arith.subf %201, %197 : vector<8x64xf32>
    %203 = arith.mulf %202, %200 : vector<8x64xf32>
    %204 = arith.mulf %197, %155 : vector<8x64xf32>
    %205 = arith.addf %203, %204 : vector<8x64xf32>
    %206 = vector.extract_strided_slice %6 {offsets = [32, 0], sizes = [8, 128], strides = [1, 1]} : vector<64x128xf32> to vector<8x128xf32>
    %207 = vector.extract_strided_slice %11 {offsets = [32, 0], sizes = [8, 64], strides = [1, 1]} : vector<64x64xf32> to vector<8x64xf32>
    %c0_86 = arith.constant 0 : index
    %c0_87 = arith.constant 0 : index
    %208 = vector.load %arg5[%c0_86, %c0_87] : memref<64x128xf32, #tpu.memory_space<vmem>>, vector<64x128xf32>
    %cst_88 = arith.constant dense<0.000000e+00> : vector<8x128xf32>
    %209 = tpu.matmul %178, %208, %cst_88 {dimension_numbers = #tpu.dot_dimension_numbers<[1], [0], [0], [1], [0, 0, 1, 1], [], []>} : vector<8x64xf32>, vector<64x128xf32>, vector<8x128xf32> -> vector<8x128xf32>
    %c0_89 = arith.constant 0 : index
    %c0_90 = arith.constant 0 : index
    %210 = vector.load %arg6[%c0_89, %c0_90] : memref<64x64xf32, #tpu.memory_space<vmem>>, vector<64x64xf32>
    %cst_91 = arith.constant dense<0.000000e+00> : vector<8x64xf32>
    %211 = tpu.matmul %178, %210, %cst_91 {dimension_numbers = #tpu.dot_dimension_numbers<[1], [0], [0], [1], [0, 0, 1, 1], [], []>} : vector<8x64xf32>, vector<64x64xf32>, vector<8x64xf32> -> vector<8x64xf32>
    %212 = arith.addf %211, %14 : vector<8x64xf32>
    %213 = arith.addf %206, %209 : vector<8x128xf32>
    %214 = arith.negf %213 : vector<8x128xf32>
    %215 = math.exp %214 : vector<8x128xf32>
    %cst_92 = arith.constant 1.000000e+00 : f32
    %216 = vector.broadcast %cst_92 : f32 to vector<8x128xf32>
    %217 = arith.addf %216, %215 : vector<8x128xf32>
    %218 = arith.divf %216, %217 : vector<8x128xf32>
    %219 = vector.extract_strided_slice %218 {offsets = [0, 0], sizes = [8, 64], strides = [1, 1]} : vector<8x128xf32> to vector<8x64xf32>
    %220 = vector.extract_strided_slice %218 {offsets = [0, 64], sizes = [8, 64], strides = [1, 1]} : vector<8x128xf32> to vector<8x64xf32>
    %221 = arith.mulf %219, %212 : vector<8x64xf32>
    %222 = arith.addf %207, %221 : vector<8x64xf32>
    %223 = math.tanh %222 : vector<8x64xf32>
    %cst_93 = arith.constant 1.000000e+00 : f32
    %224 = vector.broadcast %cst_93 : f32 to vector<8x64xf32>
    %225 = arith.subf %224, %220 : vector<8x64xf32>
    %226 = arith.mulf %225, %223 : vector<8x64xf32>
    %227 = arith.mulf %220, %178 : vector<8x64xf32>
    %228 = arith.addf %226, %227 : vector<8x64xf32>
    %c0_94 = arith.constant 0 : index
    %c0_95 = arith.constant 0 : index
    %229 = vector.load %arg10[%c0_94, %c0_95] : memref<64x64xf32, #tpu.memory_space<vmem>>, vector<64x64xf32>
    %cst_96 = arith.constant dense<0.000000e+00> : vector<8x64xf32>
    %230 = tpu.matmul %228, %229, %cst_96 {dimension_numbers = #tpu.dot_dimension_numbers<[1], [0], [0], [1], [0, 0, 1, 1], [], []>} : vector<8x64xf32>, vector<64x64xf32>, vector<8x64xf32> -> vector<8x64xf32>
    %231 = vector.broadcast %19 : vector<1x64xf32> to vector<8x64xf32>
    %232 = arith.addf %230, %231 : vector<8x64xf32>
    %233 = tpu.concatenate %228, %205 in 1 : vector<8x64xf32>, vector<8x64xf32> -> vector<8x128xf32>
    %c0_97 = arith.constant 0 : index
    %c0_98 = arith.constant 0 : index
    %234 = vector.load %arg8[%c0_97, %c0_98] : memref<128x128xf32, #tpu.memory_space<vmem>>, vector<128x128xf32>
    %cst_99 = arith.constant dense<0.000000e+00> : vector<8x128xf32>
    %235 = tpu.matmul %233, %234, %cst_99 {dimension_numbers = #tpu.dot_dimension_numbers<[1], [0], [0], [1], [0, 0, 1, 1], [], []>} : vector<8x128xf32>, vector<128x128xf32>, vector<8x128xf32> -> vector<8x128xf32>
    %236 = vector.broadcast %18 : vector<1x128xf32> to vector<8x128xf32>
    %237 = arith.addf %235, %236 : vector<8x128xf32>
    %238 = arith.negf %237 : vector<8x128xf32>
    %239 = math.exp %238 : vector<8x128xf32>
    %cst_100 = arith.constant 1.000000e+00 : f32
    %240 = vector.broadcast %cst_100 : f32 to vector<8x128xf32>
    %241 = arith.addf %240, %239 : vector<8x128xf32>
    %242 = arith.divf %240, %241 : vector<8x128xf32>
    %c0_101 = arith.constant 0 : index
    %c0_102 = arith.constant 0 : index
    %243 = vector.load %arg12[%c0_101, %c0_102] : memref<64x64xf32, #tpu.memory_space<vmem>>, vector<64x64xf32>
    %cst_103 = arith.constant dense<0.000000e+00> : vector<8x64xf32>
    %244 = tpu.matmul %205, %243, %cst_103 {dimension_numbers = #tpu.dot_dimension_numbers<[1], [0], [0], [1], [0, 0, 1, 1], [], []>} : vector<8x64xf32>, vector<64x64xf32>, vector<8x64xf32> -> vector<8x64xf32>
    %245 = arith.addf %244, %17 : vector<8x64xf32>
    %246 = vector.extract_strided_slice %242 {offsets = [0, 0], sizes = [8, 64], strides = [1, 1]} : vector<8x128xf32> to vector<8x64xf32>
    %247 = vector.extract_strided_slice %242 {offsets = [0, 64], sizes = [8, 64], strides = [1, 1]} : vector<8x128xf32> to vector<8x64xf32>
    %248 = arith.mulf %246, %245 : vector<8x64xf32>
    %249 = arith.addf %232, %248 : vector<8x64xf32>
    %250 = math.tanh %249 : vector<8x64xf32>
    %cst_104 = arith.constant 1.000000e+00 : f32
    %251 = vector.broadcast %cst_104 : f32 to vector<8x64xf32>
    %252 = arith.subf %251, %247 : vector<8x64xf32>
    %253 = arith.mulf %252, %250 : vector<8x64xf32>
    %254 = arith.mulf %247, %205 : vector<8x64xf32>
    %255 = arith.addf %253, %254 : vector<8x64xf32>
    %256 = vector.extract_strided_slice %6 {offsets = [40, 0], sizes = [8, 128], strides = [1, 1]} : vector<64x128xf32> to vector<8x128xf32>
    %257 = vector.extract_strided_slice %11 {offsets = [40, 0], sizes = [8, 64], strides = [1, 1]} : vector<64x64xf32> to vector<8x64xf32>
    %c0_105 = arith.constant 0 : index
    %c0_106 = arith.constant 0 : index
    %258 = vector.load %arg5[%c0_105, %c0_106] : memref<64x128xf32, #tpu.memory_space<vmem>>, vector<64x128xf32>
    %cst_107 = arith.constant dense<0.000000e+00> : vector<8x128xf32>
    %259 = tpu.matmul %228, %258, %cst_107 {dimension_numbers = #tpu.dot_dimension_numbers<[1], [0], [0], [1], [0, 0, 1, 1], [], []>} : vector<8x64xf32>, vector<64x128xf32>, vector<8x128xf32> -> vector<8x128xf32>
    %c0_108 = arith.constant 0 : index
    %c0_109 = arith.constant 0 : index
    %260 = vector.load %arg6[%c0_108, %c0_109] : memref<64x64xf32, #tpu.memory_space<vmem>>, vector<64x64xf32>
    %cst_110 = arith.constant dense<0.000000e+00> : vector<8x64xf32>
    %261 = tpu.matmul %228, %260, %cst_110 {dimension_numbers = #tpu.dot_dimension_numbers<[1], [0], [0], [1], [0, 0, 1, 1], [], []>} : vector<8x64xf32>, vector<64x64xf32>, vector<8x64xf32> -> vector<8x64xf32>
    %262 = arith.addf %261, %14 : vector<8x64xf32>
    %263 = arith.addf %256, %259 : vector<8x128xf32>
    %264 = arith.negf %263 : vector<8x128xf32>
    %265 = math.exp %264 : vector<8x128xf32>
    %cst_111 = arith.constant 1.000000e+00 : f32
    %266 = vector.broadcast %cst_111 : f32 to vector<8x128xf32>
    %267 = arith.addf %266, %265 : vector<8x128xf32>
    %268 = arith.divf %266, %267 : vector<8x128xf32>
    %269 = vector.extract_strided_slice %268 {offsets = [0, 0], sizes = [8, 64], strides = [1, 1]} : vector<8x128xf32> to vector<8x64xf32>
    %270 = vector.extract_strided_slice %268 {offsets = [0, 64], sizes = [8, 64], strides = [1, 1]} : vector<8x128xf32> to vector<8x64xf32>
    %271 = arith.mulf %269, %262 : vector<8x64xf32>
    %272 = arith.addf %257, %271 : vector<8x64xf32>
    %273 = math.tanh %272 : vector<8x64xf32>
    %cst_112 = arith.constant 1.000000e+00 : f32
    %274 = vector.broadcast %cst_112 : f32 to vector<8x64xf32>
    %275 = arith.subf %274, %270 : vector<8x64xf32>
    %276 = arith.mulf %275, %273 : vector<8x64xf32>
    %277 = arith.mulf %270, %228 : vector<8x64xf32>
    %278 = arith.addf %276, %277 : vector<8x64xf32>
    %c0_113 = arith.constant 0 : index
    %c0_114 = arith.constant 0 : index
    %279 = vector.load %arg10[%c0_113, %c0_114] : memref<64x64xf32, #tpu.memory_space<vmem>>, vector<64x64xf32>
    %cst_115 = arith.constant dense<0.000000e+00> : vector<8x64xf32>
    %280 = tpu.matmul %278, %279, %cst_115 {dimension_numbers = #tpu.dot_dimension_numbers<[1], [0], [0], [1], [0, 0, 1, 1], [], []>} : vector<8x64xf32>, vector<64x64xf32>, vector<8x64xf32> -> vector<8x64xf32>
    %281 = vector.broadcast %19 : vector<1x64xf32> to vector<8x64xf32>
    %282 = arith.addf %280, %281 : vector<8x64xf32>
    %283 = tpu.concatenate %278, %255 in 1 : vector<8x64xf32>, vector<8x64xf32> -> vector<8x128xf32>
    %c0_116 = arith.constant 0 : index
    %c0_117 = arith.constant 0 : index
    %284 = vector.load %arg8[%c0_116, %c0_117] : memref<128x128xf32, #tpu.memory_space<vmem>>, vector<128x128xf32>
    %cst_118 = arith.constant dense<0.000000e+00> : vector<8x128xf32>
    %285 = tpu.matmul %283, %284, %cst_118 {dimension_numbers = #tpu.dot_dimension_numbers<[1], [0], [0], [1], [0, 0, 1, 1], [], []>} : vector<8x128xf32>, vector<128x128xf32>, vector<8x128xf32> -> vector<8x128xf32>
    %286 = vector.broadcast %18 : vector<1x128xf32> to vector<8x128xf32>
    %287 = arith.addf %285, %286 : vector<8x128xf32>
    %288 = arith.negf %287 : vector<8x128xf32>
    %289 = math.exp %288 : vector<8x128xf32>
    %cst_119 = arith.constant 1.000000e+00 : f32
    %290 = vector.broadcast %cst_119 : f32 to vector<8x128xf32>
    %291 = arith.addf %290, %289 : vector<8x128xf32>
    %292 = arith.divf %290, %291 : vector<8x128xf32>
    %c0_120 = arith.constant 0 : index
    %c0_121 = arith.constant 0 : index
    %293 = vector.load %arg12[%c0_120, %c0_121] : memref<64x64xf32, #tpu.memory_space<vmem>>, vector<64x64xf32>
    %cst_122 = arith.constant dense<0.000000e+00> : vector<8x64xf32>
    %294 = tpu.matmul %255, %293, %cst_122 {dimension_numbers = #tpu.dot_dimension_numbers<[1], [0], [0], [1], [0, 0, 1, 1], [], []>} : vector<8x64xf32>, vector<64x64xf32>, vector<8x64xf32> -> vector<8x64xf32>
    %295 = arith.addf %294, %17 : vector<8x64xf32>
    %296 = vector.extract_strided_slice %292 {offsets = [0, 0], sizes = [8, 64], strides = [1, 1]} : vector<8x128xf32> to vector<8x64xf32>
    %297 = vector.extract_strided_slice %292 {offsets = [0, 64], sizes = [8, 64], strides = [1, 1]} : vector<8x128xf32> to vector<8x64xf32>
    %298 = arith.mulf %296, %295 : vector<8x64xf32>
    %299 = arith.addf %282, %298 : vector<8x64xf32>
    %300 = math.tanh %299 : vector<8x64xf32>
    %cst_123 = arith.constant 1.000000e+00 : f32
    %301 = vector.broadcast %cst_123 : f32 to vector<8x64xf32>
    %302 = arith.subf %301, %297 : vector<8x64xf32>
    %303 = arith.mulf %302, %300 : vector<8x64xf32>
    %304 = arith.mulf %297, %255 : vector<8x64xf32>
    %305 = arith.addf %303, %304 : vector<8x64xf32>
    %306 = vector.extract_strided_slice %6 {offsets = [48, 0], sizes = [8, 128], strides = [1, 1]} : vector<64x128xf32> to vector<8x128xf32>
    %307 = vector.extract_strided_slice %11 {offsets = [48, 0], sizes = [8, 64], strides = [1, 1]} : vector<64x64xf32> to vector<8x64xf32>
    %c0_124 = arith.constant 0 : index
    %c0_125 = arith.constant 0 : index
    %308 = vector.load %arg5[%c0_124, %c0_125] : memref<64x128xf32, #tpu.memory_space<vmem>>, vector<64x128xf32>
    %cst_126 = arith.constant dense<0.000000e+00> : vector<8x128xf32>
    %309 = tpu.matmul %278, %308, %cst_126 {dimension_numbers = #tpu.dot_dimension_numbers<[1], [0], [0], [1], [0, 0, 1, 1], [], []>} : vector<8x64xf32>, vector<64x128xf32>, vector<8x128xf32> -> vector<8x128xf32>
    %c0_127 = arith.constant 0 : index
    %c0_128 = arith.constant 0 : index
    %310 = vector.load %arg6[%c0_127, %c0_128] : memref<64x64xf32, #tpu.memory_space<vmem>>, vector<64x64xf32>
    %cst_129 = arith.constant dense<0.000000e+00> : vector<8x64xf32>
    %311 = tpu.matmul %278, %310, %cst_129 {dimension_numbers = #tpu.dot_dimension_numbers<[1], [0], [0], [1], [0, 0, 1, 1], [], []>} : vector<8x64xf32>, vector<64x64xf32>, vector<8x64xf32> -> vector<8x64xf32>
    %312 = arith.addf %311, %14 : vector<8x64xf32>
    %313 = arith.addf %306, %309 : vector<8x128xf32>
    %314 = arith.negf %313 : vector<8x128xf32>
    %315 = math.exp %314 : vector<8x128xf32>
    %cst_130 = arith.constant 1.000000e+00 : f32
    %316 = vector.broadcast %cst_130 : f32 to vector<8x128xf32>
    %317 = arith.addf %316, %315 : vector<8x128xf32>
    %318 = arith.divf %316, %317 : vector<8x128xf32>
    %319 = vector.extract_strided_slice %318 {offsets = [0, 0], sizes = [8, 64], strides = [1, 1]} : vector<8x128xf32> to vector<8x64xf32>
    %320 = vector.extract_strided_slice %318 {offsets = [0, 64], sizes = [8, 64], strides = [1, 1]} : vector<8x128xf32> to vector<8x64xf32>
    %321 = arith.mulf %319, %312 : vector<8x64xf32>
    %322 = arith.addf %307, %321 : vector<8x64xf32>
    %323 = math.tanh %322 : vector<8x64xf32>
    %cst_131 = arith.constant 1.000000e+00 : f32
    %324 = vector.broadcast %cst_131 : f32 to vector<8x64xf32>
    %325 = arith.subf %324, %320 : vector<8x64xf32>
    %326 = arith.mulf %325, %323 : vector<8x64xf32>
    %327 = arith.mulf %320, %278 : vector<8x64xf32>
    %328 = arith.addf %326, %327 : vector<8x64xf32>
    %c0_132 = arith.constant 0 : index
    %c0_133 = arith.constant 0 : index
    %329 = vector.load %arg10[%c0_132, %c0_133] : memref<64x64xf32, #tpu.memory_space<vmem>>, vector<64x64xf32>
    %cst_134 = arith.constant dense<0.000000e+00> : vector<8x64xf32>
    %330 = tpu.matmul %328, %329, %cst_134 {dimension_numbers = #tpu.dot_dimension_numbers<[1], [0], [0], [1], [0, 0, 1, 1], [], []>} : vector<8x64xf32>, vector<64x64xf32>, vector<8x64xf32> -> vector<8x64xf32>
    %331 = vector.broadcast %19 : vector<1x64xf32> to vector<8x64xf32>
    %332 = arith.addf %330, %331 : vector<8x64xf32>
    %333 = tpu.concatenate %328, %305 in 1 : vector<8x64xf32>, vector<8x64xf32> -> vector<8x128xf32>
    %c0_135 = arith.constant 0 : index
    %c0_136 = arith.constant 0 : index
    %334 = vector.load %arg8[%c0_135, %c0_136] : memref<128x128xf32, #tpu.memory_space<vmem>>, vector<128x128xf32>
    %cst_137 = arith.constant dense<0.000000e+00> : vector<8x128xf32>
    %335 = tpu.matmul %333, %334, %cst_137 {dimension_numbers = #tpu.dot_dimension_numbers<[1], [0], [0], [1], [0, 0, 1, 1], [], []>} : vector<8x128xf32>, vector<128x128xf32>, vector<8x128xf32> -> vector<8x128xf32>
    %336 = vector.broadcast %18 : vector<1x128xf32> to vector<8x128xf32>
    %337 = arith.addf %335, %336 : vector<8x128xf32>
    %338 = arith.negf %337 : vector<8x128xf32>
    %339 = math.exp %338 : vector<8x128xf32>
    %cst_138 = arith.constant 1.000000e+00 : f32
    %340 = vector.broadcast %cst_138 : f32 to vector<8x128xf32>
    %341 = arith.addf %340, %339 : vector<8x128xf32>
    %342 = arith.divf %340, %341 : vector<8x128xf32>
    %c0_139 = arith.constant 0 : index
    %c0_140 = arith.constant 0 : index
    %343 = vector.load %arg12[%c0_139, %c0_140] : memref<64x64xf32, #tpu.memory_space<vmem>>, vector<64x64xf32>
    %cst_141 = arith.constant dense<0.000000e+00> : vector<8x64xf32>
    %344 = tpu.matmul %305, %343, %cst_141 {dimension_numbers = #tpu.dot_dimension_numbers<[1], [0], [0], [1], [0, 0, 1, 1], [], []>} : vector<8x64xf32>, vector<64x64xf32>, vector<8x64xf32> -> vector<8x64xf32>
    %345 = arith.addf %344, %17 : vector<8x64xf32>
    %346 = vector.extract_strided_slice %342 {offsets = [0, 0], sizes = [8, 64], strides = [1, 1]} : vector<8x128xf32> to vector<8x64xf32>
    %347 = vector.extract_strided_slice %342 {offsets = [0, 64], sizes = [8, 64], strides = [1, 1]} : vector<8x128xf32> to vector<8x64xf32>
    %348 = arith.mulf %346, %345 : vector<8x64xf32>
    %349 = arith.addf %332, %348 : vector<8x64xf32>
    %350 = math.tanh %349 : vector<8x64xf32>
    %cst_142 = arith.constant 1.000000e+00 : f32
    %351 = vector.broadcast %cst_142 : f32 to vector<8x64xf32>
    %352 = arith.subf %351, %347 : vector<8x64xf32>
    %353 = arith.mulf %352, %350 : vector<8x64xf32>
    %354 = arith.mulf %347, %305 : vector<8x64xf32>
    %355 = arith.addf %353, %354 : vector<8x64xf32>
    %356 = vector.extract_strided_slice %6 {offsets = [56, 0], sizes = [8, 128], strides = [1, 1]} : vector<64x128xf32> to vector<8x128xf32>
    %357 = vector.extract_strided_slice %11 {offsets = [56, 0], sizes = [8, 64], strides = [1, 1]} : vector<64x64xf32> to vector<8x64xf32>
    %c0_143 = arith.constant 0 : index
    %c0_144 = arith.constant 0 : index
    %358 = vector.load %arg5[%c0_143, %c0_144] : memref<64x128xf32, #tpu.memory_space<vmem>>, vector<64x128xf32>
    %cst_145 = arith.constant dense<0.000000e+00> : vector<8x128xf32>
    %359 = tpu.matmul %328, %358, %cst_145 {dimension_numbers = #tpu.dot_dimension_numbers<[1], [0], [0], [1], [0, 0, 1, 1], [], []>} : vector<8x64xf32>, vector<64x128xf32>, vector<8x128xf32> -> vector<8x128xf32>
    %c0_146 = arith.constant 0 : index
    %c0_147 = arith.constant 0 : index
    %360 = vector.load %arg6[%c0_146, %c0_147] : memref<64x64xf32, #tpu.memory_space<vmem>>, vector<64x64xf32>
    %cst_148 = arith.constant dense<0.000000e+00> : vector<8x64xf32>
    %361 = tpu.matmul %328, %360, %cst_148 {dimension_numbers = #tpu.dot_dimension_numbers<[1], [0], [0], [1], [0, 0, 1, 1], [], []>} : vector<8x64xf32>, vector<64x64xf32>, vector<8x64xf32> -> vector<8x64xf32>
    %362 = arith.addf %361, %14 : vector<8x64xf32>
    %363 = arith.addf %356, %359 : vector<8x128xf32>
    %364 = arith.negf %363 : vector<8x128xf32>
    %365 = math.exp %364 : vector<8x128xf32>
    %cst_149 = arith.constant 1.000000e+00 : f32
    %366 = vector.broadcast %cst_149 : f32 to vector<8x128xf32>
    %367 = arith.addf %366, %365 : vector<8x128xf32>
    %368 = arith.divf %366, %367 : vector<8x128xf32>
    %369 = vector.extract_strided_slice %368 {offsets = [0, 0], sizes = [8, 64], strides = [1, 1]} : vector<8x128xf32> to vector<8x64xf32>
    %370 = vector.extract_strided_slice %368 {offsets = [0, 64], sizes = [8, 64], strides = [1, 1]} : vector<8x128xf32> to vector<8x64xf32>
    %371 = arith.mulf %369, %362 : vector<8x64xf32>
    %372 = arith.addf %357, %371 : vector<8x64xf32>
    %373 = math.tanh %372 : vector<8x64xf32>
    %cst_150 = arith.constant 1.000000e+00 : f32
    %374 = vector.broadcast %cst_150 : f32 to vector<8x64xf32>
    %375 = arith.subf %374, %370 : vector<8x64xf32>
    %376 = arith.mulf %375, %373 : vector<8x64xf32>
    %377 = arith.mulf %370, %328 : vector<8x64xf32>
    %378 = arith.addf %376, %377 : vector<8x64xf32>
    %c0_151 = arith.constant 0 : index
    %c0_152 = arith.constant 0 : index
    %379 = vector.load %arg10[%c0_151, %c0_152] : memref<64x64xf32, #tpu.memory_space<vmem>>, vector<64x64xf32>
    %cst_153 = arith.constant dense<0.000000e+00> : vector<8x64xf32>
    %380 = tpu.matmul %378, %379, %cst_153 {dimension_numbers = #tpu.dot_dimension_numbers<[1], [0], [0], [1], [0, 0, 1, 1], [], []>} : vector<8x64xf32>, vector<64x64xf32>, vector<8x64xf32> -> vector<8x64xf32>
    %381 = vector.broadcast %19 : vector<1x64xf32> to vector<8x64xf32>
    %382 = arith.addf %380, %381 : vector<8x64xf32>
    %383 = tpu.concatenate %378, %355 in 1 : vector<8x64xf32>, vector<8x64xf32> -> vector<8x128xf32>
    %c0_154 = arith.constant 0 : index
    %c0_155 = arith.constant 0 : index
    %384 = vector.load %arg8[%c0_154, %c0_155] : memref<128x128xf32, #tpu.memory_space<vmem>>, vector<128x128xf32>
    %cst_156 = arith.constant dense<0.000000e+00> : vector<8x128xf32>
    %385 = tpu.matmul %383, %384, %cst_156 {dimension_numbers = #tpu.dot_dimension_numbers<[1], [0], [0], [1], [0, 0, 1, 1], [], []>} : vector<8x128xf32>, vector<128x128xf32>, vector<8x128xf32> -> vector<8x128xf32>
    %386 = vector.broadcast %18 : vector<1x128xf32> to vector<8x128xf32>
    %387 = arith.addf %385, %386 : vector<8x128xf32>
    %388 = arith.negf %387 : vector<8x128xf32>
    %389 = math.exp %388 : vector<8x128xf32>
    %cst_157 = arith.constant 1.000000e+00 : f32
    %390 = vector.broadcast %cst_157 : f32 to vector<8x128xf32>
    %391 = arith.addf %390, %389 : vector<8x128xf32>
    %392 = arith.divf %390, %391 : vector<8x128xf32>
    %c0_158 = arith.constant 0 : index
    %c0_159 = arith.constant 0 : index
    %393 = vector.load %arg12[%c0_158, %c0_159] : memref<64x64xf32, #tpu.memory_space<vmem>>, vector<64x64xf32>
    %cst_160 = arith.constant dense<0.000000e+00> : vector<8x64xf32>
    %394 = tpu.matmul %355, %393, %cst_160 {dimension_numbers = #tpu.dot_dimension_numbers<[1], [0], [0], [1], [0, 0, 1, 1], [], []>} : vector<8x64xf32>, vector<64x64xf32>, vector<8x64xf32> -> vector<8x64xf32>
    %395 = arith.addf %394, %17 : vector<8x64xf32>
    %396 = vector.extract_strided_slice %392 {offsets = [0, 0], sizes = [8, 64], strides = [1, 1]} : vector<8x128xf32> to vector<8x64xf32>
    %397 = vector.extract_strided_slice %392 {offsets = [0, 64], sizes = [8, 64], strides = [1, 1]} : vector<8x128xf32> to vector<8x64xf32>
    %398 = arith.mulf %396, %395 : vector<8x64xf32>
    %399 = arith.addf %382, %398 : vector<8x64xf32>
    %400 = math.tanh %399 : vector<8x64xf32>
    %cst_161 = arith.constant 1.000000e+00 : f32
    %401 = vector.broadcast %cst_161 : f32 to vector<8x64xf32>
    %402 = arith.subf %401, %397 : vector<8x64xf32>
    %403 = arith.mulf %402, %400 : vector<8x64xf32>
    %404 = arith.mulf %397, %355 : vector<8x64xf32>
    %405 = arith.addf %403, %404 : vector<8x64xf32>
    %cst_162 = arith.constant 0.000000e+00 : f32
    %406 = vector.broadcast %cst_162 : f32 to vector<8x64xf32>
    %407 = arith.maximumf %405, %406 : vector<8x64xf32>
    %c0_163 = arith.constant 0 : index
    %c0_164 = arith.constant 0 : index
    %408 = vector.load %arg14[%c0_163, %c0_164] : memref<64x8xf32, #tpu.memory_space<vmem>>, vector<64x8xf32>
    %cst_165 = arith.constant dense<0.000000e+00> : vector<8x8xf32>
    %409 = tpu.matmul %407, %408, %cst_165 {dimension_numbers = #tpu.dot_dimension_numbers<[1], [0], [0], [1], [0, 0, 1, 1], [], []>} : vector<8x64xf32>, vector<64x8xf32>, vector<8x8xf32> -> vector<8x8xf32>
    %c0_166 = arith.constant 0 : index
    %c0_167 = arith.constant 0 : index
    %410 = vector.load %arg15[%c0_166, %c0_167] : memref<1x8xf32, #tpu.memory_space<vmem>>, vector<1x8xf32>
    %411 = vector.broadcast %410 : vector<1x8xf32> to vector<8x8xf32>
    %412 = arith.addf %409, %411 : vector<8x8xf32>
    %c0_168 = arith.constant 0 : index
    %c0_169 = arith.constant 0 : index
    %413 = vector.load %arg16[%c0_168, %c0_169] : memref<8x8xf32, #tpu.memory_space<vmem>>, vector<8x8xf32>
    tpu.vector_store %arg16[%c0_168, %c0_169], %412 {strides = array<i32>} : memref<8x8xf32, #tpu.memory_space<vmem>>, vector<8x8xf32>,
    return
  }
}

</mosaic_0001>

<llo_original>
// kernel: deep_rnn_forward.1
$region0: #{deep_rnn_forward.1}
  #allocation0 [shape = 'u32[]', space=smem, size = 0x4, offset = 0x4, fixed_abs, tag = 'smem constant byte address 0x4 - core index']
  #allocation1 [shape = 'u32[144,128]{1,0:T(1,128)}', space=vmem, size = 0x12000, scoped, tag = 'internal scratch']
  %s0 = inlined_call_operand.vmem [shape: f32[8,8,16], index: 0, kind: input, shape index: {}]
  %s1 = inlined_call_operand.vmem [shape: f32[16,128], index: 1, kind: input, shape index: {}]
  %s2 = inlined_call_operand.vmem [shape: f32[1,128], index: 2, kind: input, shape index: {}]
  %s3 = inlined_call_operand.vmem [shape: f32[16,64], index: 3, kind: input, shape index: {}]
  %s4 = inlined_call_operand.vmem [shape: f32[1,64], index: 4, kind: input, shape index: {}]
  %s5 = inlined_call_operand.vmem [shape: f32[64,128], index: 5, kind: input, shape index: {}]
  %s6 = inlined_call_operand.hbm [shape: f32[64,64], index: 6, kind: input, shape index: {}]
  %s7 = inlined_call_operand.vmem [shape: f32[1,64], index: 7, kind: input, shape index: {}]
  %s8 = inlined_call_operand.vmem [shape: f32[128,128], index: 8, kind: input, shape index: {}]
  %s9 = inlined_call_operand.vmem [shape: f32[1,128], index: 9, kind: input, shape index: {}]
  %s10 = inlined_call_operand.hbm [shape: f32[64,64], index: 10, kind: input, shape index: {}]
  %s11 = inlined_call_operand.vmem [shape: f32[1,64], index: 11, kind: input, shape index: {}]
  %s12 = inlined_call_operand.hbm [shape: f32[64,64], index: 12, kind: input, shape index: {}]
  %s13 = inlined_call_operand.vmem [shape: f32[1,64], index: 13, kind: input, shape index: {}]
  %s14 = inlined_call_operand.vmem [shape: f32[64,8], index: 14, kind: input, shape index: {}]
  %s15 = inlined_call_operand.vmem [shape: f32[1,8], index: 15, kind: input, shape index: {}]
  %s16 = inlined_call_operand.vmem [shape: f32[8,8], index: 16, kind: output, shape index: {}]
  %s17 = sld [smem:[#allocation0]]
  $region86: #{deep_rnn_forward.1} parent=0
    _
  %s19 = ssub.s32 1, %s17
  %s20 = scalar_select 0, %s19, %s17
  $region1: #{deep_rnn_forward.1} parent=0
    #allocation2 [shape = 'u8[32768]{0}', space=vmem, size = 0x8000, scoped, tag = 'input window, operand 6, single buffered']
    #allocation3 [shape = 's32[1]{0}', space=sflag, size = 0x4, scoped, tag = 'scoped memory for deep_rnn_forward.1']
    #allocation4 [shape = 'u8[32768]{0}', space=vmem, size = 0x8000, scoped, tag = 'input window, operand 10, single buffered']
    #allocation5 [shape = 's32[1]{0}', space=sflag, size = 0x4, scoped, tag = 'scoped memory for deep_rnn_forward.1']
    #allocation6 [shape = 'u8[32768]{0}', space=vmem, size = 0x8000, scoped, tag = 'input window, operand 12, single buffered']
    %21 = vsyncpa [#allocation3], 0
    %22 = vsyncpa [#allocation5], 0
    // Predicated region
    $region2: #{deep_rnn_forward.1} parent=1 // pred_check
      _
    $region3: #{deep_rnn_forward.1} parent=1 // pred_check_branch
      %24 = sbr.rel (0) target = $region5
    $region4: #{deep_rnn_forward.1} parent=1 // pred_region
      _
    $region5: #{deep_rnn_forward.1} parent=1 // pred_fallthru
      _
    // Predicated region
    $region6: #{deep_rnn_forward.1} parent=1 // pred_check
      _
    $region7: #{deep_rnn_forward.1} parent=1 // pred_check_branch
      %26 = sbr.rel (0) target = $region9
    $region8: #{deep_rnn_forward.1} parent=1 // pred_region
      _
    $region9: #{deep_rnn_forward.1} parent=1 // pred_fallthru
      _
    // Predicated region
    $region10: #{deep_rnn_forward.1} parent=1 // pred_check
      _
    $region11: #{deep_rnn_forward.1} parent=1 // pred_check_branch
      %28 = sbr.rel (0) target = $region13
    $region12: #{deep_rnn_forward.1} parent=1 // pred_region
      _
    $region13: #{deep_rnn_forward.1} parent=1 // pred_fallthru
      _
    // Predicated region
    $region14: #{deep_rnn_forward.1} parent=1 // pred_check
      _
    $region15: #{deep_rnn_forward.1} parent=1 // pred_check_branch
      %30 = sbr.rel (0) target = $region17
    $region16: #{deep_rnn_forward.1} parent=1 // pred_region
      _
    $region17: #{deep_rnn_forward.1} parent=1 // pred_fallthru
      _
    // Predicated region
    $region18: #{deep_rnn_forward.1} parent=1 // pred_check
      _
    $region19: #{deep_rnn_forward.1} parent=1 // pred_check_branch
      %32 = sbr.rel (0) target = $region21
    $region20: #{deep_rnn_forward.1} parent=1 // pred_region
      _
    $region21: #{deep_rnn_forward.1} parent=1 // pred_fallthru
      _
    // Predicated region
    $region22: #{deep_rnn_forward.1} parent=1 // pred_check
      _
    $region23: #{deep_rnn_forward.1} parent=1 // pred_check_branch
      %34 = sbr.rel (0) target = $region25
    $region24: #{deep_rnn_forward.1} parent=1 // pred_region
      _
    $region25: #{deep_rnn_forward.1} parent=1 // pred_fallthru
      _
    // Predicated region
    $region26: #{deep_rnn_forward.1} parent=1 // pred_check
      _
    $region27: #{deep_rnn_forward.1} parent=1 // pred_check_branch
      %36 = sbr.rel (0) target = $region29
    $region28: #{deep_rnn_forward.1} parent=1 // pred_region
      %s38 = ssub.s32 1024, 1024
      %39 = vsyncadd [#allocation3], %s38
      %s40 = sshll.u32 [#allocation2], 4
      %s41 = int_to_ptr.vmem [resolvable:$true] %s40
      %46 = dma.hbm_to_vmem [thread:$0]  %s6, 1024, %s41, [#allocation3], 128, 128, 8
    $region29: #{deep_rnn_forward.1} parent=1 // pred_fallthru
      _
    // Predicated region
    $region30: #{deep_rnn_forward.1} parent=1 // pred_check
      _
    $region31: #{deep_rnn_forward.1} parent=1 // pred_check_branch
      %48 = sbr.rel (0) target = $region33
    $region32: #{deep_rnn_forward.1} parent=1 // pred_region
      _
    $region33: #{deep_rnn_forward.1} parent=1 // pred_fallthru
      _
    // Predicated region
    $region34: #{deep_rnn_forward.1} parent=1 // pred_check
      _
    $region35: #{deep_rnn_forward.1} parent=1 // pred_check_branch
      %50 = sbr.rel (0) target = $region37
    $region36: #{deep_rnn_forward.1} parent=1 // pred_region
      _
    $region37: #{deep_rnn_forward.1} parent=1 // pred_fallthru
      _
    // Predicated region
    $region38: #{deep_rnn_forward.1} parent=1 // pred_check
      _
    $region39: #{deep_rnn_forward.1} parent=1 // pred_check_branch
      %52 = sbr.rel (0) target = $region41
    $region40: #{deep_rnn_forward.1} parent=1 // pred_region
      _
    $region41: #{deep_rnn_forward.1} parent=1 // pred_fallthru
      _
    // Predicated region
    $region42: #{deep_rnn_forward.1} parent=1 // pred_check
      _
    $region43: #{deep_rnn_forward.1} parent=1 // pred_check_branch
      %54 = sbr.rel (0) target = $region45
    $region44: #{deep_rnn_forward.1} parent=1 // pred_region
      %s56 = ssub.s32 1024, 1024
      %57 = vsyncadd [#allocation5], %s56
      %s58 = sshll.u32 [#allocation4], 4
      %s59 = int_to_ptr.vmem [resolvable:$true] %s58
      %64 = dma.hbm_to_vmem [thread:$0]  %s10, 1024, %s59, [#allocation5], 128, 128, 8
    $region45: #{deep_rnn_forward.1} parent=1 // pred_fallthru
      _
    // Predicated region
    $region46: #{deep_rnn_forward.1} parent=1 // pred_check
      _
    $region47: #{deep_rnn_forward.1} parent=1 // pred_check_branch
      %66 = sbr.rel (0) target = $region49
    $region48: #{deep_rnn_forward.1} parent=1 // pred_region
      _
    $region49: #{deep_rnn_forward.1} parent=1 // pred_fallthru
      _
    // Predicated region
    $region50: #{deep_rnn_forward.1} parent=1 // pred_check
      _
    $region51: #{deep_rnn_forward.1} parent=1 // pred_check_branch
      %68 = sbr.rel (0) target = $region53
    $region52: #{deep_rnn_forward.1} parent=1 // pred_region
      %s70 = ssub.s32 1024, 1024
      %71 = vsyncadd [#allocation5], %s70
      %s72 = sshll.u32 [#allocation6], 4
      %s73 = int_to_ptr.vmem [resolvable:$true] %s72
      %78 = dma.hbm_to_vmem [thread:$0]  %s12, 1024, %s73, [#allocation5], 128, 128, 8
    $region53: #{deep_rnn_forward.1} parent=1 // pred_fallthru
      _
    // Predicated region
    $region54: #{deep_rnn_forward.1} parent=1 // pred_check
      _
    $region55: #{deep_rnn_forward.1} parent=1 // pred_check_branch
      %80 = sbr.rel (0) target = $region57
    $region56: #{deep_rnn_forward.1} parent=1 // pred_region
      _
    $region57: #{deep_rnn_forward.1} parent=1 // pred_fallthru
      _
    // Predicated region
    $region58: #{deep_rnn_forward.1} parent=1 // pred_check
      _
    $region59: #{deep_rnn_forward.1} parent=1 // pred_check_branch
      %82 = sbr.rel (0) target = $region61
    $region60: #{deep_rnn_forward.1} parent=1 // pred_region
      _
    $region61: #{deep_rnn_forward.1} parent=1 // pred_fallthru
      _
    // Predicated region
    $region62: #{deep_rnn_forward.1} parent=1 // pred_check
      _
    $region63: #{deep_rnn_forward.1} parent=1 // pred_check_branch
      %84 = sbr.rel (0) target = $region65
    $region64: #{deep_rnn_forward.1} parent=1 // pred_region
      _
    $region65: #{deep_rnn_forward.1} parent=1 // pred_fallthru
      _
    // Predicated region
    $region66: #{deep_rnn_forward.1} parent=1 // pred_check
      _
    $region67: #{deep_rnn_forward.1} parent=1 // pred_check_branch
      %86 = sbr.rel (0) target = $region69
    $region68: #{deep_rnn_forward.1} parent=1 // pred_region
      %87 = dma.done [#allocation3], 1024
    $region69: #{deep_rnn_forward.1} parent=1 // pred_fallthru
      _
    // Predicated region
    $region70: #{deep_rnn_forward.1} parent=1 // pred_check
      _
    $region71: #{deep_rnn_forward.1} parent=1 // pred_check_branch
      %89 = sbr.rel (0) target = $region73
    $region72: #{deep_rnn_forward.1} parent=1 // pred_region
      %90 = dma.done [#allocation5], 1024
    $region73: #{deep_rnn_forward.1} parent=1 // pred_fallthru
      _
    // Predicated region
    $region74: #{deep_rnn_forward.1} parent=1 // pred_check
      _
    $region75: #{deep_rnn_forward.1} parent=1 // pred_check_branch
      %92 = sbr.rel (0) target = $region77
    $region76: #{deep_rnn_forward.1} parent=1 // pred_region
      %93 = dma.done [#allocation5], 1024
    $region77: #{deep_rnn_forward.1} parent=1 // pred_fallthru
      _
    %v94 = vld [vmem:[%s0] sm:$0xff]
    %v95 = vld [vmem:[%s0 + $0x8] sm:$0xff]
    %v96 = vld [vmem:[%s0 + $0x10] sm:$0xff]
    %v97 = vld [vmem:[%s0 + $0x18] sm:$0xff]
    %v98 = vld [vmem:[%s0 + $0x20] sm:$0xff]
    %v99 = vld [vmem:[%s0 + $0x28] sm:$0xff]
    %v100 = vld [vmem:[%s0 + $0x30] sm:$0xff]
    %v101 = vld [vmem:[%s0 + $0x38] sm:$0xff]
    %v102 = vld [vmem:[%s1] sm:$0xff]
    %v103 = vld [vmem:[%s1 + $0x8] sm:$0xff]
    %v104 = vld [vmem:[%s2] sm:$0x1]
    %v106 = vlaneseq
    %v107 = vshrl.u32 %v106, 7
    %v108 = vsub.s32 0, %v107
    %v109 = vrot.slane %v104, %v108
    %vm111 = vcmask 130048
    %v113 = vsel %vm111, %v94, 0
    %v116 = vsel %vm111, %v95, 0
    %v119 = vsel %vm111, %v96, 0
    %v122 = vsel %vm111, %v97, 0
    %v125 = vsel %vm111, %v98, 0
    %v128 = vsel %vm111, %v99, 0
    %v131 = vsel %vm111, %v100, 0
    %v134 = vsel %vm111, %v101, 0
    %136 = vmatprep.subr.mxu0 0.0
    %137 = vmatpush1.msra.mxu0 0.0
    %138 = vmatprep.subr.mxu0 0.0
    %139 = vmatpush1.msra.mxu0 0.0
    %140 = vmatprep.subr.mxu0 0.0
    %141 = vmatpush1.msra.mxu0 0.0
    %142 = vmatprep.subr.mxu0 0.0
    %143 = vmatpush1.msra.mxu0 0.0
    %144 = vmatprep.subr.mxu0 0.0
    %145 = vmatpush1.msra.mxu0 0.0
    %146 = vmatprep.subr.mxu0 0.0
    %147 = vmatpush1.msra.mxu0 0.0
    %148 = vmatprep.subr.mxu0 0.0
    %149 = vmatpush1.msra.mxu0 0.0
    %150 = vmatprep.subr.mxu0 0.0
    %151 = vmatpush1.msra.mxu0 0.0
    %152 = vmatprep.subr.mxu0 0.0
    %153 = vmatpush1.msra.mxu0 0.0
    %154 = vmatprep.subr.mxu0 0.0
    %155 = vmatpush1.msra.mxu0 0.0
    %156 = vmatprep.subr.mxu0 0.0
    %157 = vmatpush1.msra.mxu0 0.0
    %158 = vmatprep.subr.mxu0 0.0
    %159 = vmatpush1.msra.mxu0 0.0
    %160 = vmatprep.subr.mxu0 0.0
    %161 = vmatpush1.msra.mxu0 0.0
    %162 = vmatprep.subr.mxu0 0.0
    %163 = vmatpush1.msra.mxu0 0.0
    %164 = vmatprep.subr.mxu0 0.0
    %165 = vmatpush1.msra.mxu0 %v103
    %166 = vmatprep.subr.mxu0 0.0
    %167 = vmatpush1.msra.mxu0 %v102
    %168 = vmatprep.subr.mxu0 0.0
    %169 = vmatpush2.msra.mxu0 0.0
    %170 = vmatprep.subr.mxu0 0.0
    %171 = vmatpush2.msra.mxu0 0.0
    %172 = vmatprep.subr.mxu0 0.0
    %173 = vmatpush2.msra.mxu0 0.0
    %174 = vmatprep.subr.mxu0 0.0
    %175 = vmatpush2.msra.mxu0 0.0
    %176 = vmatprep.subr.mxu0 0.0
    %177 = vmatpush2.msra.mxu0 0.0
    %178 = vmatprep.subr.mxu0 0.0
    %179 = vmatpush2.msra.mxu0 0.0
    %180 = vmatprep.subr.mxu0 0.0
    %181 = vmatpush2.msra.mxu0 0.0
    %182 = vmatprep.subr.mxu0 0.0
    %183 = vmatpush2.msra.mxu0 0.0
    %184 = vmatprep.subr.mxu0 0.0
    %185 = vmatpush2.msra.mxu0 0.0
    %186 = vmatprep.subr.mxu0 0.0
    %187 = vmatpush2.msra.mxu0 0.0
    %188 = vmatprep.subr.mxu0 0.0
    %189 = vmatpush2.msra.mxu0 0.0
    %190 = vmatprep.subr.mxu0 0.0
    %191 = vmatpush2.msra.mxu0 0.0
    %192 = vmatprep.subr.mxu0 0.0
    %193 = vmatpush2.msra.mxu0 0.0
    %194 = vmatprep.subr.mxu0 0.0
    %195 = vmatpush2.msra.mxu0 0.0
    %196 = vmatprep.subr.mxu0 0.0
    %197 = vmatpush2.msra.mxu0 0.0
    %198 = vmatprep.subr.mxu0 0.0
    %199 = vmatpush2.msra.mxu0 0.0
    %200 = vmatprep.mubr.f32.mxu0 0.0
    %201 = vmatmul.mubr.f32.gmra.mxu0 %v113
    %v202 = vpop.f32.mrf.mxu0
    %v203 = vadd.f32 %v109, %v202
    %v204 = vpop.f32.mrf.mxu0
    %205 = vmatprep.mubr.f32.mxu0 0.0
    %206 = vmatmul.mubr.f32.gmra.mxu0 %v116
    %v207 = vpop.f32.mrf.mxu0
    %v208 = vadd.f32 %v109, %v207
    %v209 = vpop.f32.mrf.mxu0
    %210 = vmatprep.mubr.f32.mxu0 0.0
    %211 = vmatmul.mubr.f32.gmra.mxu0 %v119
    %v212 = vpop.f32.mrf.mxu0
    %v213 = vadd.f32 %v109, %v212
    %v214 = vpop.f32.mrf.mxu0
    %215 = vmatprep.mubr.f32.mxu0 0.0
    %216 = vmatmul.mubr.f32.gmra.mxu0 %v122
    %v217 = vpop.f32.mrf.mxu0
    %v218 = vadd.f32 %v109, %v217
    %v219 = vpop.f32.mrf.mxu0
    %220 = vmatprep.mubr.f32.mxu0 0.0
    %221 = vmatmul.mubr.f32.gmra.mxu0 %v125
    %v222 = vpop.f32.mrf.mxu0
    %v223 = vadd.f32 %v109, %v222
    %v224 = vpop.f32.mrf.mxu0
    %225 = vmatprep.mubr.f32.mxu0 0.0
    %226 = vmatmul.mubr.f32.gmra.mxu0 %v128
    %v227 = vpop.f32.mrf.mxu0
    %v228 = vadd.f32 %v109, %v227
    %v229 = vpop.f32.mrf.mxu0
    %230 = vmatprep.mubr.f32.mxu0 0.0
    %231 = vmatmul.mubr.f32.gmra.mxu0 %v131
    %v232 = vpop.f32.mrf.mxu0
    %v233 = vadd.f32 %v109, %v232
    %v234 = vpop.f32.mrf.mxu0
    %235 = vmatprep.mubr.f32.mxu0 0.0
    %236 = vmatmul.mubr.f32.gmra.mxu0 %v134
    %v237 = vpop.f32.mrf.mxu0
    %v238 = vadd.f32 %v109, %v237
    %v239 = vpop.f32.mrf.mxu0
    %240 = vdwg.mxu0
    %v241 = vld [vmem:[%s3] sm:$0xff]
    %v242 = vld [vmem:[%s3 + $0x8] sm:$0xff]
    %v243 = vld [vmem:[%s4] sm:$0x1]
    %v245 = vlaneseq
    %v246 = vshrl.u32 %v245, 7
    %v247 = vsub.s32 0, %v246
    %v248 = vrot.slane %v243, %v247
    %250 = vmatprep.subr.mxu0 0.0
    %251 = vmatpush1.msra.mxu0 0.0
    %252 = vmatprep.subr.mxu0 0.0
    %253 = vmatpush1.msra.mxu0 0.0
    %254 = vmatprep.subr.mxu0 0.0
    %255 = vmatpush1.msra.mxu0 0.0
    %256 = vmatprep.subr.mxu0 0.0
    %257 = vmatpush1.msra.mxu0 0.0
    %258 = vmatprep.subr.mxu0 0.0
    %259 = vmatpush1.msra.mxu0 0.0
    %260 = vmatprep.subr.mxu0 0.0
    %261 = vmatpush1.msra.mxu0 0.0
    %262 = vmatprep.subr.mxu0 0.0
    %263 = vmatpush1.msra.mxu0 0.0
    %264 = vmatprep.subr.mxu0 0.0
    %265 = vmatpush1.msra.mxu0 0.0
    %266 = vmatprep.subr.mxu0 0.0
    %267 = vmatpush1.msra.mxu0 0.0
    %268 = vmatprep.subr.mxu0 0.0
    %269 = vmatpush1.msra.mxu0 0.0
    %270 = vmatprep.subr.mxu0 0.0
    %271 = vmatpush1.msra.mxu0 0.0
    %272 = vmatprep.subr.mxu0 0.0
    %273 = vmatpush1.msra.mxu0 0.0
    %274 = vmatprep.subr.mxu0 0.0
    %275 = vmatpush1.msra.mxu0 0.0
    %276 = vmatprep.subr.mxu0 0.0
    %277 = vmatpush1.msra.mxu0 0.0
    %278 = vmatprep.subr.mxu0 0.0
    %279 = vmatpush1.msra.mxu0 %v242
    %280 = vmatprep.subr.mxu0 0.0
    %281 = vmatpush1.msra.mxu0 %v241
    %282 = vmatprep.subr.mxu0 0.0
    %283 = vmatpush2.msra.mxu0 0.0
    %284 = vmatprep.subr.mxu0 0.0
    %285 = vmatpush2.msra.mxu0 0.0
    %286 = vmatprep.subr.mxu0 0.0
    %287 = vmatpush2.msra.mxu0 0.0
    %288 = vmatprep.subr.mxu0 0.0
    %289 = vmatpush2.msra.mxu0 0.0
    %290 = vmatprep.subr.mxu0 0.0
    %291 = vmatpush2.msra.mxu0 0.0
    %292 = vmatprep.subr.mxu0 0.0
    %293 = vmatpush2.msra.mxu0 0.0
    %294 = vmatprep.subr.mxu0 0.0
    %295 = vmatpush2.msra.mxu0 0.0
    %296 = vmatprep.subr.mxu0 0.0
    %297 = vmatpush2.msra.mxu0 0.0
    %298 = vmatprep.subr.mxu0 0.0
    %299 = vmatpush2.msra.mxu0 0.0
    %300 = vmatprep.subr.mxu0 0.0
    %301 = vmatpush2.msra.mxu0 0.0
    %302 = vmatprep.subr.mxu0 0.0
    %303 = vmatpush2.msra.mxu0 0.0
    %304 = vmatprep.subr.mxu0 0.0
    %305 = vmatpush2.msra.mxu0 0.0
    %306 = vmatprep.subr.mxu0 0.0
    %307 = vmatpush2.msra.mxu0 0.0
    %308 = vmatprep.subr.mxu0 0.0
    %309 = vmatpush2.msra.mxu0 0.0
    %310 = vmatprep.subr.mxu0 0.0
    %311 = vmatpush2.msra.mxu0 0.0
    %312 = vmatprep.subr.mxu0 0.0
    %313 = vmatpush2.msra.mxu0 0.0
    %314 = vmatprep.mubr.f32.mxu0 0.0
    %315 = vmatmul.mubr.f32.gmra.mxu0 %v113
    %v316 = vpop.f32.mrf.mxu0
    %v317 = vadd.f32 %v248, %v316
    %v318 = vpop.f32.mrf.mxu0
    %319 = vmatprep.mubr.f32.mxu0 0.0
    %320 = vmatmul.mubr.f32.gmra.mxu0 %v116
    %v321 = vpop.f32.mrf.mxu0
    %v322 = vadd.f32 %v248, %v321
    %v323 = vpop.f32.mrf.mxu0
    %324 = vmatprep.mubr.f32.mxu0 0.0
    %325 = vmatmul.mubr.f32.gmra.mxu0 %v119
    %v326 = vpop.f32.mrf.mxu0
    %v327 = vadd.f32 %v248, %v326
    %v328 = vpop.f32.mrf.mxu0
    %329 = vmatprep.mubr.f32.mxu0 0.0
    %330 = vmatmul.mubr.f32.gmra.mxu0 %v122
    %v331 = vpop.f32.mrf.mxu0
    %v332 = vadd.f32 %v248, %v331
    %v333 = vpop.f32.mrf.mxu0
    %334 = vmatprep.mubr.f32.mxu0 0.0
    %335 = vmatmul.mubr.f32.gmra.mxu0 %v125
    %v336 = vpop.f32.mrf.mxu0
    %v337 = vadd.f32 %v248, %v336
    %v338 = vpop.f32.mrf.mxu0
    %339 = vmatprep.mubr.f32.mxu0 0.0
    %340 = vmatmul.mubr.f32.gmra.mxu0 %v128
    %v341 = vpop.f32.mrf.mxu0
    %v342 = vadd.f32 %v248, %v341
    %v343 = vpop.f32.mrf.mxu0
    %344 = vmatprep.mubr.f32.mxu0 0.0
    %345 = vmatmul.mubr.f32.gmra.mxu0 %v131
    %v346 = vpop.f32.mrf.mxu0
    %v347 = vadd.f32 %v248, %v346
    %v348 = vpop.f32.mrf.mxu0
    %349 = vmatprep.mubr.f32.mxu0 0.0
    %350 = vmatmul.mubr.f32.gmra.mxu0 %v134
    %v351 = vpop.f32.mrf.mxu0
    %v352 = vadd.f32 %v248, %v351
    %v353 = vpop.f32.mrf.mxu0
    %354 = vdwg.mxu0
    %v355 = vld [vmem:[%s7] sm:$0x1]
    %v357 = vlaneseq
    %v358 = vshrl.u32 %v357, 7
    %v359 = vsub.s32 0, %v358
    %v360 = vrot.slane %v355, %v359
    %v362 = vld [vmem:[%s13] sm:$0x1]
    %v364 = vlaneseq
    %v365 = vshrl.u32 %v364, 7
    %v366 = vsub.s32 0, %v365
    %v367 = vrot.slane %v362, %v366
    %v369 = vld [vmem:[%s9] sm:$0x1]
    %v370 = vld [vmem:[%s11] sm:$0x1]
    %v371 = vxor.u32 %v203, 2147483648
    %v372 = vmul.f32 %v371, 1.442695
    %v373 = vpow.pop %v372
    %v374 = vadd.f32 %v373, 1.0
    %v375 = vrcp.pop %v374
    %v376 = vmul.f32 1.0, %v375
    %v377 = vmul.f32 %v376, %v360
    %v378 = vadd.f32 %v317, %v377
    %v379 = vtanh.pop %v378
    %v380 = vsub.f32 1.0, %v376
    %382 = vrot.lane.b32.xlu0 %v379, 64
    %v383 = vpop.permute.xlu0 %382
    %v385 = vmul.f32 %v380, %v383
    %v386 = vld [vmem:[#allocation4] sm:$0xff]
    %v387 = vld [vmem:[#allocation4 + $0x8] sm:$0xff]
    %v388 = vld [vmem:[#allocation4 + $0x10] sm:$0xff]
    %v389 = vld [vmem:[#allocation4 + $0x18] sm:$0xff]
    %v390 = vld [vmem:[#allocation4 + $0x20] sm:$0xff]
    %v391 = vld [vmem:[#allocation4 + $0x28] sm:$0xff]
    %v392 = vld [vmem:[#allocation4 + $0x30] sm:$0xff]
    %v393 = vld [vmem:[#allocation4 + $0x38] sm:$0xff]
    %v395 = vlaneseq
    %v396 = vshrl.u32 %v395, 7
    %v397 = vsub.s32 0, %v396
    %v398 = vrot.slane %v370, %v397
    %401 = vrot.lane.b32.xlu0 %v385, 64
    %v402 = vpop.permute.xlu0 %401
    %vm403 = vcmask 523264
    %v404 = vsel %vm403, %v402, 0
    %406 = vmatprep.subr.mxu0 0.0
    %407 = vmatpush1.msra.mxu0 0.0
    %408 = vmatprep.subr.mxu0 0.0
    %409 = vmatpush1.msra.mxu0 0.0
    %410 = vmatprep.subr.mxu0 0.0
    %411 = vmatpush1.msra.mxu0 0.0
    %412 = vmatprep.subr.mxu0 0.0
    %413 = vmatpush1.msra.mxu0 0.0
    %414 = vmatprep.subr.mxu0 0.0
    %415 = vmatpush1.msra.mxu0 0.0
    %416 = vmatprep.subr.mxu0 0.0
    %417 = vmatpush1.msra.mxu0 0.0
    %418 = vmatprep.subr.mxu0 0.0
    %419 = vmatpush1.msra.mxu0 0.0
    %420 = vmatprep.subr.mxu0 0.0
    %421 = vmatpush1.msra.mxu0 0.0
    %422 = vmatprep.subr.mxu0 0.0
    %423 = vmatpush1.msra.mxu0 %v393
    %424 = vmatprep.subr.mxu0 0.0
    %425 = vmatpush1.msra.mxu0 %v392
    %426 = vmatprep.subr.mxu0 0.0
    %427 = vmatpush1.msra.mxu0 %v391
    %428 = vmatprep.subr.mxu0 0.0
    %429 = vmatpush1.msra.mxu0 %v390
    %430 = vmatprep.subr.mxu0 0.0
    %431 = vmatpush1.msra.mxu0 %v389
    %432 = vmatprep.subr.mxu0 0.0
    %433 = vmatpush1.msra.mxu0 %v388
    %434 = vmatprep.subr.mxu0 0.0
    %435 = vmatpush1.msra.mxu0 %v387
    %436 = vmatprep.subr.mxu0 0.0
    %437 = vmatpush1.msra.mxu0 %v386
    %438 = vmatprep.subr.mxu0 0.0
    %439 = vmatpush2.msra.mxu0 0.0
    %440 = vmatprep.subr.mxu0 0.0
    %441 = vmatpush2.msra.mxu0 0.0
    %442 = vmatprep.subr.mxu0 0.0
    %443 = vmatpush2.msra.mxu0 0.0
    %444 = vmatprep.subr.mxu0 0.0
    %445 = vmatpush2.msra.mxu0 0.0
    %446 = vmatprep.subr.mxu0 0.0
    %447 = vmatpush2.msra.mxu0 0.0
    %448 = vmatprep.subr.mxu0 0.0
    %449 = vmatpush2.msra.mxu0 0.0
    %450 = vmatprep.subr.mxu0 0.0
    %451 = vmatpush2.msra.mxu0 0.0
    %452 = vmatprep.subr.mxu0 0.0
    %453 = vmatpush2.msra.mxu0 0.0
    %454 = vmatprep.subr.mxu0 0.0
    %455 = vmatpush2.msra.mxu0 0.0
    %456 = vmatprep.subr.mxu0 0.0
    %457 = vmatpush2.msra.mxu0 0.0
    %458 = vmatprep.subr.mxu0 0.0
    %459 = vmatpush2.msra.mxu0 0.0
    %460 = vmatprep.subr.mxu0 0.0
    %461 = vmatpush2.msra.mxu0 0.0
    %462 = vmatprep.subr.mxu0 0.0
    %463 = vmatpush2.msra.mxu0 0.0
    %464 = vmatprep.subr.mxu0 0.0
    %465 = vmatpush2.msra.mxu0 0.0
    %466 = vmatprep.subr.mxu0 0.0
    %467 = vmatpush2.msra.mxu0 0.0
    %468 = vmatprep.subr.mxu0 0.0
    %469 = vmatpush2.msra.mxu0 0.0
    %470 = vmatprep.mubr.f32.mxu0 0.0
    %471 = vmatmul.mubr.f32.gmra.mxu0 %v404
    %v472 = vpop.f32.mrf.mxu0
    %v473 = vadd.f32 %v398, %v472
    %v474 = vpop.f32.mrf.mxu0
    %475 = vdwg.mxu0
    %v476 = vld [vmem:[%s8] sm:$0xff]
    %v477 = vld [vmem:[%s8 + $0x8] sm:$0xff]
    %v478 = vld [vmem:[%s8 + $0x10] sm:$0xff]
    %v479 = vld [vmem:[%s8 + $0x18] sm:$0xff]
    %v480 = vld [vmem:[%s8 + $0x20] sm:$0xff]
    %v481 = vld [vmem:[%s8 + $0x28] sm:$0xff]
    %v482 = vld [vmem:[%s8 + $0x30] sm:$0xff]
    %v483 = vld [vmem:[%s8 + $0x38] sm:$0xff]
    %v485 = vlaneseq
    %v486 = vshrl.u32 %v485, 7
    %v487 = vsub.s32 0, %v486
    %v488 = vrot.slane %v369, %v487
    %490 = vmatprep.subr.mxu0 0.0
    %491 = vmatpush1.msra.mxu0 0.0
    %492 = vmatprep.subr.mxu0 0.0
    %493 = vmatpush1.msra.mxu0 0.0
    %494 = vmatprep.subr.mxu0 0.0
    %495 = vmatpush1.msra.mxu0 0.0
    %496 = vmatprep.subr.mxu0 0.0
    %497 = vmatpush1.msra.mxu0 0.0
    %498 = vmatprep.subr.mxu0 0.0
    %499 = vmatpush1.msra.mxu0 0.0
    %500 = vmatprep.subr.mxu0 0.0
    %501 = vmatpush1.msra.mxu0 0.0
    %502 = vmatprep.subr.mxu0 0.0
    %503 = vmatpush1.msra.mxu0 0.0
    %504 = vmatprep.subr.mxu0 0.0
    %505 = vmatpush1.msra.mxu0 0.0
    %506 = vmatprep.subr.mxu0 0.0
    %507 = vmatpush1.msra.mxu0 %v483
    %508 = vmatprep.subr.mxu0 0.0
    %509 = vmatpush1.msra.mxu0 %v482
    %510 = vmatprep.subr.mxu0 0.0
    %511 = vmatpush1.msra.mxu0 %v481
    %512 = vmatprep.subr.mxu0 0.0
    %513 = vmatpush1.msra.mxu0 %v480
    %514 = vmatprep.subr.mxu0 0.0
    %515 = vmatpush1.msra.mxu0 %v479
    %516 = vmatprep.subr.mxu0 0.0
    %517 = vmatpush1.msra.mxu0 %v478
    %518 = vmatprep.subr.mxu0 0.0
    %519 = vmatpush1.msra.mxu0 %v477
    %520 = vmatprep.subr.mxu0 0.0
    %521 = vmatpush1.msra.mxu0 %v476
    %522 = vmatprep.subr.mxu0 0.0
    %523 = vmatpush2.msra.mxu0 0.0
    %524 = vmatprep.subr.mxu0 0.0
    %525 = vmatpush2.msra.mxu0 0.0
    %526 = vmatprep.subr.mxu0 0.0
    %527 = vmatpush2.msra.mxu0 0.0
    %528 = vmatprep.subr.mxu0 0.0
    %529 = vmatpush2.msra.mxu0 0.0
    %530 = vmatprep.subr.mxu0 0.0
    %531 = vmatpush2.msra.mxu0 0.0
    %532 = vmatprep.subr.mxu0 0.0
    %533 = vmatpush2.msra.mxu0 0.0
    %534 = vmatprep.subr.mxu0 0.0
    %535 = vmatpush2.msra.mxu0 0.0
    %536 = vmatprep.subr.mxu0 0.0
    %537 = vmatpush2.msra.mxu0 0.0
    %538 = vmatprep.subr.mxu0 0.0
    %539 = vmatpush2.msra.mxu0 0.0
    %540 = vmatprep.subr.mxu0 0.0
    %541 = vmatpush2.msra.mxu0 0.0
    %542 = vmatprep.subr.mxu0 0.0
    %543 = vmatpush2.msra.mxu0 0.0
    %544 = vmatprep.subr.mxu0 0.0
    %545 = vmatpush2.msra.mxu0 0.0
    %546 = vmatprep.subr.mxu0 0.0
    %547 = vmatpush2.msra.mxu0 0.0
    %548 = vmatprep.subr.mxu0 0.0
    %549 = vmatpush2.msra.mxu0 0.0
    %550 = vmatprep.subr.mxu0 0.0
    %551 = vmatpush2.msra.mxu0 0.0
    %552 = vmatprep.subr.mxu0 0.0
    %553 = vmatpush2.msra.mxu0 0.0
    %554 = vmatprep.mubr.f32.mxu0 0.0
    %555 = vmatmul.mubr.f32.gmra.mxu0 %v404
    %v556 = vpop.f32.mrf.mxu0
    %v557 = vadd.f32 %v488, %v556
    %v558 = vpop.f32.mrf.mxu0
    %559 = vdwg.mxu0
    %v560 = vxor.u32 %v557, 2147483648
    %v561 = vmul.f32 %v560, 1.442695
    %v562 = vpow.pop %v561
    %v563 = vadd.f32 %v562, 1.0
    %v564 = vrcp.pop %v563
    %v565 = vmul.f32 1.0, %v564
    %v566 = vmul.f32 %v565, %v367
    %v567 = vadd.f32 %v473, %v566
    %v568 = vtanh.pop %v567
    %v569 = vsub.f32 1.0, %v565
    %571 = vrot.lane.b32.xlu0 %v568, 64
    %v572 = vpop.permute.xlu0 %571
    %v574 = vmul.f32 %v569, %v572
    %v575 = vld [vmem:[%s5] sm:$0xff]
    %v576 = vld [vmem:[%s5 + $0x8] sm:$0xff]
    %v577 = vld [vmem:[%s5 + $0x10] sm:$0xff]
    %v578 = vld [vmem:[%s5 + $0x18] sm:$0xff]
    %v579 = vld [vmem:[%s5 + $0x20] sm:$0xff]
    %v580 = vld [vmem:[%s5 + $0x28] sm:$0xff]
    %v581 = vld [vmem:[%s5 + $0x30] sm:$0xff]
    %v582 = vld [vmem:[%s5 + $0x38] sm:$0xff]
    %583 = vmatprep.subr.mxu0 0.0
    %584 = vmatpush1.msra.mxu0 0.0
    %585 = vmatprep.subr.mxu0 0.0
    %586 = vmatpush1.msra.mxu0 0.0
    %587 = vmatprep.subr.mxu0 0.0
    %588 = vmatpush1.msra.mxu0 0.0
    %589 = vmatprep.subr.mxu0 0.0
    %590 = vmatpush1.msra.mxu0 0.0
    %591 = vmatprep.subr.mxu0 0.0
    %592 = vmatpush1.msra.mxu0 0.0
    %593 = vmatprep.subr.mxu0 0.0
    %594 = vmatpush1.msra.mxu0 0.0
    %595 = vmatprep.subr.mxu0 0.0
    %596 = vmatpush1.msra.mxu0 0.0
    %597 = vmatprep.subr.mxu0 0.0
    %598 = vmatpush1.msra.mxu0 0.0
    %599 = vmatprep.subr.mxu0 0.0
    %600 = vmatpush1.msra.mxu0 %v582
    %601 = vmatprep.subr.mxu0 0.0
    %602 = vmatpush1.msra.mxu0 %v581
    %603 = vmatprep.subr.mxu0 0.0
    %604 = vmatpush1.msra.mxu0 %v580
    %605 = vmatprep.subr.mxu0 0.0
    %606 = vmatpush1.msra.mxu0 %v579
    %607 = vmatprep.subr.mxu0 0.0
    %608 = vmatpush1.msra.mxu0 %v578
    %609 = vmatprep.subr.mxu0 0.0
    %610 = vmatpush1.msra.mxu0 %v577
    %611 = vmatprep.subr.mxu0 0.0
    %612 = vmatpush1.msra.mxu0 %v576
    %613 = vmatprep.subr.mxu0 0.0
    %614 = vmatpush1.msra.mxu0 %v575
    %615 = vmatprep.subr.mxu0 0.0
    %616 = vmatpush2.msra.mxu0 0.0
    %617 = vmatprep.subr.mxu0 0.0
    %618 = vmatpush2.msra.mxu0 0.0
    %619 = vmatprep.subr.mxu0 0.0
    %620 = vmatpush2.msra.mxu0 0.0
    %621 = vmatprep.subr.mxu0 0.0
    %622 = vmatpush2.msra.mxu0 0.0
    %623 = vmatprep.subr.mxu0 0.0
    %624 = vmatpush2.msra.mxu0 0.0
    %625 = vmatprep.subr.mxu0 0.0
    %626 = vmatpush2.msra.mxu0 0.0
    %627 = vmatprep.subr.mxu0 0.0
    %628 = vmatpush2.msra.mxu0 0.0
    %629 = vmatprep.subr.mxu0 0.0
    %630 = vmatpush2.msra.mxu0 0.0
    %631 = vmatprep.subr.mxu0 0.0
    %632 = vmatpush2.msra.mxu0 0.0
    %633 = vmatprep.subr.mxu0 0.0
    %634 = vmatpush2.msra.mxu0 0.0
    %635 = vmatprep.subr.mxu0 0.0
    %636 = vmatpush2.msra.mxu0 0.0
    %637 = vmatprep.subr.mxu0 0.0
    %638 = vmatpush2.msra.mxu0 0.0
    %639 = vmatprep.subr.mxu0 0.0
    %640 = vmatpush2.msra.mxu0 0.0
    %641 = vmatprep.subr.mxu0 0.0
    %642 = vmatpush2.msra.mxu0 0.0
    %643 = vmatprep.subr.mxu0 0.0
    %644 = vmatpush2.msra.mxu0 0.0
    %645 = vmatprep.subr.mxu0 0.0
    %646 = vmatpush2.msra.mxu0 0.0
    %647 = vmatprep.mubr.f32.mxu0 0.0
    %648 = vmatmul.mubr.f32.gmra.mxu0 %v404
    %v649 = vpop.f32.mrf.mxu0
    %v650 = vadd.f32 0.0, %v649
    %v651 = vpop.f32.mrf.mxu0
    %652 = vdwg.mxu0
    %v653 = vld [vmem:[#allocation2] sm:$0xff]
    %v654 = vld [vmem:[#allocation2 + $0x8] sm:$0xff]
    %v655 = vld [vmem:[#allocation2 + $0x10] sm:$0xff]
    %v656 = vld [vmem:[#allocation2 + $0x18] sm:$0xff]
    %v657 = vld [vmem:[#allocation2 + $0x20] sm:$0xff]
    %v658 = vld [vmem:[#allocation2 + $0x28] sm:$0xff]
    %v659 = vld [vmem:[#allocation2 + $0x30] sm:$0xff]
    %v660 = vld [vmem:[#allocation2 + $0x38] sm:$0xff]
    %661 = vmatprep.subr.mxu0 0.0
    %662 = vmatpush1.msra.mxu0 0.0
    %663 = vmatprep.subr.mxu0 0.0
    %664 = vmatpush1.msra.mxu0 0.0
    %665 = vmatprep.subr.mxu0 0.0
    %666 = vmatpush1.msra.mxu0 0.0
    %667 = vmatprep.subr.mxu0 0.0
    %668 = vmatpush1.msra.mxu0 0.0
    %669 = vmatprep.subr.mxu0 0.0
    %670 = vmatpush1.msra.mxu0 0.0
    %671 = vmatprep.subr.mxu0 0.0
    %672 = vmatpush1.msra.mxu0 0.0
    %673 = vmatprep.subr.mxu0 0.0
    %674 = vmatpush1.msra.mxu0 0.0
    %675 = vmatprep.subr.mxu0 0.0
    %676 = vmatpush1.msra.mxu0 0.0
    %677 = vmatprep.subr.mxu0 0.0
    %678 = vmatpush1.msra.mxu0 %v660
    %679 = vmatprep.subr.mxu0 0.0
    %680 = vmatpush1.msra.mxu0 %v659
    %681 = vmatprep.subr.mxu0 0.0
    %682 = vmatpush1.msra.mxu0 %v658
    %683 = vmatprep.subr.mxu0 0.0
    %684 = vmatpush1.msra.mxu0 %v657
    %685 = vmatprep.subr.mxu0 0.0
    %686 = vmatpush1.msra.mxu0 %v656
    %687 = vmatprep.subr.mxu0 0.0
    %688 = vmatpush1.msra.mxu0 %v655
    %689 = vmatprep.subr.mxu0 0.0
    %690 = vmatpush1.msra.mxu0 %v654
    %691 = vmatprep.subr.mxu0 0.0
    %692 = vmatpush1.msra.mxu0 %v653
    %693 = vmatprep.subr.mxu0 0.0
    %694 = vmatpush2.msra.mxu0 0.0
    %695 = vmatprep.subr.mxu0 0.0
    %696 = vmatpush2.msra.mxu0 0.0
    %697 = vmatprep.subr.mxu0 0.0
    %698 = vmatpush2.msra.mxu0 0.0
    %699 = vmatprep.subr.mxu0 0.0
    %700 = vmatpush2.msra.mxu0 0.0
    %701 = vmatprep.subr.mxu0 0.0
    %702 = vmatpush2.msra.mxu0 0.0
    %703 = vmatprep.subr.mxu0 0.0
    %704 = vmatpush2.msra.mxu0 0.0
    %705 = vmatprep.subr.mxu0 0.0
    %706 = vmatpush2.msra.mxu0 0.0
    %707 = vmatprep.subr.mxu0 0.0
    %708 = vmatpush2.msra.mxu0 0.0
    %709 = vmatprep.subr.mxu0 0.0
    %710 = vmatpush2.msra.mxu0 0.0
    %711 = vmatprep.subr.mxu0 0.0
    %712 = vmatpush2.msra.mxu0 0.0
    %713 = vmatprep.subr.mxu0 0.0
    %714 = vmatpush2.msra.mxu0 0.0
    %715 = vmatprep.subr.mxu0 0.0
    %716 = vmatpush2.msra.mxu0 0.0
    %717 = vmatprep.subr.mxu0 0.0
    %718 = vmatpush2.msra.mxu0 0.0
    %719 = vmatprep.subr.mxu0 0.0
    %720 = vmatpush2.msra.mxu0 0.0
    %721 = vmatprep.subr.mxu0 0.0
    %722 = vmatpush2.msra.mxu0 0.0
    %723 = vmatprep.subr.mxu0 0.0
    %724 = vmatpush2.msra.mxu0 0.0
    %725 = vmatprep.mubr.f32.mxu0 0.0
    %726 = vmatmul.mubr.f32.gmra.mxu0 %v404
    %v727 = vpop.f32.mrf.mxu0
    %v728 = vadd.f32 %v360, %v727
    %v729 = vpop.f32.mrf.mxu0
    %730 = vdwg.mxu0
    %v731 = vadd.f32 %v208, %v650
    %v732 = vxor.u32 %v731, 2147483648
    %v733 = vmul.f32 %v732, 1.442695
    %v734 = vpow.pop %v733
    %v735 = vadd.f32 %v734, 1.0
    %v736 = vrcp.pop %v735
    %v737 = vmul.f32 1.0, %v736
    %v738 = vmul.f32 %v737, %v728
    %v739 = vadd.f32 %v322, %v738
    %v740 = vtanh.pop %v739
    %v741 = vsub.f32 1.0, %v737
    %743 = vrot.lane.b32.xlu0 %v740, 64
    %v744 = vpop.permute.xlu0 %743
    %v746 = vmul.f32 %v741, %v744
    %v747 = vmul.f32 %v737, %v385
    %v748 = vadd.f32 %v746, %v747
    %750 = vrot.lane.b32.xlu0 %v748, 64
    %v751 = vpop.permute.xlu0 %750
    %v752 = vsel %vm403, %v751, 0
    %754 = vmatprep.subr.mxu0 0.0
    %755 = vmatpush1.msra.mxu0 0.0
    %756 = vmatprep.subr.mxu0 0.0
    %757 = vmatpush1.msra.mxu0 0.0
    %758 = vmatprep.subr.mxu0 0.0
    %759 = vmatpush1.msra.mxu0 0.0
    %760 = vmatprep.subr.mxu0 0.0
    %761 = vmatpush1.msra.mxu0 0.0
    %762 = vmatprep.subr.mxu0 0.0
    %763 = vmatpush1.msra.mxu0 0.0
    %764 = vmatprep.subr.mxu0 0.0
    %765 = vmatpush1.msra.mxu0 0.0
    %766 = vmatprep.subr.mxu0 0.0
    %767 = vmatpush1.msra.mxu0 0.0
    %768 = vmatprep.subr.mxu0 0.0
    %769 = vmatpush1.msra.mxu0 0.0
    %770 = vmatprep.subr.mxu0 0.0
    %771 = vmatpush1.msra.mxu0 %v393
    %772 = vmatprep.subr.mxu0 0.0
    %773 = vmatpush1.msra.mxu0 %v392
    %774 = vmatprep.subr.mxu0 0.0
    %775 = vmatpush1.msra.mxu0 %v391
    %776 = vmatprep.subr.mxu0 0.0
    %777 = vmatpush1.msra.mxu0 %v390
    %778 = vmatprep.subr.mxu0 0.0
    %779 = vmatpush1.msra.mxu0 %v389
    %780 = vmatprep.subr.mxu0 0.0
    %781 = vmatpush1.msra.mxu0 %v388
    %782 = vmatprep.subr.mxu0 0.0
    %783 = vmatpush1.msra.mxu0 %v387
    %784 = vmatprep.subr.mxu0 0.0
    %785 = vmatpush1.msra.mxu0 %v386
    %786 = vmatprep.subr.mxu0 0.0
    %787 = vmatpush2.msra.mxu0 0.0
    %788 = vmatprep.subr.mxu0 0.0
    %789 = vmatpush2.msra.mxu0 0.0
    %790 = vmatprep.subr.mxu0 0.0
    %791 = vmatpush2.msra.mxu0 0.0
    %792 = vmatprep.subr.mxu0 0.0
    %793 = vmatpush2.msra.mxu0 0.0
    %794 = vmatprep.subr.mxu0 0.0
    %795 = vmatpush2.msra.mxu0 0.0
    %796 = vmatprep.subr.mxu0 0.0
    %797 = vmatpush2.msra.mxu0 0.0
    %798 = vmatprep.subr.mxu0 0.0
    %799 = vmatpush2.msra.mxu0 0.0
    %800 = vmatprep.subr.mxu0 0.0
    %801 = vmatpush2.msra.mxu0 0.0
    %802 = vmatprep.subr.mxu0 0.0
    %803 = vmatpush2.msra.mxu0 0.0
    %804 = vmatprep.subr.mxu0 0.0
    %805 = vmatpush2.msra.mxu0 0.0
    %806 = vmatprep.subr.mxu0 0.0
    %807 = vmatpush2.msra.mxu0 0.0
    %808 = vmatprep.subr.mxu0 0.0
    %809 = vmatpush2.msra.mxu0 0.0
    %810 = vmatprep.subr.mxu0 0.0
    %811 = vmatpush2.msra.mxu0 0.0
    %812 = vmatprep.subr.mxu0 0.0
    %813 = vmatpush2.msra.mxu0 0.0
    %814 = vmatprep.subr.mxu0 0.0
    %815 = vmatpush2.msra.mxu0 0.0
    %816 = vmatprep.subr.mxu0 0.0
    %817 = vmatpush2.msra.mxu0 0.0
    %818 = vmatprep.mubr.f32.mxu0 0.0
    %819 = vmatmul.mubr.f32.gmra.mxu0 %v752
    %v820 = vpop.f32.mrf.mxu0
    %v821 = vadd.f32 %v398, %v820
    %v822 = vpop.f32.mrf.mxu0
    %823 = vdwg.mxu0
    %v825 = vsel %vm403, %v751, %v574
    %v826 = vld [vmem:[%s8] sm:$0xff]
    %v827 = vld [vmem:[%s8 + $0x8] sm:$0xff]
    %v828 = vld [vmem:[%s8 + $0x10] sm:$0xff]
    %v829 = vld [vmem:[%s8 + $0x18] sm:$0xff]
    %v830 = vld [vmem:[%s8 + $0x20] sm:$0xff]
    %v831 = vld [vmem:[%s8 + $0x28] sm:$0xff]
    %v832 = vld [vmem:[%s8 + $0x30] sm:$0xff]
    %v833 = vld [vmem:[%s8 + $0x38] sm:$0xff]
    %v834 = vld [vmem:[%s8 + $0x40] sm:$0xff]
    %v835 = vld [vmem:[%s8 + $0x48] sm:$0xff]
    %v836 = vld [vmem:[%s8 + $0x50] sm:$0xff]
    %v837 = vld [vmem:[%s8 + $0x58] sm:$0xff]
    %v838 = vld [vmem:[%s8 + $0x60] sm:$0xff]
    %v839 = vld [vmem:[%s8 + $0x68] sm:$0xff]
    %v840 = vld [vmem:[%s8 + $0x70] sm:$0xff]
    %v841 = vld [vmem:[%s8 + $0x78] sm:$0xff]
    %842 = vmatprep.subr.mxu0 0.0
    %843 = vmatpush1.msra.mxu0 %v841
    %844 = vmatprep.subr.mxu0 0.0
    %845 = vmatpush1.msra.mxu0 %v840
    %846 = vmatprep.subr.mxu0 0.0
    %847 = vmatpush1.msra.mxu0 %v839
    %848 = vmatprep.subr.mxu0 0.0
    %849 = vmatpush1.msra.mxu0 %v838
    %850 = vmatprep.subr.mxu0 0.0
    %851 = vmatpush1.msra.mxu0 %v837
    %852 = vmatprep.subr.mxu0 0.0
    %853 = vmatpush1.msra.mxu0 %v836
    %854 = vmatprep.subr.mxu0 0.0
    %855 = vmatpush1.msra.mxu0 %v835
    %856 = vmatprep.subr.mxu0 0.0
    %857 = vmatpush1.msra.mxu0 %v834
    %858 = vmatprep.subr.mxu0 0.0
    %859 = vmatpush1.msra.mxu0 %v833
    %860 = vmatprep.subr.mxu0 0.0
    %861 = vmatpush1.msra.mxu0 %v832
    %862 = vmatprep.subr.mxu0 0.0
    %863 = vmatpush1.msra.mxu0 %v831
    %864 = vmatprep.subr.mxu0 0.0
    %865 = vmatpush1.msra.mxu0 %v830
    %866 = vmatprep.subr.mxu0 0.0
    %867 = vmatpush1.msra.mxu0 %v829
    %868 = vmatprep.subr.mxu0 0.0
    %869 = vmatpush1.msra.mxu0 %v828
    %870 = vmatprep.subr.mxu0 0.0
    %871 = vmatpush1.msra.mxu0 %v827
    %872 = vmatprep.subr.mxu0 0.0
    %873 = vmatpush1.msra.mxu0 %v826
    %874 = vmatprep.subr.mxu0 0.0
    %875 = vmatpush2.msra.mxu0 0.0
    %876 = vmatprep.subr.mxu0 0.0
    %877 = vmatpush2.msra.mxu0 0.0
    %878 = vmatprep.subr.mxu0 0.0
    %879 = vmatpush2.msra.mxu0 0.0
    %880 = vmatprep.subr.mxu0 0.0
    %881 = vmatpush2.msra.mxu0 0.0
    %882 = vmatprep.subr.mxu0 0.0
    %883 = vmatpush2.msra.mxu0 0.0
    %884 = vmatprep.subr.mxu0 0.0
    %885 = vmatpush2.msra.mxu0 0.0
    %886 = vmatprep.subr.mxu0 0.0
    %887 = vmatpush2.msra.mxu0 0.0
    %888 = vmatprep.subr.mxu0 0.0
    %889 = vmatpush2.msra.mxu0 0.0
    %890 = vmatprep.subr.mxu0 0.0
    %891 = vmatpush2.msra.mxu0 0.0
    %892 = vmatprep.subr.mxu0 0.0
    %893 = vmatpush2.msra.mxu0 0.0
    %894 = vmatprep.subr.mxu0 0.0
    %895 = vmatpush2.msra.mxu0 0.0
    %896 = vmatprep.subr.mxu0 0.0
    %897 = vmatpush2.msra.mxu0 0.0
    %898 = vmatprep.subr.mxu0 0.0
    %899 = vmatpush2.msra.mxu0 0.0
    %900 = vmatprep.subr.mxu0 0.0
    %901 = vmatpush2.msra.mxu0 0.0
    %902 = vmatprep.subr.mxu0 0.0
    %903 = vmatpush2.msra.mxu0 0.0
    %904 = vmatprep.subr.mxu0 0.0
    %905 = vmatpush2.msra.mxu0 0.0
    %906 = vmatprep.mubr.f32.mxu0 0.0
    %907 = vmatmul.mubr.f32.gmra.mxu0 %v825
    %v908 = vpop.f32.mrf.mxu0
    %v909 = vadd.f32 %v488, %v908
    %v910 = vpop.f32.mrf.mxu0
    %911 = vdwg.mxu0
    %v912 = vxor.u32 %v909, 2147483648
    %v913 = vmul.f32 %v912, 1.442695
    %v914 = vpow.pop %v913
    %v915 = vadd.f32 %v914, 1.0
    %v916 = vrcp.pop %v915
    %v917 = vmul.f32 1.0, %v916
    %v918 = vld [vmem:[#allocation6] sm:$0xff]
    %v919 = vld [vmem:[#allocation6 + $0x8] sm:$0xff]
    %v920 = vld [vmem:[#allocation6 + $0x10] sm:$0xff]
    %v921 = vld [vmem:[#allocation6 + $0x18] sm:$0xff]
    %v922 = vld [vmem:[#allocation6 + $0x20] sm:$0xff]
    %v923 = vld [vmem:[#allocation6 + $0x28] sm:$0xff]
    %v924 = vld [vmem:[#allocation6 + $0x30] sm:$0xff]
    %v925 = vld [vmem:[#allocation6 + $0x38] sm:$0xff]
    %927 = vrot.lane.b32.xlu0 %v574, 64
    %v928 = vpop.permute.xlu0 %927
    %v929 = vsel %vm403, %v928, 0
    %931 = vmatprep.subr.mxu0 0.0
    %932 = vmatpush1.msra.mxu0 0.0
    %933 = vmatprep.subr.mxu0 0.0
    %934 = vmatpush1.msra.mxu0 0.0
    %935 = vmatprep.subr.mxu0 0.0
    %936 = vmatpush1.msra.mxu0 0.0
    %937 = vmatprep.subr.mxu0 0.0
    %938 = vmatpush1.msra.mxu0 0.0
    %939 = vmatprep.subr.mxu0 0.0
    %940 = vmatpush1.msra.mxu0 0.0
    %941 = vmatprep.subr.mxu0 0.0
    %942 = vmatpush1.msra.mxu0 0.0
    %943 = vmatprep.subr.mxu0 0.0
    %944 = vmatpush1.msra.mxu0 0.0
    %945 = vmatprep.subr.mxu0 0.0
    %946 = vmatpush1.msra.mxu0 0.0
    %947 = vmatprep.subr.mxu0 0.0
    %948 = vmatpush1.msra.mxu0 %v925
    %949 = vmatprep.subr.mxu0 0.0
    %950 = vmatpush1.msra.mxu0 %v924
    %951 = vmatprep.subr.mxu0 0.0
    %952 = vmatpush1.msra.mxu0 %v923
    %953 = vmatprep.subr.mxu0 0.0
    %954 = vmatpush1.msra.mxu0 %v922
    %955 = vmatprep.subr.mxu0 0.0
    %956 = vmatpush1.msra.mxu0 %v921
    %957 = vmatprep.subr.mxu0 0.0
    %958 = vmatpush1.msra.mxu0 %v920
    %959 = vmatprep.subr.mxu0 0.0
    %960 = vmatpush1.msra.mxu0 %v919
    %961 = vmatprep.subr.mxu0 0.0
    %962 = vmatpush1.msra.mxu0 %v918
    %963 = vmatprep.subr.mxu0 0.0
    %964 = vmatpush2.msra.mxu0 0.0
    %965 = vmatprep.subr.mxu0 0.0
    %966 = vmatpush2.msra.mxu0 0.0
    %967 = vmatprep.subr.mxu0 0.0
    %968 = vmatpush2.msra.mxu0 0.0
    %969 = vmatprep.subr.mxu0 0.0
    %970 = vmatpush2.msra.mxu0 0.0
    %971 = vmatprep.subr.mxu0 0.0
    %972 = vmatpush2.msra.mxu0 0.0
    %973 = vmatprep.subr.mxu0 0.0
    %974 = vmatpush2.msra.mxu0 0.0
    %975 = vmatprep.subr.mxu0 0.0
    %976 = vmatpush2.msra.mxu0 0.0
    %977 = vmatprep.subr.mxu0 0.0
    %978 = vmatpush2.msra.mxu0 0.0
    %979 = vmatprep.subr.mxu0 0.0
    %980 = vmatpush2.msra.mxu0 0.0
    %981 = vmatprep.subr.mxu0 0.0
    %982 = vmatpush2.msra.mxu0 0.0
    %983 = vmatprep.subr.mxu0 0.0
    %984 = vmatpush2.msra.mxu0 0.0
    %985 = vmatprep.subr.mxu0 0.0
    %986 = vmatpush2.msra.mxu0 0.0
    %987 = vmatprep.subr.mxu0 0.0
    %988 = vmatpush2.msra.mxu0 0.0
    %989 = vmatprep.subr.mxu0 0.0
    %990 = vmatpush2.msra.mxu0 0.0
    %991 = vmatprep.subr.mxu0 0.0
    %992 = vmatpush2.msra.mxu0 0.0
    %993 = vmatprep.subr.mxu0 0.0
    %994 = vmatpush2.msra.mxu0 0.0
    %995 = vmatprep.mubr.f32.mxu0 0.0
    %996 = vmatmul.mubr.f32.gmra.mxu0 %v929
    %v997 = vpop.f32.mrf.mxu0
    %v998 = vadd.f32 %v367, %v997
    %v999 = vpop.f32.mrf.mxu0
    %1000 = vdwg.mxu0
    %v1001 = vmul.f32 %v917, %v998
    %v1002 = vadd.f32 %v821, %v1001
    %v1003 = vtanh.pop %v1002
    %v1004 = vsub.f32 1.0, %v917
    %1006 = vrot.lane.b32.xlu0 %v1003, 64
    %v1007 = vpop.permute.xlu0 %1006
    %v1009 = vmul.f32 %v1004, %v1007
    %v1010 = vmul.f32 %v917, %v574
    %v1011 = vadd.f32 %v1009, %v1010
    %1012 = vmatprep.subr.mxu0 0.0
    %1013 = vmatpush1.msra.mxu0 0.0
    %1014 = vmatprep.subr.mxu0 0.0
    %1015 = vmatpush1.msra.mxu0 0.0
    %1016 = vmatprep.subr.mxu0 0.0
    %1017 = vmatpush1.msra.mxu0 0.0
    %1018 = vmatprep.subr.mxu0 0.0
    %1019 = vmatpush1.msra.mxu0 0.0
    %1020 = vmatprep.subr.mxu0 0.0
    %1021 = vmatpush1.msra.mxu0 0.0
    %1022 = vmatprep.subr.mxu0 0.0
    %1023 = vmatpush1.msra.mxu0 0.0
    %1024 = vmatprep.subr.mxu0 0.0
    %1025 = vmatpush1.msra.mxu0 0.0
    %1026 = vmatprep.subr.mxu0 0.0
    %1027 = vmatpush1.msra.mxu0 0.0
    %1028 = vmatprep.subr.mxu0 0.0
    %1029 = vmatpush1.msra.mxu0 %v582
    %1030 = vmatprep.subr.mxu0 0.0
    %1031 = vmatpush1.msra.mxu0 %v581
    %1032 = vmatprep.subr.mxu0 0.0
    %1033 = vmatpush1.msra.mxu0 %v580
    %1034 = vmatprep.subr.mxu0 0.0
    %1035 = vmatpush1.msra.mxu0 %v579
    %1036 = vmatprep.subr.mxu0 0.0
    %1037 = vmatpush1.msra.mxu0 %v578
    %1038 = vmatprep.subr.mxu0 0.0
    %1039 = vmatpush1.msra.mxu0 %v577
    %1040 = vmatprep.subr.mxu0 0.0
    %1041 = vmatpush1.msra.mxu0 %v576
    %1042 = vmatprep.subr.mxu0 0.0
    %1043 = vmatpush1.msra.mxu0 %v575
    %1044 = vmatprep.subr.mxu0 0.0
    %1045 = vmatpush2.msra.mxu0 0.0
    %1046 = vmatprep.subr.mxu0 0.0
    %1047 = vmatpush2.msra.mxu0 0.0
    %1048 = vmatprep.subr.mxu0 0.0
    %1049 = vmatpush2.msra.mxu0 0.0
    %1050 = vmatprep.subr.mxu0 0.0
    %1051 = vmatpush2.msra.mxu0 0.0
    %1052 = vmatprep.subr.mxu0 0.0
    %1053 = vmatpush2.msra.mxu0 0.0
    %1054 = vmatprep.subr.mxu0 0.0
    %1055 = vmatpush2.msra.mxu0 0.0
    %1056 = vmatprep.subr.mxu0 0.0
    %1057 = vmatpush2.msra.mxu0 0.0
    %1058 = vmatprep.subr.mxu0 0.0
    %1059 = vmatpush2.msra.mxu0 0.0
    %1060 = vmatprep.subr.mxu0 0.0
    %1061 = vmatpush2.msra.mxu0 0.0
    %1062 = vmatprep.subr.mxu0 0.0
    %1063 = vmatpush2.msra.mxu0 0.0
    %1064 = vmatprep.subr.mxu0 0.0
    %1065 = vmatpush2.msra.mxu0 0.0
    %1066 = vmatprep.subr.mxu0 0.0
    %1067 = vmatpush2.msra.mxu0 0.0
    %1068 = vmatprep.subr.mxu0 0.0
    %1069 = vmatpush2.msra.mxu0 0.0
    %1070 = vmatprep.subr.mxu0 0.0
    %1071 = vmatpush2.msra.mxu0 0.0
    %1072 = vmatprep.subr.mxu0 0.0
    %1073 = vmatpush2.msra.mxu0 0.0
    %1074 = vmatprep.subr.mxu0 0.0
    %1075 = vmatpush2.msra.mxu0 0.0
    %1076 = vmatprep.mubr.f32.mxu0 0.0
    %1077 = vmatmul.mubr.f32.gmra.mxu0 %v752
    %v1078 = vpop.f32.mrf.mxu0
    %v1079 = vadd.f32 0.0, %v1078
    %v1080 = vpop.f32.mrf.mxu0
    %1081 = vdwg.mxu0
    %1082 = vmatprep.subr.mxu0 0.0
    %1083 = vmatpush1.msra.mxu0 0.0
    %1084 = vmatprep.subr.mxu0 0.0
    %1085 = vmatpush1.msra.mxu0 0.0
    %1086 = vmatprep.subr.mxu0 0.0
    %1087 = vmatpush1.msra.mxu0 0.0
    %1088 = vmatprep.subr.mxu0 0.0
    %1089 = vmatpush1.msra.mxu0 0.0
    %1090 = vmatprep.subr.mxu0 0.0
    %1091 = vmatpush1.msra.mxu0 0.0
    %1092 = vmatprep.subr.mxu0 0.0
    %1093 = vmatpush1.msra.mxu0 0.0
    %1094 = vmatprep.subr.mxu0 0.0
    %1095 = vmatpush1.msra.mxu0 0.0
    %1096 = vmatprep.subr.mxu0 0.0
    %1097 = vmatpush1.msra.mxu0 0.0
    %1098 = vmatprep.subr.mxu0 0.0
    %1099 = vmatpush1.msra.mxu0 %v660
    %1100 = vmatprep.subr.mxu0 0.0
    %1101 = vmatpush1.msra.mxu0 %v659
    %1102 = vmatprep.subr.mxu0 0.0
    %1103 = vmatpush1.msra.mxu0 %v658
    %1104 = vmatprep.subr.mxu0 0.0
    %1105 = vmatpush1.msra.mxu0 %v657
    %1106 = vmatprep.subr.mxu0 0.0
    %1107 = vmatpush1.msra.mxu0 %v656
    %1108 = vmatprep.subr.mxu0 0.0
    %1109 = vmatpush1.msra.mxu0 %v655
    %1110 = vmatprep.subr.mxu0 0.0
    %1111 = vmatpush1.msra.mxu0 %v654
    %1112 = vmatprep.subr.mxu0 0.0
    %1113 = vmatpush1.msra.mxu0 %v653
    %1114 = vmatprep.subr.mxu0 0.0
    %1115 = vmatpush2.msra.mxu0 0.0
    %1116 = vmatprep.subr.mxu0 0.0
    %1117 = vmatpush2.msra.mxu0 0.0
    %1118 = vmatprep.subr.mxu0 0.0
    %1119 = vmatpush2.msra.mxu0 0.0
    %1120 = vmatprep.subr.mxu0 0.0
    %1121 = vmatpush2.msra.mxu0 0.0
    %1122 = vmatprep.subr.mxu0 0.0
    %1123 = vmatpush2.msra.mxu0 0.0
    %1124 = vmatprep.subr.mxu0 0.0
    %1125 = vmatpush2.msra.mxu0 0.0
    %1126 = vmatprep.subr.mxu0 0.0
    %1127 = vmatpush2.msra.mxu0 0.0
    %1128 = vmatprep.subr.mxu0 0.0
    %1129 = vmatpush2.msra.mxu0 0.0
    %1130 = vmatprep.subr.mxu0 0.0
    %1131 = vmatpush2.msra.mxu0 0.0
    %1132 = vmatprep.subr.mxu0 0.0
    %1133 = vmatpush2.msra.mxu0 0.0
    %1134 = vmatprep.subr.mxu0 0.0
    %1135 = vmatpush2.msra.mxu0 0.0
    %1136 = vmatprep.subr.mxu0 0.0
    %1137 = vmatpush2.msra.mxu0 0.0
    %1138 = vmatprep.subr.mxu0 0.0
    %1139 = vmatpush2.msra.mxu0 0.0
    %1140 = vmatprep.subr.mxu0 0.0
    %1141 = vmatpush2.msra.mxu0 0.0
    %1142 = vmatprep.subr.mxu0 0.0
    %1143 = vmatpush2.msra.mxu0 0.0
    %1144 = vmatprep.subr.mxu0 0.0
    %1145 = vmatpush2.msra.mxu0 0.0
    %1146 = vmatprep.mubr.f32.mxu0 0.0
    %1147 = vmatmul.mubr.f32.gmra.mxu0 %v752
    %v1148 = vpop.f32.mrf.mxu0
    %v1149 = vadd.f32 %v360, %v1148
    %v1150 = vpop.f32.mrf.mxu0
    %1151 = vdwg.mxu0
    %v1152 = vadd.f32 %v213, %v1079
    %v1153 = vxor.u32 %v1152, 2147483648
    %v1154 = vmul.f32 %v1153, 1.442695
    %v1155 = vpow.pop %v1154
    %v1156 = vadd.f32 %v1155, 1.0
    %v1157 = vrcp.pop %v1156
    %v1158 = vmul.f32 1.0, %v1157
    %v1159 = vmul.f32 %v1158, %v1149
    %v1160 = vadd.f32 %v327, %v1159
    %v1161 = vtanh.pop %v1160
    %v1162 = vsub.f32 1.0, %v1158
    %1164 = vrot.lane.b32.xlu0 %v1161, 64
    %v1165 = vpop.permute.xlu0 %1164
    %v1167 = vmul.f32 %v1162, %v1165
    %v1168 = vmul.f32 %v1158, %v748
    %v1169 = vadd.f32 %v1167, %v1168
    %1171 = vrot.lane.b32.xlu0 %v1169, 64
    %v1172 = vpop.permute.xlu0 %1171
    %v1173 = vsel %vm403, %v1172, 0
    %1175 = vmatprep.subr.mxu0 0.0
    %1176 = vmatpush1.msra.mxu0 0.0
    %1177 = vmatprep.subr.mxu0 0.0
    %1178 = vmatpush1.msra.mxu0 0.0
    %1179 = vmatprep.subr.mxu0 0.0
    %1180 = vmatpush1.msra.mxu0 0.0
    %1181 = vmatprep.subr.mxu0 0.0
    %1182 = vmatpush1.msra.mxu0 0.0
    %1183 = vmatprep.subr.mxu0 0.0
    %1184 = vmatpush1.msra.mxu0 0.0
    %1185 = vmatprep.subr.mxu0 0.0
    %1186 = vmatpush1.msra.mxu0 0.0
    %1187 = vmatprep.subr.mxu0 0.0
    %1188 = vmatpush1.msra.mxu0 0.0
    %1189 = vmatprep.subr.mxu0 0.0
    %1190 = vmatpush1.msra.mxu0 0.0
    %1191 = vmatprep.subr.mxu0 0.0
    %1192 = vmatpush1.msra.mxu0 %v393
    %1193 = vmatprep.subr.mxu0 0.0
    %1194 = vmatpush1.msra.mxu0 %v392
    %1195 = vmatprep.subr.mxu0 0.0
    %1196 = vmatpush1.msra.mxu0 %v391
    %1197 = vmatprep.subr.mxu0 0.0
    %1198 = vmatpush1.msra.mxu0 %v390
    %1199 = vmatprep.subr.mxu0 0.0
    %1200 = vmatpush1.msra.mxu0 %v389
    %1201 = vmatprep.subr.mxu0 0.0
    %1202 = vmatpush1.msra.mxu0 %v388
    %1203 = vmatprep.subr.mxu0 0.0
    %1204 = vmatpush1.msra.mxu0 %v387
    %1205 = vmatprep.subr.mxu0 0.0
    %1206 = vmatpush1.msra.mxu0 %v386
    %1207 = vmatprep.subr.mxu0 0.0
    %1208 = vmatpush2.msra.mxu0 0.0
    %1209 = vmatprep.subr.mxu0 0.0
    %1210 = vmatpush2.msra.mxu0 0.0
    %1211 = vmatprep.subr.mxu0 0.0
    %1212 = vmatpush2.msra.mxu0 0.0
    %1213 = vmatprep.subr.mxu0 0.0
    %1214 = vmatpush2.msra.mxu0 0.0
    %1215 = vmatprep.subr.mxu0 0.0
    %1216 = vmatpush2.msra.mxu0 0.0
    %1217 = vmatprep.subr.mxu0 0.0
    %1218 = vmatpush2.msra.mxu0 0.0
    %1219 = vmatprep.subr.mxu0 0.0
    %1220 = vmatpush2.msra.mxu0 0.0
    %1221 = vmatprep.subr.mxu0 0.0
    %1222 = vmatpush2.msra.mxu0 0.0
    %1223 = vmatprep.subr.mxu0 0.0
    %1224 = vmatpush2.msra.mxu0 0.0
    %1225 = vmatprep.subr.mxu0 0.0
    %1226 = vmatpush2.msra.mxu0 0.0
    %1227 = vmatprep.subr.mxu0 0.0
    %1228 = vmatpush2.msra.mxu0 0.0
    %1229 = vmatprep.subr.mxu0 0.0
    %1230 = vmatpush2.msra.mxu0 0.0
    %1231 = vmatprep.subr.mxu0 0.0
    %1232 = vmatpush2.msra.mxu0 0.0
    %1233 = vmatprep.subr.mxu0 0.0
    %1234 = vmatpush2.msra.mxu0 0.0
    %1235 = vmatprep.subr.mxu0 0.0
    %1236 = vmatpush2.msra.mxu0 0.0
    %1237 = vmatprep.subr.mxu0 0.0
    %1238 = vmatpush2.msra.mxu0 0.0
    %1239 = vmatprep.mubr.f32.mxu0 0.0
    %1240 = vmatmul.mubr.f32.gmra.mxu0 %v1173
    %v1241 = vpop.f32.mrf.mxu0
    %v1242 = vadd.f32 %v398, %v1241
    %v1243 = vpop.f32.mrf.mxu0
    %1244 = vdwg.mxu0
    %v1246 = vsel %vm403, %v1172, %v1011
    %1247 = vmatprep.subr.mxu0 0.0
    %1248 = vmatpush1.msra.mxu0 %v841
    %1249 = vmatprep.subr.mxu0 0.0
    %1250 = vmatpush1.msra.mxu0 %v840
    %1251 = vmatprep.subr.mxu0 0.0
    %1252 = vmatpush1.msra.mxu0 %v839
    %1253 = vmatprep.subr.mxu0 0.0
    %1254 = vmatpush1.msra.mxu0 %v838
    %1255 = vmatprep.subr.mxu0 0.0
    %1256 = vmatpush1.msra.mxu0 %v837
    %1257 = vmatprep.subr.mxu0 0.0
    %1258 = vmatpush1.msra.mxu0 %v836
    %1259 = vmatprep.subr.mxu0 0.0
    %1260 = vmatpush1.msra.mxu0 %v835
    %1261 = vmatprep.subr.mxu0 0.0
    %1262 = vmatpush1.msra.mxu0 %v834
    %1263 = vmatprep.subr.mxu0 0.0
    %1264 = vmatpush1.msra.mxu0 %v833
    %1265 = vmatprep.subr.mxu0 0.0
    %1266 = vmatpush1.msra.mxu0 %v832
    %1267 = vmatprep.subr.mxu0 0.0
    %1268 = vmatpush1.msra.mxu0 %v831
    %1269 = vmatprep.subr.mxu0 0.0
    %1270 = vmatpush1.msra.mxu0 %v830
    %1271 = vmatprep.subr.mxu0 0.0
    %1272 = vmatpush1.msra.mxu0 %v829
    %1273 = vmatprep.subr.mxu0 0.0
    %1274 = vmatpush1.msra.mxu0 %v828
    %1275 = vmatprep.subr.mxu0 0.0
    %1276 = vmatpush1.msra.mxu0 %v827
    %1277 = vmatprep.subr.mxu0 0.0
    %1278 = vmatpush1.msra.mxu0 %v826
    %1279 = vmatprep.subr.mxu0 0.0
    %1280 = vmatpush2.msra.mxu0 0.0
    %1281 = vmatprep.subr.mxu0 0.0
    %1282 = vmatpush2.msra.mxu0 0.0
    %1283 = vmatprep.subr.mxu0 0.0
    %1284 = vmatpush2.msra.mxu0 0.0
    %1285 = vmatprep.subr.mxu0 0.0
    %1286 = vmatpush2.msra.mxu0 0.0
    %1287 = vmatprep.subr.mxu0 0.0
    %1288 = vmatpush2.msra.mxu0 0.0
    %1289 = vmatprep.subr.mxu0 0.0
    %1290 = vmatpush2.msra.mxu0 0.0
    %1291 = vmatprep.subr.mxu0 0.0
    %1292 = vmatpush2.msra.mxu0 0.0
    %1293 = vmatprep.subr.mxu0 0.0
    %1294 = vmatpush2.msra.mxu0 0.0
    %1295 = vmatprep.subr.mxu0 0.0
    %1296 = vmatpush2.msra.mxu0 0.0
    %1297 = vmatprep.subr.mxu0 0.0
    %1298 = vmatpush2.msra.mxu0 0.0
    %1299 = vmatprep.subr.mxu0 0.0
    %1300 = vmatpush2.msra.mxu0 0.0
    %1301 = vmatprep.subr.mxu0 0.0
    %1302 = vmatpush2.msra.mxu0 0.0
    %1303 = vmatprep.subr.mxu0 0.0
    %1304 = vmatpush2.msra.mxu0 0.0
    %1305 = vmatprep.subr.mxu0 0.0
    %1306 = vmatpush2.msra.mxu0 0.0
    %1307 = vmatprep.subr.mxu0 0.0
    %1308 = vmatpush2.msra.mxu0 0.0
    %1309 = vmatprep.subr.mxu0 0.0
    %1310 = vmatpush2.msra.mxu0 0.0
    %1311 = vmatprep.mubr.f32.mxu0 0.0
    %1312 = vmatmul.mubr.f32.gmra.mxu0 %v1246
    %v1313 = vpop.f32.mrf.mxu0
    %v1314 = vadd.f32 %v488, %v1313
    %v1315 = vpop.f32.mrf.mxu0
    %1316 = vdwg.mxu0
    %v1317 = vxor.u32 %v1314, 2147483648
    %v1318 = vmul.f32 %v1317, 1.442695
    %v1319 = vpow.pop %v1318
    %v1320 = vadd.f32 %v1319, 1.0
    %v1321 = vrcp.pop %v1320
    %v1322 = vmul.f32 1.0, %v1321
    %1324 = vrot.lane.b32.xlu0 %v1011, 64
    %v1325 = vpop.permute.xlu0 %1324
    %v1326 = vsel %vm403, %v1325, 0
    %1328 = vmatprep.subr.mxu0 0.0
    %1329 = vmatpush1.msra.mxu0 0.0
    %1330 = vmatprep.subr.mxu0 0.0
    %1331 = vmatpush1.msra.mxu0 0.0
    %1332 = vmatprep.subr.mxu0 0.0
    %1333 = vmatpush1.msra.mxu0 0.0
    %1334 = vmatprep.subr.mxu0 0.0
    %1335 = vmatpush1.msra.mxu0 0.0
    %1336 = vmatprep.subr.mxu0 0.0
    %1337 = vmatpush1.msra.mxu0 0.0
    %1338 = vmatprep.subr.mxu0 0.0
    %1339 = vmatpush1.msra.mxu0 0.0
    %1340 = vmatprep.subr.mxu0 0.0
    %1341 = vmatpush1.msra.mxu0 0.0
    %1342 = vmatprep.subr.mxu0 0.0
    %1343 = vmatpush1.msra.mxu0 0.0
    %1344 = vmatprep.subr.mxu0 0.0
    %1345 = vmatpush1.msra.mxu0 %v925
    %1346 = vmatprep.subr.mxu0 0.0
    %1347 = vmatpush1.msra.mxu0 %v924
    %1348 = vmatprep.subr.mxu0 0.0
    %1349 = vmatpush1.msra.mxu0 %v923
    %1350 = vmatprep.subr.mxu0 0.0
    %1351 = vmatpush1.msra.mxu0 %v922
    %1352 = vmatprep.subr.mxu0 0.0
    %1353 = vmatpush1.msra.mxu0 %v921
    %1354 = vmatprep.subr.mxu0 0.0
    %1355 = vmatpush1.msra.mxu0 %v920
    %1356 = vmatprep.subr.mxu0 0.0
    %1357 = vmatpush1.msra.mxu0 %v919
    %1358 = vmatprep.subr.mxu0 0.0
    %1359 = vmatpush1.msra.mxu0 %v918
    %1360 = vmatprep.subr.mxu0 0.0
    %1361 = vmatpush2.msra.mxu0 0.0
    %1362 = vmatprep.subr.mxu0 0.0
    %1363 = vmatpush2.msra.mxu0 0.0
    %1364 = vmatprep.subr.mxu0 0.0
    %1365 = vmatpush2.msra.mxu0 0.0
    %1366 = vmatprep.subr.mxu0 0.0
    %1367 = vmatpush2.msra.mxu0 0.0
    %1368 = vmatprep.subr.mxu0 0.0
    %1369 = vmatpush2.msra.mxu0 0.0
    %1370 = vmatprep.subr.mxu0 0.0
    %1371 = vmatpush2.msra.mxu0 0.0
    %1372 = vmatprep.subr.mxu0 0.0
    %1373 = vmatpush2.msra.mxu0 0.0
    %1374 = vmatprep.subr.mxu0 0.0
    %1375 = vmatpush2.msra.mxu0 0.0
    %1376 = vmatprep.subr.mxu0 0.0
    %1377 = vmatpush2.msra.mxu0 0.0
    %1378 = vmatprep.subr.mxu0 0.0
    %1379 = vmatpush2.msra.mxu0 0.0
    %1380 = vmatprep.subr.mxu0 0.0
    %1381 = vmatpush2.msra.mxu0 0.0
    %1382 = vmatprep.subr.mxu0 0.0
    %1383 = vmatpush2.msra.mxu0 0.0
    %1384 = vmatprep.subr.mxu0 0.0
    %1385 = vmatpush2.msra.mxu0 0.0
    %1386 = vmatprep.subr.mxu0 0.0
    %1387 = vmatpush2.msra.mxu0 0.0
    %1388 = vmatprep.subr.mxu0 0.0
    %1389 = vmatpush2.msra.mxu0 0.0
    %1390 = vmatprep.subr.mxu0 0.0
    %1391 = vmatpush2.msra.mxu0 0.0
    %1392 = vmatprep.mubr.f32.mxu0 0.0
    %1393 = vmatmul.mubr.f32.gmra.mxu0 %v1326
    %v1394 = vpop.f32.mrf.mxu0
    %v1395 = vadd.f32 %v367, %v1394
    %v1396 = vpop.f32.mrf.mxu0
    %1397 = vdwg.mxu0
    %v1398 = vmul.f32 %v1322, %v1395
    %v1399 = vadd.f32 %v1242, %v1398
    %v1400 = vtanh.pop %v1399
    %v1401 = vsub.f32 1.0, %v1322
    %1403 = vrot.lane.b32.xlu0 %v1400, 64
    %v1404 = vpop.permute.xlu0 %1403
    %v1406 = vmul.f32 %v1401, %v1404
    %v1407 = vmul.f32 %v1322, %v1011
    %v1408 = vadd.f32 %v1406, %v1407
    %1409 = vmatprep.subr.mxu0 0.0
    %1410 = vmatpush1.msra.mxu0 0.0
    %1411 = vmatprep.subr.mxu0 0.0
    %1412 = vmatpush1.msra.mxu0 0.0
    %1413 = vmatprep.subr.mxu0 0.0
    %1414 = vmatpush1.msra.mxu0 0.0
    %1415 = vmatprep.subr.mxu0 0.0
    %1416 = vmatpush1.msra.mxu0 0.0
    %1417 = vmatprep.subr.mxu0 0.0
    %1418 = vmatpush1.msra.mxu0 0.0
    %1419 = vmatprep.subr.mxu0 0.0
    %1420 = vmatpush1.msra.mxu0 0.0
    %1421 = vmatprep.subr.mxu0 0.0
    %1422 = vmatpush1.msra.mxu0 0.0
    %1423 = vmatprep.subr.mxu0 0.0
    %1424 = vmatpush1.msra.mxu0 0.0
    %1425 = vmatprep.subr.mxu0 0.0
    %1426 = vmatpush1.msra.mxu0 %v582
    %1427 = vmatprep.subr.mxu0 0.0
    %1428 = vmatpush1.msra.mxu0 %v581
    %1429 = vmatprep.subr.mxu0 0.0
    %1430 = vmatpush1.msra.mxu0 %v580
    %1431 = vmatprep.subr.mxu0 0.0
    %1432 = vmatpush1.msra.mxu0 %v579
    %1433 = vmatprep.subr.mxu0 0.0
    %1434 = vmatpush1.msra.mxu0 %v578
    %1435 = vmatprep.subr.mxu0 0.0
    %1436 = vmatpush1.msra.mxu0 %v577
    %1437 = vmatprep.subr.mxu0 0.0
    %1438 = vmatpush1.msra.mxu0 %v576
    %1439 = vmatprep.subr.mxu0 0.0
    %1440 = vmatpush1.msra.mxu0 %v575
    %1441 = vmatprep.subr.mxu0 0.0
    %1442 = vmatpush2.msra.mxu0 0.0
    %1443 = vmatprep.subr.mxu0 0.0
    %1444 = vmatpush2.msra.mxu0 0.0
    %1445 = vmatprep.subr.mxu0 0.0
    %1446 = vmatpush2.msra.mxu0 0.0
    %1447 = vmatprep.subr.mxu0 0.0
    %1448 = vmatpush2.msra.mxu0 0.0
    %1449 = vmatprep.subr.mxu0 0.0
    %1450 = vmatpush2.msra.mxu0 0.0
    %1451 = vmatprep.subr.mxu0 0.0
    %1452 = vmatpush2.msra.mxu0 0.0
    %1453 = vmatprep.subr.mxu0 0.0
    %1454 = vmatpush2.msra.mxu0 0.0
    %1455 = vmatprep.subr.mxu0 0.0
    %1456 = vmatpush2.msra.mxu0 0.0
    %1457 = vmatprep.subr.mxu0 0.0
    %1458 = vmatpush2.msra.mxu0 0.0
    %1459 = vmatprep.subr.mxu0 0.0
    %1460 = vmatpush2.msra.mxu0 0.0
    %1461 = vmatprep.subr.mxu0 0.0
    %1462 = vmatpush2.msra.mxu0 0.0
    %1463 = vmatprep.subr.mxu0 0.0
    %1464 = vmatpush2.msra.mxu0 0.0
    %1465 = vmatprep.subr.mxu0 0.0
    %1466 = vmatpush2.msra.mxu0 0.0
    %1467 = vmatprep.subr.mxu0 0.0
    %1468 = vmatpush2.msra.mxu0 0.0
    %1469 = vmatprep.subr.mxu0 0.0
    %1470 = vmatpush2.msra.mxu0 0.0
    %1471 = vmatprep.subr.mxu0 0.0
    %1472 = vmatpush2.msra.mxu0 0.0
    %1473 = vmatprep.mubr.f32.mxu0 0.0
    %1474 = vmatmul.mubr.f32.gmra.mxu0 %v1173
    %v1475 = vpop.f32.mrf.mxu0
    %v1476 = vadd.f32 0.0, %v1475
    %v1477 = vpop.f32.mrf.mxu0
    %1478 = vdwg.mxu0
    %1479 = vmatprep.subr.mxu0 0.0
    %1480 = vmatpush1.msra.mxu0 0.0
    %1481 = vmatprep.subr.mxu0 0.0
    %1482 = vmatpush1.msra.mxu0 0.0
    %1483 = vmatprep.subr.mxu0 0.0
    %1484 = vmatpush1.msra.mxu0 0.0
    %1485 = vmatprep.subr.mxu0 0.0
    %1486 = vmatpush1.msra.mxu0 0.0
    %1487 = vmatprep.subr.mxu0 0.0
    %1488 = vmatpush1.msra.mxu0 0.0
    %1489 = vmatprep.subr.mxu0 0.0
    %1490 = vmatpush1.msra.mxu0 0.0
    %1491 = vmatprep.subr.mxu0 0.0
    %1492 = vmatpush1.msra.mxu0 0.0
    %1493 = vmatprep.subr.mxu0 0.0
    %1494 = vmatpush1.msra.mxu0 0.0
    %1495 = vmatprep.subr.mxu0 0.0
    %1496 = vmatpush1.msra.mxu0 %v660
    %1497 = vmatprep.subr.mxu0 0.0
    %1498 = vmatpush1.msra.mxu0 %v659
    %1499 = vmatprep.subr.mxu0 0.0
    %1500 = vmatpush1.msra.mxu0 %v658
    %1501 = vmatprep.subr.mxu0 0.0
    %1502 = vmatpush1.msra.mxu0 %v657
    %1503 = vmatprep.subr.mxu0 0.0
    %1504 = vmatpush1.msra.mxu0 %v656
    %1505 = vmatprep.subr.mxu0 0.0
    %1506 = vmatpush1.msra.mxu0 %v655
    %1507 = vmatprep.subr.mxu0 0.0
    %1508 = vmatpush1.msra.mxu0 %v654
    %1509 = vmatprep.subr.mxu0 0.0
    %1510 = vmatpush1.msra.mxu0 %v653
    %1511 = vmatprep.subr.mxu0 0.0
    %1512 = vmatpush2.msra.mxu0 0.0
    %1513 = vmatprep.subr.mxu0 0.0
    %1514 = vmatpush2.msra.mxu0 0.0
    %1515 = vmatprep.subr.mxu0 0.0
    %1516 = vmatpush2.msra.mxu0 0.0
    %1517 = vmatprep.subr.mxu0 0.0
    %1518 = vmatpush2.msra.mxu0 0.0
    %1519 = vmatprep.subr.mxu0 0.0
    %1520 = vmatpush2.msra.mxu0 0.0
    %1521 = vmatprep.subr.mxu0 0.0
    %1522 = vmatpush2.msra.mxu0 0.0
    %1523 = vmatprep.subr.mxu0 0.0
    %1524 = vmatpush2.msra.mxu0 0.0
    %1525 = vmatprep.subr.mxu0 0.0
    %1526 = vmatpush2.msra.mxu0 0.0
    %1527 = vmatprep.subr.mxu0 0.0
    %1528 = vmatpush2.msra.mxu0 0.0
    %1529 = vmatprep.subr.mxu0 0.0
    %1530 = vmatpush2.msra.mxu0 0.0
    %1531 = vmatprep.subr.mxu0 0.0
    %1532 = vmatpush2.msra.mxu0 0.0
    %1533 = vmatprep.subr.mxu0 0.0
    %1534 = vmatpush2.msra.mxu0 0.0
    %1535 = vmatprep.subr.mxu0 0.0
    %1536 = vmatpush2.msra.mxu0 0.0
    %1537 = vmatprep.subr.mxu0 0.0
    %1538 = vmatpush2.msra.mxu0 0.0
    %1539 = vmatprep.subr.mxu0 0.0
    %1540 = vmatpush2.msra.mxu0 0.0
    %1541 = vmatprep.subr.mxu0 0.0
    %1542 = vmatpush2.msra.mxu0 0.0
    %1543 = vmatprep.mubr.f32.mxu0 0.0
    %1544 = vmatmul.mubr.f32.gmra.mxu0 %v1173
    %v1545 = vpop.f32.mrf.mxu0
    %v1546 = vadd.f32 %v360, %v1545
    %v1547 = vpop.f32.mrf.mxu0
    %1548 = vdwg.mxu0
    %v1549 = vadd.f32 %v218, %v1476
    %v1550 = vxor.u32 %v1549, 2147483648
    %v1551 = vmul.f32 %v1550, 1.442695
    %v1552 = vpow.pop %v1551
    %v1553 = vadd.f32 %v1552, 1.0
    %v1554 = vrcp.pop %v1553
    %v1555 = vmul.f32 1.0, %v1554
    %v1556 = vmul.f32 %v1555, %v1546
    %v1557 = vadd.f32 %v332, %v1556
    %v1558 = vtanh.pop %v1557
    %v1559 = vsub.f32 1.0, %v1555
    %1561 = vrot.lane.b32.xlu0 %v1558, 64
    %v1562 = vpop.permute.xlu0 %1561
    %v1564 = vmul.f32 %v1559, %v1562
    %v1565 = vmul.f32 %v1555, %v1169
    %v1566 = vadd.f32 %v1564, %v1565
    %1568 = vrot.lane.b32.xlu0 %v1566, 64
    %v1569 = vpop.permute.xlu0 %1568
    %v1570 = vsel %vm403, %v1569, 0
    %1572 = vmatprep.subr.mxu0 0.0
    %1573 = vmatpush1.msra.mxu0 0.0
    %1574 = vmatprep.subr.mxu0 0.0
    %1575 = vmatpush1.msra.mxu0 0.0
    %1576 = vmatprep.subr.mxu0 0.0
    %1577 = vmatpush1.msra.mxu0 0.0
    %1578 = vmatprep.subr.mxu0 0.0
    %1579 = vmatpush1.msra.mxu0 0.0
    %1580 = vmatprep.subr.mxu0 0.0
    %1581 = vmatpush1.msra.mxu0 0.0
    %1582 = vmatprep.subr.mxu0 0.0
    %1583 = vmatpush1.msra.mxu0 0.0
    %1584 = vmatprep.subr.mxu0 0.0
    %1585 = vmatpush1.msra.mxu0 0.0
    %1586 = vmatprep.subr.mxu0 0.0
    %1587 = vmatpush1.msra.mxu0 0.0
    %1588 = vmatprep.subr.mxu0 0.0
    %1589 = vmatpush1.msra.mxu0 %v393
    %1590 = vmatprep.subr.mxu0 0.0
    %1591 = vmatpush1.msra.mxu0 %v392
    %1592 = vmatprep.subr.mxu0 0.0
    %1593 = vmatpush1.msra.mxu0 %v391
    %1594 = vmatprep.subr.mxu0 0.0
    %1595 = vmatpush1.msra.mxu0 %v390
    %1596 = vmatprep.subr.mxu0 0.0
    %1597 = vmatpush1.msra.mxu0 %v389
    %1598 = vmatprep.subr.mxu0 0.0
    %1599 = vmatpush1.msra.mxu0 %v388
    %1600 = vmatprep.subr.mxu0 0.0
    %1601 = vmatpush1.msra.mxu0 %v387
    %1602 = vmatprep.subr.mxu0 0.0
    %1603 = vmatpush1.msra.mxu0 %v386
    %1604 = vmatprep.subr.mxu0 0.0
    %1605 = vmatpush2.msra.mxu0 0.0
    %1606 = vmatprep.subr.mxu0 0.0
    %1607 = vmatpush2.msra.mxu0 0.0
    %1608 = vmatprep.subr.mxu0 0.0
    %1609 = vmatpush2.msra.mxu0 0.0
    %1610 = vmatprep.subr.mxu0 0.0
    %1611 = vmatpush2.msra.mxu0 0.0
    %1612 = vmatprep.subr.mxu0 0.0
    %1613 = vmatpush2.msra.mxu0 0.0
    %1614 = vmatprep.subr.mxu0 0.0
    %1615 = vmatpush2.msra.mxu0 0.0
    %1616 = vmatprep.subr.mxu0 0.0
    %1617 = vmatpush2.msra.mxu0 0.0
    %1618 = vmatprep.subr.mxu0 0.0
    %1619 = vmatpush2.msra.mxu0 0.0
    %1620 = vmatprep.subr.mxu0 0.0
    %1621 = vmatpush2.msra.mxu0 0.0
    %1622 = vmatprep.subr.mxu0 0.0
    %1623 = vmatpush2.msra.mxu0 0.0
    %1624 = vmatprep.subr.mxu0 0.0
    %1625 = vmatpush2.msra.mxu0 0.0
    %1626 = vmatprep.subr.mxu0 0.0
    %1627 = vmatpush2.msra.mxu0 0.0
    %1628 = vmatprep.subr.mxu0 0.0
    %1629 = vmatpush2.msra.mxu0 0.0
    %1630 = vmatprep.subr.mxu0 0.0
    %1631 = vmatpush2.msra.mxu0 0.0
    %1632 = vmatprep.subr.mxu0 0.0
    %1633 = vmatpush2.msra.mxu0 0.0
    %1634 = vmatprep.subr.mxu0 0.0
    %1635 = vmatpush2.msra.mxu0 0.0
    %1636 = vmatprep.mubr.f32.mxu0 0.0
    %1637 = vmatmul.mubr.f32.gmra.mxu0 %v1570
    %v1638 = vpop.f32.mrf.mxu0
    %v1639 = vadd.f32 %v398, %v1638
    %v1640 = vpop.f32.mrf.mxu0
    %1641 = vdwg.mxu0
    %v1643 = vsel %vm403, %v1569, %v1408
    %1644 = vmatprep.subr.mxu0 0.0
    %1645 = vmatpush1.msra.mxu0 %v841
    %1646 = vmatprep.subr.mxu0 0.0
    %1647 = vmatpush1.msra.mxu0 %v840
    %1648 = vmatprep.subr.mxu0 0.0
    %1649 = vmatpush1.msra.mxu0 %v839
    %1650 = vmatprep.subr.mxu0 0.0
    %1651 = vmatpush1.msra.mxu0 %v838
    %1652 = vmatprep.subr.mxu0 0.0
    %1653 = vmatpush1.msra.mxu0 %v837
    %1654 = vmatprep.subr.mxu0 0.0
    %1655 = vmatpush1.msra.mxu0 %v836
    %1656 = vmatprep.subr.mxu0 0.0
    %1657 = vmatpush1.msra.mxu0 %v835
    %1658 = vmatprep.subr.mxu0 0.0
    %1659 = vmatpush1.msra.mxu0 %v834
    %1660 = vmatprep.subr.mxu0 0.0
    %1661 = vmatpush1.msra.mxu0 %v833
    %1662 = vmatprep.subr.mxu0 0.0
    %1663 = vmatpush1.msra.mxu0 %v832
    %1664 = vmatprep.subr.mxu0 0.0
    %1665 = vmatpush1.msra.mxu0 %v831
    %1666 = vmatprep.subr.mxu0 0.0
    %1667 = vmatpush1.msra.mxu0 %v830
    %1668 = vmatprep.subr.mxu0 0.0
    %1669 = vmatpush1.msra.mxu0 %v829
    %1670 = vmatprep.subr.mxu0 0.0
    %1671 = vmatpush1.msra.mxu0 %v828
    %1672 = vmatprep.subr.mxu0 0.0
    %1673 = vmatpush1.msra.mxu0 %v827
    %1674 = vmatprep.subr.mxu0 0.0
    %1675 = vmatpush1.msra.mxu0 %v826
    %1676 = vmatprep.subr.mxu0 0.0
    %1677 = vmatpush2.msra.mxu0 0.0
    %1678 = vmatprep.subr.mxu0 0.0
    %1679 = vmatpush2.msra.mxu0 0.0
    %1680 = vmatprep.subr.mxu0 0.0
    %1681 = vmatpush2.msra.mxu0 0.0
    %1682 = vmatprep.subr.mxu0 0.0
    %1683 = vmatpush2.msra.mxu0 0.0
    %1684 = vmatprep.subr.mxu0 0.0
    %1685 = vmatpush2.msra.mxu0 0.0
    %1686 = vmatprep.subr.mxu0 0.0
    %1687 = vmatpush2.msra.mxu0 0.0
    %1688 = vmatprep.subr.mxu0 0.0
    %1689 = vmatpush2.msra.mxu0 0.0
    %1690 = vmatprep.subr.mxu0 0.0
    %1691 = vmatpush2.msra.mxu0 0.0
    %1692 = vmatprep.subr.mxu0 0.0
    %1693 = vmatpush2.msra.mxu0 0.0
    %1694 = vmatprep.subr.mxu0 0.0
    %1695 = vmatpush2.msra.mxu0 0.0
    %1696 = vmatprep.subr.mxu0 0.0
    %1697 = vmatpush2.msra.mxu0 0.0
    %1698 = vmatprep.subr.mxu0 0.0
    %1699 = vmatpush2.msra.mxu0 0.0
    %1700 = vmatprep.subr.mxu0 0.0
    %1701 = vmatpush2.msra.mxu0 0.0
    %1702 = vmatprep.subr.mxu0 0.0
    %1703 = vmatpush2.msra.mxu0 0.0
    %1704 = vmatprep.subr.mxu0 0.0
    %1705 = vmatpush2.msra.mxu0 0.0
    %1706 = vmatprep.subr.mxu0 0.0
    %1707 = vmatpush2.msra.mxu0 0.0
    %1708 = vmatprep.mubr.f32.mxu0 0.0
    %1709 = vmatmul.mubr.f32.gmra.mxu0 %v1643
    %v1710 = vpop.f32.mrf.mxu0
    %v1711 = vadd.f32 %v488, %v1710
    %v1712 = vpop.f32.mrf.mxu0
    %1713 = vdwg.mxu0
    %v1714 = vxor.u32 %v1711, 2147483648
    %v1715 = vmul.f32 %v1714, 1.442695
    %v1716 = vpow.pop %v1715
    %v1717 = vadd.f32 %v1716, 1.0
    %v1718 = vrcp.pop %v1717
    %v1719 = vmul.f32 1.0, %v1718
    %1721 = vrot.lane.b32.xlu0 %v1408, 64
    %v1722 = vpop.permute.xlu0 %1721
    %v1723 = vsel %vm403, %v1722, 0
    %1725 = vmatprep.subr.mxu0 0.0
    %1726 = vmatpush1.msra.mxu0 0.0
    %1727 = vmatprep.subr.mxu0 0.0
    %1728 = vmatpush1.msra.mxu0 0.0
    %1729 = vmatprep.subr.mxu0 0.0
    %1730 = vmatpush1.msra.mxu0 0.0
    %1731 = vmatprep.subr.mxu0 0.0
    %1732 = vmatpush1.msra.mxu0 0.0
    %1733 = vmatprep.subr.mxu0 0.0
    %1734 = vmatpush1.msra.mxu0 0.0
    %1735 = vmatprep.subr.mxu0 0.0
    %1736 = vmatpush1.msra.mxu0 0.0
    %1737 = vmatprep.subr.mxu0 0.0
    %1738 = vmatpush1.msra.mxu0 0.0
    %1739 = vmatprep.subr.mxu0 0.0
    %1740 = vmatpush1.msra.mxu0 0.0
    %1741 = vmatprep.subr.mxu0 0.0
    %1742 = vmatpush1.msra.mxu0 %v925
    %1743 = vmatprep.subr.mxu0 0.0
    %1744 = vmatpush1.msra.mxu0 %v924
    %1745 = vmatprep.subr.mxu0 0.0
    %1746 = vmatpush1.msra.mxu0 %v923
    %1747 = vmatprep.subr.mxu0 0.0
    %1748 = vmatpush1.msra.mxu0 %v922
    %1749 = vmatprep.subr.mxu0 0.0
    %1750 = vmatpush1.msra.mxu0 %v921
    %1751 = vmatprep.subr.mxu0 0.0
    %1752 = vmatpush1.msra.mxu0 %v920
    %1753 = vmatprep.subr.mxu0 0.0
    %1754 = vmatpush1.msra.mxu0 %v919
    %1755 = vmatprep.subr.mxu0 0.0
    %1756 = vmatpush1.msra.mxu0 %v918
    %1757 = vmatprep.subr.mxu0 0.0
    %1758 = vmatpush2.msra.mxu0 0.0
    %1759 = vmatprep.subr.mxu0 0.0
    %1760 = vmatpush2.msra.mxu0 0.0
    %1761 = vmatprep.subr.mxu0 0.0
    %1762 = vmatpush2.msra.mxu0 0.0
    %1763 = vmatprep.subr.mxu0 0.0
    %1764 = vmatpush2.msra.mxu0 0.0
    %1765 = vmatprep.subr.mxu0 0.0
    %1766 = vmatpush2.msra.mxu0 0.0
    %1767 = vmatprep.subr.mxu0 0.0
    %1768 = vmatpush2.msra.mxu0 0.0
    %1769 = vmatprep.subr.mxu0 0.0
    %1770 = vmatpush2.msra.mxu0 0.0
    %1771 = vmatprep.subr.mxu0 0.0
    %1772 = vmatpush2.msra.mxu0 0.0
    %1773 = vmatprep.subr.mxu0 0.0
    %1774 = vmatpush2.msra.mxu0 0.0
    %1775 = vmatprep.subr.mxu0 0.0
    %1776 = vmatpush2.msra.mxu0 0.0
    %1777 = vmatprep.subr.mxu0 0.0
    %1778 = vmatpush2.msra.mxu0 0.0
    %1779 = vmatprep.subr.mxu0 0.0
    %1780 = vmatpush2.msra.mxu0 0.0
    %1781 = vmatprep.subr.mxu0 0.0
    %1782 = vmatpush2.msra.mxu0 0.0
    %1783 = vmatprep.subr.mxu0 0.0
    %1784 = vmatpush2.msra.mxu0 0.0
    %1785 = vmatprep.subr.mxu0 0.0
    %1786 = vmatpush2.msra.mxu0 0.0
    %1787 = vmatprep.subr.mxu0 0.0
    %1788 = vmatpush2.msra.mxu0 0.0
    %1789 = vmatprep.mubr.f32.mxu0 0.0
    %1790 = vmatmul.mubr.f32.gmra.mxu0 %v1723
    %v1791 = vpop.f32.mrf.mxu0
    %v1792 = vadd.f32 %v367, %v1791
    %v1793 = vpop.f32.mrf.mxu0
    %1794 = vdwg.mxu0
    %v1795 = vmul.f32 %v1719, %v1792
    %v1796 = vadd.f32 %v1639, %v1795
    %v1797 = vtanh.pop %v1796
    %v1798 = vsub.f32 1.0, %v1719
    %1800 = vrot.lane.b32.xlu0 %v1797, 64
    %v1801 = vpop.permute.xlu0 %1800
    %v1803 = vmul.f32 %v1798, %v1801
    %v1804 = vmul.f32 %v1719, %v1408
    %v1805 = vadd.f32 %v1803, %v1804
    %1806 = vmatprep.subr.mxu0 0.0
    %1807 = vmatpush1.msra.mxu0 0.0
    %1808 = vmatprep.subr.mxu0 0.0
    %1809 = vmatpush1.msra.mxu0 0.0
    %1810 = vmatprep.subr.mxu0 0.0
    %1811 = vmatpush1.msra.mxu0 0.0
    %1812 = vmatprep.subr.mxu0 0.0
    %1813 = vmatpush1.msra.mxu0 0.0
    %1814 = vmatprep.subr.mxu0 0.0
    %1815 = vmatpush1.msra.mxu0 0.0
    %1816 = vmatprep.subr.mxu0 0.0
    %1817 = vmatpush1.msra.mxu0 0.0
    %1818 = vmatprep.subr.mxu0 0.0
    %1819 = vmatpush1.msra.mxu0 0.0
    %1820 = vmatprep.subr.mxu0 0.0
    %1821 = vmatpush1.msra.mxu0 0.0
    %1822 = vmatprep.subr.mxu0 0.0
    %1823 = vmatpush1.msra.mxu0 %v582
    %1824 = vmatprep.subr.mxu0 0.0
    %1825 = vmatpush1.msra.mxu0 %v581
    %1826 = vmatprep.subr.mxu0 0.0
    %1827 = vmatpush1.msra.mxu0 %v580
    %1828 = vmatprep.subr.mxu0 0.0
    %1829 = vmatpush1.msra.mxu0 %v579
    %1830 = vmatprep.subr.mxu0 0.0
    %1831 = vmatpush1.msra.mxu0 %v578
    %1832 = vmatprep.subr.mxu0 0.0
    %1833 = vmatpush1.msra.mxu0 %v577
    %1834 = vmatprep.subr.mxu0 0.0
    %1835 = vmatpush1.msra.mxu0 %v576
    %1836 = vmatprep.subr.mxu0 0.0
    %1837 = vmatpush1.msra.mxu0 %v575
    %1838 = vmatprep.subr.mxu0 0.0
    %1839 = vmatpush2.msra.mxu0 0.0
    %1840 = vmatprep.subr.mxu0 0.0
    %1841 = vmatpush2.msra.mxu0 0.0
    %1842 = vmatprep.subr.mxu0 0.0
    %1843 = vmatpush2.msra.mxu0 0.0
    %1844 = vmatprep.subr.mxu0 0.0
    %1845 = vmatpush2.msra.mxu0 0.0
    %1846 = vmatprep.subr.mxu0 0.0
    %1847 = vmatpush2.msra.mxu0 0.0
    %1848 = vmatprep.subr.mxu0 0.0
    %1849 = vmatpush2.msra.mxu0 0.0
    %1850 = vmatprep.subr.mxu0 0.0
    %1851 = vmatpush2.msra.mxu0 0.0
    %1852 = vmatprep.subr.mxu0 0.0
    %1853 = vmatpush2.msra.mxu0 0.0
    %1854 = vmatprep.subr.mxu0 0.0
    %1855 = vmatpush2.msra.mxu0 0.0
    %1856 = vmatprep.subr.mxu0 0.0
    %1857 = vmatpush2.msra.mxu0 0.0
    %1858 = vmatprep.subr.mxu0 0.0
    %1859 = vmatpush2.msra.mxu0 0.0
    %1860 = vmatprep.subr.mxu0 0.0
    %1861 = vmatpush2.msra.mxu0 0.0
    %1862 = vmatprep.subr.mxu0 0.0
    %1863 = vmatpush2.msra.mxu0 0.0
    %1864 = vmatprep.subr.mxu0 0.0
    %1865 = vmatpush2.msra.mxu0 0.0
    %1866 = vmatprep.subr.mxu0 0.0
    %1867 = vmatpush2.msra.mxu0 0.0
    %1868 = vmatprep.subr.mxu0 0.0
    %1869 = vmatpush2.msra.mxu0 0.0
    %1870 = vmatprep.mubr.f32.mxu0 0.0
    %1871 = vmatmul.mubr.f32.gmra.mxu0 %v1570
    %v1872 = vpop.f32.mrf.mxu0
    %v1873 = vadd.f32 0.0, %v1872
    %v1874 = vpop.f32.mrf.mxu0
    %1875 = vdwg.mxu0
    %1876 = vmatprep.subr.mxu0 0.0
    %1877 = vmatpush1.msra.mxu0 0.0
    %1878 = vmatprep.subr.mxu0 0.0
    %1879 = vmatpush1.msra.mxu0 0.0
    %1880 = vmatprep.subr.mxu0 0.0
    %1881 = vmatpush1.msra.mxu0 0.0
    %1882 = vmatprep.subr.mxu0 0.0
    %1883 = vmatpush1.msra.mxu0 0.0
    %1884 = vmatprep.subr.mxu0 0.0
    %1885 = vmatpush1.msra.mxu0 0.0
    %1886 = vmatprep.subr.mxu0 0.0
    %1887 = vmatpush1.msra.mxu0 0.0
    %1888 = vmatprep.subr.mxu0 0.0
    %1889 = vmatpush1.msra.mxu0 0.0
    %1890 = vmatprep.subr.mxu0 0.0
    %1891 = vmatpush1.msra.mxu0 0.0
    %1892 = vmatprep.subr.mxu0 0.0
    %1893 = vmatpush1.msra.mxu0 %v660
    %1894 = vmatprep.subr.mxu0 0.0
    %1895 = vmatpush1.msra.mxu0 %v659
    %1896 = vmatprep.subr.mxu0 0.0
    %1897 = vmatpush1.msra.mxu0 %v658
    %1898 = vmatprep.subr.mxu0 0.0
    %1899 = vmatpush1.msra.mxu0 %v657
    %1900 = vmatprep.subr.mxu0 0.0
    %1901 = vmatpush1.msra.mxu0 %v656
    %1902 = vmatprep.subr.mxu0 0.0
    %1903 = vmatpush1.msra.mxu0 %v655
    %1904 = vmatprep.subr.mxu0 0.0
    %1905 = vmatpush1.msra.mxu0 %v654
    %1906 = vmatprep.subr.mxu0 0.0
    %1907 = vmatpush1.msra.mxu0 %v653
    %1908 = vmatprep.subr.mxu0 0.0
    %1909 = vmatpush2.msra.mxu0 0.0
    %1910 = vmatprep.subr.mxu0 0.0
    %1911 = vmatpush2.msra.mxu0 0.0
    %1912 = vmatprep.subr.mxu0 0.0
    %1913 = vmatpush2.msra.mxu0 0.0
    %1914 = vmatprep.subr.mxu0 0.0
    %1915 = vmatpush2.msra.mxu0 0.0
    %1916 = vmatprep.subr.mxu0 0.0
    %1917 = vmatpush2.msra.mxu0 0.0
    %1918 = vmatprep.subr.mxu0 0.0
    %1919 = vmatpush2.msra.mxu0 0.0
    %1920 = vmatprep.subr.mxu0 0.0
    %1921 = vmatpush2.msra.mxu0 0.0
    %1922 = vmatprep.subr.mxu0 0.0
    %1923 = vmatpush2.msra.mxu0 0.0
    %1924 = vmatprep.subr.mxu0 0.0
    %1925 = vmatpush2.msra.mxu0 0.0
    %1926 = vmatprep.subr.mxu0 0.0
    %1927 = vmatpush2.msra.mxu0 0.0
    %1928 = vmatprep.subr.mxu0 0.0
    %1929 = vmatpush2.msra.mxu0 0.0
    %1930 = vmatprep.subr.mxu0 0.0
    %1931 = vmatpush2.msra.mxu0 0.0
    %1932 = vmatprep.subr.mxu0 0.0
    %1933 = vmatpush2.msra.mxu0 0.0
    %1934 = vmatprep.subr.mxu0 0.0
    %1935 = vmatpush2.msra.mxu0 0.0
    %1936 = vmatprep.subr.mxu0 0.0
    %1937 = vmatpush2.msra.mxu0 0.0
    %1938 = vmatprep.subr.mxu0 0.0
    %1939 = vmatpush2.msra.mxu0 0.0
    %1940 = vmatprep.mubr.f32.mxu0 0.0
    %1941 = vmatmul.mubr.f32.gmra.mxu0 %v1570
    %v1942 = vpop.f32.mrf.mxu0
    %v1943 = vadd.f32 %v360, %v1942
    %v1944 = vpop.f32.mrf.mxu0
    %1945 = vdwg.mxu0
    %v1946 = vadd.f32 %v223, %v1873
    %v1947 = vxor.u32 %v1946, 2147483648
    %v1948 = vmul.f32 %v1947, 1.442695
    %v1949 = vpow.pop %v1948
    %v1950 = vadd.f32 %v1949, 1.0
    %v1951 = vrcp.pop %v1950
    %v1952 = vmul.f32 1.0, %v1951
    %v1953 = vmul.f32 %v1952, %v1943
    %v1954 = vadd.f32 %v337, %v1953
    %v1955 = vtanh.pop %v1954
    %v1956 = vsub.f32 1.0, %v1952
    %1958 = vrot.lane.b32.xlu0 %v1955, 64
    %v1959 = vpop.permute.xlu0 %1958
    %v1961 = vmul.f32 %v1956, %v1959
    %v1962 = vmul.f32 %v1952, %v1566
    %v1963 = vadd.f32 %v1961, %v1962
    %1965 = vrot.lane.b32.xlu0 %v1963, 64
    %v1966 = vpop.permute.xlu0 %1965
    %v1967 = vsel %vm403, %v1966, 0
    %1969 = vmatprep.subr.mxu0 0.0
    %1970 = vmatpush1.msra.mxu0 0.0
    %1971 = vmatprep.subr.mxu0 0.0
    %1972 = vmatpush1.msra.mxu0 0.0
    %1973 = vmatprep.subr.mxu0 0.0
    %1974 = vmatpush1.msra.mxu0 0.0
    %1975 = vmatprep.subr.mxu0 0.0
    %1976 = vmatpush1.msra.mxu0 0.0
    %1977 = vmatprep.subr.mxu0 0.0
    %1978 = vmatpush1.msra.mxu0 0.0
    %1979 = vmatprep.subr.mxu0 0.0
    %1980 = vmatpush1.msra.mxu0 0.0
    %1981 = vmatprep.subr.mxu0 0.0
    %1982 = vmatpush1.msra.mxu0 0.0
    %1983 = vmatprep.subr.mxu0 0.0
    %1984 = vmatpush1.msra.mxu0 0.0
    %1985 = vmatprep.subr.mxu0 0.0
    %1986 = vmatpush1.msra.mxu0 %v393
    %1987 = vmatprep.subr.mxu0 0.0
    %1988 = vmatpush1.msra.mxu0 %v392
    %1989 = vmatprep.subr.mxu0 0.0
    %1990 = vmatpush1.msra.mxu0 %v391
    %1991 = vmatprep.subr.mxu0 0.0
    %1992 = vmatpush1.msra.mxu0 %v390
    %1993 = vmatprep.subr.mxu0 0.0
    %1994 = vmatpush1.msra.mxu0 %v389
    %1995 = vmatprep.subr.mxu0 0.0
    %1996 = vmatpush1.msra.mxu0 %v388
    %1997 = vmatprep.subr.mxu0 0.0
    %1998 = vmatpush1.msra.mxu0 %v387
    %1999 = vmatprep.subr.mxu0 0.0
    %2000 = vmatpush1.msra.mxu0 %v386
    %2001 = vmatprep.subr.mxu0 0.0
    %2002 = vmatpush2.msra.mxu0 0.0
    %2003 = vmatprep.subr.mxu0 0.0
    %2004 = vmatpush2.msra.mxu0 0.0
    %2005 = vmatprep.subr.mxu0 0.0
    %2006 = vmatpush2.msra.mxu0 0.0
    %2007 = vmatprep.subr.mxu0 0.0
    %2008 = vmatpush2.msra.mxu0 0.0
    %2009 = vmatprep.subr.mxu0 0.0
    %2010 = vmatpush2.msra.mxu0 0.0
    %2011 = vmatprep.subr.mxu0 0.0
    %2012 = vmatpush2.msra.mxu0 0.0
    %2013 = vmatprep.subr.mxu0 0.0
    %2014 = vmatpush2.msra.mxu0 0.0
    %2015 = vmatprep.subr.mxu0 0.0
    %2016 = vmatpush2.msra.mxu0 0.0
    %2017 = vmatprep.subr.mxu0 0.0
    %2018 = vmatpush2.msra.mxu0 0.0
    %2019 = vmatprep.subr.mxu0 0.0
    %2020 = vmatpush2.msra.mxu0 0.0
    %2021 = vmatprep.subr.mxu0 0.0
    %2022 = vmatpush2.msra.mxu0 0.0
    %2023 = vmatprep.subr.mxu0 0.0
    %2024 = vmatpush2.msra.mxu0 0.0
    %2025 = vmatprep.subr.mxu0 0.0
    %2026 = vmatpush2.msra.mxu0 0.0
    %2027 = vmatprep.subr.mxu0 0.0
    %2028 = vmatpush2.msra.mxu0 0.0
    %2029 = vmatprep.subr.mxu0 0.0
    %2030 = vmatpush2.msra.mxu0 0.0
    %2031 = vmatprep.subr.mxu0 0.0
    %2032 = vmatpush2.msra.mxu0 0.0
    %2033 = vmatprep.mubr.f32.mxu0 0.0
    %2034 = vmatmul.mubr.f32.gmra.mxu0 %v1967
    %v2035 = vpop.f32.mrf.mxu0
    %v2036 = vadd.f32 %v398, %v2035
    %v2037 = vpop.f32.mrf.mxu0
    %2038 = vdwg.mxu0
    %v2040 = vsel %vm403, %v1966, %v1805
    %2041 = vmatprep.subr.mxu0 0.0
    %2042 = vmatpush1.msra.mxu0 %v841
    %2043 = vmatprep.subr.mxu0 0.0
    %2044 = vmatpush1.msra.mxu0 %v840
    %2045 = vmatprep.subr.mxu0 0.0
    %2046 = vmatpush1.msra.mxu0 %v839
    %2047 = vmatprep.subr.mxu0 0.0
    %2048 = vmatpush1.msra.mxu0 %v838
    %2049 = vmatprep.subr.mxu0 0.0
    %2050 = vmatpush1.msra.mxu0 %v837
    %2051 = vmatprep.subr.mxu0 0.0
    %2052 = vmatpush1.msra.mxu0 %v836
    %2053 = vmatprep.subr.mxu0 0.0
    %2054 = vmatpush1.msra.mxu0 %v835
    %2055 = vmatprep.subr.mxu0 0.0
    %2056 = vmatpush1.msra.mxu0 %v834
    %2057 = vmatprep.subr.mxu0 0.0
    %2058 = vmatpush1.msra.mxu0 %v833
    %2059 = vmatprep.subr.mxu0 0.0
    %2060 = vmatpush1.msra.mxu0 %v832
    %2061 = vmatprep.subr.mxu0 0.0
    %2062 = vmatpush1.msra.mxu0 %v831
    %2063 = vmatprep.subr.mxu0 0.0
    %2064 = vmatpush1.msra.mxu0 %v830
    %2065 = vmatprep.subr.mxu0 0.0
    %2066 = vmatpush1.msra.mxu0 %v829
    %2067 = vmatprep.subr.mxu0 0.0
    %2068 = vmatpush1.msra.mxu0 %v828
    %2069 = vmatprep.subr.mxu0 0.0
    %2070 = vmatpush1.msra.mxu0 %v827
    %2071 = vmatprep.subr.mxu0 0.0
    %2072 = vmatpush1.msra.mxu0 %v826
    %2073 = vmatprep.subr.mxu0 0.0
    %2074 = vmatpush2.msra.mxu0 0.0
    %2075 = vmatprep.subr.mxu0 0.0
    %2076 = vmatpush2.msra.mxu0 0.0
    %2077 = vmatprep.subr.mxu0 0.0
    %2078 = vmatpush2.msra.mxu0 0.0
    %2079 = vmatprep.subr.mxu0 0.0
    %2080 = vmatpush2.msra.mxu0 0.0
    %2081 = vmatprep.subr.mxu0 0.0
    %2082 = vmatpush2.msra.mxu0 0.0
    %2083 = vmatprep.subr.mxu0 0.0
    %2084 = vmatpush2.msra.mxu0 0.0
    %2085 = vmatprep.subr.mxu0 0.0
    %2086 = vmatpush2.msra.mxu0 0.0
    %2087 = vmatprep.subr.mxu0 0.0
    %2088 = vmatpush2.msra.mxu0 0.0
    %2089 = vmatprep.subr.mxu0 0.0
    %2090 = vmatpush2.msra.mxu0 0.0
    %2091 = vmatprep.subr.mxu0 0.0
    %2092 = vmatpush2.msra.mxu0 0.0
    %2093 = vmatprep.subr.mxu0 0.0
    %2094 = vmatpush2.msra.mxu0 0.0
    %2095 = vmatprep.subr.mxu0 0.0
    %2096 = vmatpush2.msra.mxu0 0.0
    %2097 = vmatprep.subr.mxu0 0.0
    %2098 = vmatpush2.msra.mxu0 0.0
    %2099 = vmatprep.subr.mxu0 0.0
    %2100 = vmatpush2.msra.mxu0 0.0
    %2101 = vmatprep.subr.mxu0 0.0
    %2102 = vmatpush2.msra.mxu0 0.0
    %2103 = vmatprep.subr.mxu0 0.0
    %2104 = vmatpush2.msra.mxu0 0.0
    %2105 = vmatprep.mubr.f32.mxu0 0.0
    %2106 = vmatmul.mubr.f32.gmra.mxu0 %v2040
    %v2107 = vpop.f32.mrf.mxu0
    %v2108 = vadd.f32 %v488, %v2107
    %v2109 = vpop.f32.mrf.mxu0
    %2110 = vdwg.mxu0
    %v2111 = vxor.u32 %v2108, 2147483648
    %v2112 = vmul.f32 %v2111, 1.442695
    %v2113 = vpow.pop %v2112
    %v2114 = vadd.f32 %v2113, 1.0
    %v2115 = vrcp.pop %v2114
    %v2116 = vmul.f32 1.0, %v2115
    %2118 = vrot.lane.b32.xlu0 %v1805, 64
    %v2119 = vpop.permute.xlu0 %2118
    %v2120 = vsel %vm403, %v2119, 0
    %2122 = vmatprep.subr.mxu0 0.0
    %2123 = vmatpush1.msra.mxu0 0.0
    %2124 = vmatprep.subr.mxu0 0.0
    %2125 = vmatpush1.msra.mxu0 0.0
    %2126 = vmatprep.subr.mxu0 0.0
    %2127 = vmatpush1.msra.mxu0 0.0
    %2128 = vmatprep.subr.mxu0 0.0
    %2129 = vmatpush1.msra.mxu0 0.0
    %2130 = vmatprep.subr.mxu0 0.0
    %2131 = vmatpush1.msra.mxu0 0.0
    %2132 = vmatprep.subr.mxu0 0.0
    %2133 = vmatpush1.msra.mxu0 0.0
    %2134 = vmatprep.subr.mxu0 0.0
    %2135 = vmatpush1.msra.mxu0 0.0
    %2136 = vmatprep.subr.mxu0 0.0
    %2137 = vmatpush1.msra.mxu0 0.0
    %2138 = vmatprep.subr.mxu0 0.0
    %2139 = vmatpush1.msra.mxu0 %v925
    %2140 = vmatprep.subr.mxu0 0.0
    %2141 = vmatpush1.msra.mxu0 %v924
    %2142 = vmatprep.subr.mxu0 0.0
    %2143 = vmatpush1.msra.mxu0 %v923
    %2144 = vmatprep.subr.mxu0 0.0
    %2145 = vmatpush1.msra.mxu0 %v922
    %2146 = vmatprep.subr.mxu0 0.0
    %2147 = vmatpush1.msra.mxu0 %v921
    %2148 = vmatprep.subr.mxu0 0.0
    %2149 = vmatpush1.msra.mxu0 %v920
    %2150 = vmatprep.subr.mxu0 0.0
    %2151 = vmatpush1.msra.mxu0 %v919
    %2152 = vmatprep.subr.mxu0 0.0
    %2153 = vmatpush1.msra.mxu0 %v918
    %2154 = vmatprep.subr.mxu0 0.0
    %2155 = vmatpush2.msra.mxu0 0.0
    %2156 = vmatprep.subr.mxu0 0.0
    %2157 = vmatpush2.msra.mxu0 0.0
    %2158 = vmatprep.subr.mxu0 0.0
    %2159 = vmatpush2.msra.mxu0 0.0
    %2160 = vmatprep.subr.mxu0 0.0
    %2161 = vmatpush2.msra.mxu0 0.0
    %2162 = vmatprep.subr.mxu0 0.0
    %2163 = vmatpush2.msra.mxu0 0.0
    %2164 = vmatprep.subr.mxu0 0.0
    %2165 = vmatpush2.msra.mxu0 0.0
    %2166 = vmatprep.subr.mxu0 0.0
    %2167 = vmatpush2.msra.mxu0 0.0
    %2168 = vmatprep.subr.mxu0 0.0
    %2169 = vmatpush2.msra.mxu0 0.0
    %2170 = vmatprep.subr.mxu0 0.0
    %2171 = vmatpush2.msra.mxu0 0.0
    %2172 = vmatprep.subr.mxu0 0.0
    %2173 = vmatpush2.msra.mxu0 0.0
    %2174 = vmatprep.subr.mxu0 0.0
    %2175 = vmatpush2.msra.mxu0 0.0
    %2176 = vmatprep.subr.mxu0 0.0
    %2177 = vmatpush2.msra.mxu0 0.0
    %2178 = vmatprep.subr.mxu0 0.0
    %2179 = vmatpush2.msra.mxu0 0.0
    %2180 = vmatprep.subr.mxu0 0.0
    %2181 = vmatpush2.msra.mxu0 0.0
    %2182 = vmatprep.subr.mxu0 0.0
    %2183 = vmatpush2.msra.mxu0 0.0
    %2184 = vmatprep.subr.mxu0 0.0
    %2185 = vmatpush2.msra.mxu0 0.0
    %2186 = vmatprep.mubr.f32.mxu0 0.0
    %2187 = vmatmul.mubr.f32.gmra.mxu0 %v2120
    %v2188 = vpop.f32.mrf.mxu0
    %v2189 = vadd.f32 %v367, %v2188
    %v2190 = vpop.f32.mrf.mxu0
    %2191 = vdwg.mxu0
    %v2192 = vmul.f32 %v2116, %v2189
    %v2193 = vadd.f32 %v2036, %v2192
    %v2194 = vtanh.pop %v2193
    %v2195 = vsub.f32 1.0, %v2116
    %2197 = vrot.lane.b32.xlu0 %v2194, 64
    %v2198 = vpop.permute.xlu0 %2197
    %v2200 = vmul.f32 %v2195, %v2198
    %v2201 = vmul.f32 %v2116, %v1805
    %v2202 = vadd.f32 %v2200, %v2201
    %2203 = vmatprep.subr.mxu0 0.0
    %2204 = vmatpush1.msra.mxu0 0.0
    %2205 = vmatprep.subr.mxu0 0.0
    %2206 = vmatpush1.msra.mxu0 0.0
    %2207 = vmatprep.subr.mxu0 0.0
    %2208 = vmatpush1.msra.mxu0 0.0
    %2209 = vmatprep.subr.mxu0 0.0
    %2210 = vmatpush1.msra.mxu0 0.0
    %2211 = vmatprep.subr.mxu0 0.0
    %2212 = vmatpush1.msra.mxu0 0.0
    %2213 = vmatprep.subr.mxu0 0.0
    %2214 = vmatpush1.msra.mxu0 0.0
    %2215 = vmatprep.subr.mxu0 0.0
    %2216 = vmatpush1.msra.mxu0 0.0
    %2217 = vmatprep.subr.mxu0 0.0
    %2218 = vmatpush1.msra.mxu0 0.0
    %2219 = vmatprep.subr.mxu0 0.0
    %2220 = vmatpush1.msra.mxu0 %v582
    %2221 = vmatprep.subr.mxu0 0.0
    %2222 = vmatpush1.msra.mxu0 %v581
    %2223 = vmatprep.subr.mxu0 0.0
    %2224 = vmatpush1.msra.mxu0 %v580
    %2225 = vmatprep.subr.mxu0 0.0
    %2226 = vmatpush1.msra.mxu0 %v579
    %2227 = vmatprep.subr.mxu0 0.0
    %2228 = vmatpush1.msra.mxu0 %v578
    %2229 = vmatprep.subr.mxu0 0.0
    %2230 = vmatpush1.msra.mxu0 %v577
    %2231 = vmatprep.subr.mxu0 0.0
    %2232 = vmatpush1.msra.mxu0 %v576
    %2233 = vmatprep.subr.mxu0 0.0
    %2234 = vmatpush1.msra.mxu0 %v575
    %2235 = vmatprep.subr.mxu0 0.0
    %2236 = vmatpush2.msra.mxu0 0.0
    %2237 = vmatprep.subr.mxu0 0.0
    %2238 = vmatpush2.msra.mxu0 0.0
    %2239 = vmatprep.subr.mxu0 0.0
    %2240 = vmatpush2.msra.mxu0 0.0
    %2241 = vmatprep.subr.mxu0 0.0
    %2242 = vmatpush2.msra.mxu0 0.0
    %2243 = vmatprep.subr.mxu0 0.0
    %2244 = vmatpush2.msra.mxu0 0.0
    %2245 = vmatprep.subr.mxu0 0.0
    %2246 = vmatpush2.msra.mxu0 0.0
    %2247 = vmatprep.subr.mxu0 0.0
    %2248 = vmatpush2.msra.mxu0 0.0
    %2249 = vmatprep.subr.mxu0 0.0
    %2250 = vmatpush2.msra.mxu0 0.0
    %2251 = vmatprep.subr.mxu0 0.0
    %2252 = vmatpush2.msra.mxu0 0.0
    %2253 = vmatprep.subr.mxu0 0.0
    %2254 = vmatpush2.msra.mxu0 0.0
    %2255 = vmatprep.subr.mxu0 0.0
    %2256 = vmatpush2.msra.mxu0 0.0
    %2257 = vmatprep.subr.mxu0 0.0
    %2258 = vmatpush2.msra.mxu0 0.0
    %2259 = vmatprep.subr.mxu0 0.0
    %2260 = vmatpush2.msra.mxu0 0.0
    %2261 = vmatprep.subr.mxu0 0.0
    %2262 = vmatpush2.msra.mxu0 0.0
    %2263 = vmatprep.subr.mxu0 0.0
    %2264 = vmatpush2.msra.mxu0 0.0
    %2265 = vmatprep.subr.mxu0 0.0
    %2266 = vmatpush2.msra.mxu0 0.0
    %2267 = vmatprep.mubr.f32.mxu0 0.0
    %2268 = vmatmul.mubr.f32.gmra.mxu0 %v1967
    %v2269 = vpop.f32.mrf.mxu0
    %v2270 = vadd.f32 0.0, %v2269
    %v2271 = vpop.f32.mrf.mxu0
    %2272 = vdwg.mxu0
    %2273 = vmatprep.subr.mxu0 0.0
    %2274 = vmatpush1.msra.mxu0 0.0
    %2275 = vmatprep.subr.mxu0 0.0
    %2276 = vmatpush1.msra.mxu0 0.0
    %2277 = vmatprep.subr.mxu0 0.0
    %2278 = vmatpush1.msra.mxu0 0.0
    %2279 = vmatprep.subr.mxu0 0.0
    %2280 = vmatpush1.msra.mxu0 0.0
    %2281 = vmatprep.subr.mxu0 0.0
    %2282 = vmatpush1.msra.mxu0 0.0
    %2283 = vmatprep.subr.mxu0 0.0
    %2284 = vmatpush1.msra.mxu0 0.0
    %2285 = vmatprep.subr.mxu0 0.0
    %2286 = vmatpush1.msra.mxu0 0.0
    %2287 = vmatprep.subr.mxu0 0.0
    %2288 = vmatpush1.msra.mxu0 0.0
    %2289 = vmatprep.subr.mxu0 0.0
    %2290 = vmatpush1.msra.mxu0 %v660
    %2291 = vmatprep.subr.mxu0 0.0
    %2292 = vmatpush1.msra.mxu0 %v659
    %2293 = vmatprep.subr.mxu0 0.0
    %2294 = vmatpush1.msra.mxu0 %v658
    %2295 = vmatprep.subr.mxu0 0.0
    %2296 = vmatpush1.msra.mxu0 %v657
    %2297 = vmatprep.subr.mxu0 0.0
    %2298 = vmatpush1.msra.mxu0 %v656
    %2299 = vmatprep.subr.mxu0 0.0
    %2300 = vmatpush1.msra.mxu0 %v655
    %2301 = vmatprep.subr.mxu0 0.0
    %2302 = vmatpush1.msra.mxu0 %v654
    %2303 = vmatprep.subr.mxu0 0.0
    %2304 = vmatpush1.msra.mxu0 %v653
    %2305 = vmatprep.subr.mxu0 0.0
    %2306 = vmatpush2.msra.mxu0 0.0
    %2307 = vmatprep.subr.mxu0 0.0
    %2308 = vmatpush2.msra.mxu0 0.0
    %2309 = vmatprep.subr.mxu0 0.0
    %2310 = vmatpush2.msra.mxu0 0.0
    %2311 = vmatprep.subr.mxu0 0.0
    %2312 = vmatpush2.msra.mxu0 0.0
    %2313 = vmatprep.subr.mxu0 0.0
    %2314 = vmatpush2.msra.mxu0 0.0
    %2315 = vmatprep.subr.mxu0 0.0
    %2316 = vmatpush2.msra.mxu0 0.0
    %2317 = vmatprep.subr.mxu0 0.0
    %2318 = vmatpush2.msra.mxu0 0.0
    %2319 = vmatprep.subr.mxu0 0.0
    %2320 = vmatpush2.msra.mxu0 0.0
    %2321 = vmatprep.subr.mxu0 0.0
    %2322 = vmatpush2.msra.mxu0 0.0
    %2323 = vmatprep.subr.mxu0 0.0
    %2324 = vmatpush2.msra.mxu0 0.0
    %2325 = vmatprep.subr.mxu0 0.0
    %2326 = vmatpush2.msra.mxu0 0.0
    %2327 = vmatprep.subr.mxu0 0.0
    %2328 = vmatpush2.msra.mxu0 0.0
    %2329 = vmatprep.subr.mxu0 0.0
    %2330 = vmatpush2.msra.mxu0 0.0
    %2331 = vmatprep.subr.mxu0 0.0
    %2332 = vmatpush2.msra.mxu0 0.0
    %2333 = vmatprep.subr.mxu0 0.0
    %2334 = vmatpush2.msra.mxu0 0.0
    %2335 = vmatprep.subr.mxu0 0.0
    %2336 = vmatpush2.msra.mxu0 0.0
    %2337 = vmatprep.mubr.f32.mxu0 0.0
    %2338 = vmatmul.mubr.f32.gmra.mxu0 %v1967
    %v2339 = vpop.f32.mrf.mxu0
    %v2340 = vadd.f32 %v360, %v2339
    %v2341 = vpop.f32.mrf.mxu0
    %2342 = vdwg.mxu0
    %v2343 = vadd.f32 %v228, %v2270
    %v2344 = vxor.u32 %v2343, 2147483648
    %v2345 = vmul.f32 %v2344, 1.442695
    %v2346 = vpow.pop %v2345
    %v2347 = vadd.f32 %v2346, 1.0
    %v2348 = vrcp.pop %v2347
    %v2349 = vmul.f32 1.0, %v2348
    %v2350 = vmul.f32 %v2349, %v2340
    %v2351 = vadd.f32 %v342, %v2350
    %v2352 = vtanh.pop %v2351
    %v2353 = vsub.f32 1.0, %v2349
    %2355 = vrot.lane.b32.xlu0 %v2352, 64
    %v2356 = vpop.permute.xlu0 %2355
    %v2358 = vmul.f32 %v2353, %v2356
    %v2359 = vmul.f32 %v2349, %v1963
    %v2360 = vadd.f32 %v2358, %v2359
    %2362 = vrot.lane.b32.xlu0 %v2360, 64
    %v2363 = vpop.permute.xlu0 %2362
    %v2364 = vsel %vm403, %v2363, 0
    %2366 = vmatprep.subr.mxu0 0.0
    %2367 = vmatpush1.msra.mxu0 0.0
    %2368 = vmatprep.subr.mxu0 0.0
    %2369 = vmatpush1.msra.mxu0 0.0
    %2370 = vmatprep.subr.mxu0 0.0
    %2371 = vmatpush1.msra.mxu0 0.0
    %2372 = vmatprep.subr.mxu0 0.0
    %2373 = vmatpush1.msra.mxu0 0.0
    %2374 = vmatprep.subr.mxu0 0.0
    %2375 = vmatpush1.msra.mxu0 0.0
    %2376 = vmatprep.subr.mxu0 0.0
    %2377 = vmatpush1.msra.mxu0 0.0
    %2378 = vmatprep.subr.mxu0 0.0
    %2379 = vmatpush1.msra.mxu0 0.0
    %2380 = vmatprep.subr.mxu0 0.0
    %2381 = vmatpush1.msra.mxu0 0.0
    %2382 = vmatprep.subr.mxu0 0.0
    %2383 = vmatpush1.msra.mxu0 %v393
    %2384 = vmatprep.subr.mxu0 0.0
    %2385 = vmatpush1.msra.mxu0 %v392
    %2386 = vmatprep.subr.mxu0 0.0
    %2387 = vmatpush1.msra.mxu0 %v391
    %2388 = vmatprep.subr.mxu0 0.0
    %2389 = vmatpush1.msra.mxu0 %v390
    %2390 = vmatprep.subr.mxu0 0.0
    %2391 = vmatpush1.msra.mxu0 %v389
    %2392 = vmatprep.subr.mxu0 0.0
    %2393 = vmatpush1.msra.mxu0 %v388
    %2394 = vmatprep.subr.mxu0 0.0
    %2395 = vmatpush1.msra.mxu0 %v387
    %2396 = vmatprep.subr.mxu0 0.0
    %2397 = vmatpush1.msra.mxu0 %v386
    %2398 = vmatprep.subr.mxu0 0.0
    %2399 = vmatpush2.msra.mxu0 0.0
    %2400 = vmatprep.subr.mxu0 0.0
    %2401 = vmatpush2.msra.mxu0 0.0
    %2402 = vmatprep.subr.mxu0 0.0
    %2403 = vmatpush2.msra.mxu0 0.0
    %2404 = vmatprep.subr.mxu0 0.0
    %2405 = vmatpush2.msra.mxu0 0.0
    %2406 = vmatprep.subr.mxu0 0.0
    %2407 = vmatpush2.msra.mxu0 0.0
    %2408 = vmatprep.subr.mxu0 0.0
    %2409 = vmatpush2.msra.mxu0 0.0
    %2410 = vmatprep.subr.mxu0 0.0
    %2411 = vmatpush2.msra.mxu0 0.0
    %2412 = vmatprep.subr.mxu0 0.0
    %2413 = vmatpush2.msra.mxu0 0.0
    %2414 = vmatprep.subr.mxu0 0.0
    %2415 = vmatpush2.msra.mxu0 0.0
    %2416 = vmatprep.subr.mxu0 0.0
    %2417 = vmatpush2.msra.mxu0 0.0
    %2418 = vmatprep.subr.mxu0 0.0
    %2419 = vmatpush2.msra.mxu0 0.0
    %2420 = vmatprep.subr.mxu0 0.0
    %2421 = vmatpush2.msra.mxu0 0.0
    %2422 = vmatprep.subr.mxu0 0.0
    %2423 = vmatpush2.msra.mxu0 0.0
    %2424 = vmatprep.subr.mxu0 0.0
    %2425 = vmatpush2.msra.mxu0 0.0
    %2426 = vmatprep.subr.mxu0 0.0
    %2427 = vmatpush2.msra.mxu0 0.0
    %2428 = vmatprep.subr.mxu0 0.0
    %2429 = vmatpush2.msra.mxu0 0.0
    %2430 = vmatprep.mubr.f32.mxu0 0.0
    %2431 = vmatmul.mubr.f32.gmra.mxu0 %v2364
    %v2432 = vpop.f32.mrf.mxu0
    %v2433 = vadd.f32 %v398, %v2432
    %v2434 = vpop.f32.mrf.mxu0
    %2435 = vdwg.mxu0
    %v2437 = vsel %vm403, %v2363, %v2202
    %2438 = vmatprep.subr.mxu0 0.0
    %2439 = vmatpush1.msra.mxu0 %v841
    %2440 = vmatprep.subr.mxu0 0.0
    %2441 = vmatpush1.msra.mxu0 %v840
    %2442 = vmatprep.subr.mxu0 0.0
    %2443 = vmatpush1.msra.mxu0 %v839
    %2444 = vmatprep.subr.mxu0 0.0
    %2445 = vmatpush1.msra.mxu0 %v838
    %2446 = vmatprep.subr.mxu0 0.0
    %2447 = vmatpush1.msra.mxu0 %v837
    %2448 = vmatprep.subr.mxu0 0.0
    %2449 = vmatpush1.msra.mxu0 %v836
    %2450 = vmatprep.subr.mxu0 0.0
    %2451 = vmatpush1.msra.mxu0 %v835
    %2452 = vmatprep.subr.mxu0 0.0
    %2453 = vmatpush1.msra.mxu0 %v834
    %2454 = vmatprep.subr.mxu0 0.0
    %2455 = vmatpush1.msra.mxu0 %v833
    %2456 = vmatprep.subr.mxu0 0.0
    %2457 = vmatpush1.msra.mxu0 %v832
    %2458 = vmatprep.subr.mxu0 0.0
    %2459 = vmatpush1.msra.mxu0 %v831
    %2460 = vmatprep.subr.mxu0 0.0
    %2461 = vmatpush1.msra.mxu0 %v830
    %2462 = vmatprep.subr.mxu0 0.0
    %2463 = vmatpush1.msra.mxu0 %v829
    %2464 = vmatprep.subr.mxu0 0.0
    %2465 = vmatpush1.msra.mxu0 %v828
    %2466 = vmatprep.subr.mxu0 0.0
    %2467 = vmatpush1.msra.mxu0 %v827
    %2468 = vmatprep.subr.mxu0 0.0
    %2469 = vmatpush1.msra.mxu0 %v826
    %2470 = vmatprep.subr.mxu0 0.0
    %2471 = vmatpush2.msra.mxu0 0.0
    %2472 = vmatprep.subr.mxu0 0.0
    %2473 = vmatpush2.msra.mxu0 0.0
    %2474 = vmatprep.subr.mxu0 0.0
    %2475 = vmatpush2.msra.mxu0 0.0
    %2476 = vmatprep.subr.mxu0 0.0
    %2477 = vmatpush2.msra.mxu0 0.0
    %2478 = vmatprep.subr.mxu0 0.0
    %2479 = vmatpush2.msra.mxu0 0.0
    %2480 = vmatprep.subr.mxu0 0.0
    %2481 = vmatpush2.msra.mxu0 0.0
    %2482 = vmatprep.subr.mxu0 0.0
    %2483 = vmatpush2.msra.mxu0 0.0
    %2484 = vmatprep.subr.mxu0 0.0
    %2485 = vmatpush2.msra.mxu0 0.0
    %2486 = vmatprep.subr.mxu0 0.0
    %2487 = vmatpush2.msra.mxu0 0.0
    %2488 = vmatprep.subr.mxu0 0.0
    %2489 = vmatpush2.msra.mxu0 0.0
    %2490 = vmatprep.subr.mxu0 0.0
    %2491 = vmatpush2.msra.mxu0 0.0
    %2492 = vmatprep.subr.mxu0 0.0
    %2493 = vmatpush2.msra.mxu0 0.0
    %2494 = vmatprep.subr.mxu0 0.0
    %2495 = vmatpush2.msra.mxu0 0.0
    %2496 = vmatprep.subr.mxu0 0.0
    %2497 = vmatpush2.msra.mxu0 0.0
    %2498 = vmatprep.subr.mxu0 0.0
    %2499 = vmatpush2.msra.mxu0 0.0
    %2500 = vmatprep.subr.mxu0 0.0
    %2501 = vmatpush2.msra.mxu0 0.0
    %2502 = vmatprep.mubr.f32.mxu0 0.0
    %2503 = vmatmul.mubr.f32.gmra.mxu0 %v2437
    %v2504 = vpop.f32.mrf.mxu0
    %v2505 = vadd.f32 %v488, %v2504
    %v2506 = vpop.f32.mrf.mxu0
    %2507 = vdwg.mxu0
    %v2508 = vxor.u32 %v2505, 2147483648
    %v2509 = vmul.f32 %v2508, 1.442695
    %v2510 = vpow.pop %v2509
    %v2511 = vadd.f32 %v2510, 1.0
    %v2512 = vrcp.pop %v2511
    %v2513 = vmul.f32 1.0, %v2512
    %2515 = vrot.lane.b32.xlu0 %v2202, 64
    %v2516 = vpop.permute.xlu0 %2515
    %v2517 = vsel %vm403, %v2516, 0
    %2519 = vmatprep.subr.mxu0 0.0
    %2520 = vmatpush1.msra.mxu0 0.0
    %2521 = vmatprep.subr.mxu0 0.0
    %2522 = vmatpush1.msra.mxu0 0.0
    %2523 = vmatprep.subr.mxu0 0.0
    %2524 = vmatpush1.msra.mxu0 0.0
    %2525 = vmatprep.subr.mxu0 0.0
    %2526 = vmatpush1.msra.mxu0 0.0
    %2527 = vmatprep.subr.mxu0 0.0
    %2528 = vmatpush1.msra.mxu0 0.0
    %2529 = vmatprep.subr.mxu0 0.0
    %2530 = vmatpush1.msra.mxu0 0.0
    %2531 = vmatprep.subr.mxu0 0.0
    %2532 = vmatpush1.msra.mxu0 0.0
    %2533 = vmatprep.subr.mxu0 0.0
    %2534 = vmatpush1.msra.mxu0 0.0
    %2535 = vmatprep.subr.mxu0 0.0
    %2536 = vmatpush1.msra.mxu0 %v925
    %2537 = vmatprep.subr.mxu0 0.0
    %2538 = vmatpush1.msra.mxu0 %v924
    %2539 = vmatprep.subr.mxu0 0.0
    %2540 = vmatpush1.msra.mxu0 %v923
    %2541 = vmatprep.subr.mxu0 0.0
    %2542 = vmatpush1.msra.mxu0 %v922
    %2543 = vmatprep.subr.mxu0 0.0
    %2544 = vmatpush1.msra.mxu0 %v921
    %2545 = vmatprep.subr.mxu0 0.0
    %2546 = vmatpush1.msra.mxu0 %v920
    %2547 = vmatprep.subr.mxu0 0.0
    %2548 = vmatpush1.msra.mxu0 %v919
    %2549 = vmatprep.subr.mxu0 0.0
    %2550 = vmatpush1.msra.mxu0 %v918
    %2551 = vmatprep.subr.mxu0 0.0
    %2552 = vmatpush2.msra.mxu0 0.0
    %2553 = vmatprep.subr.mxu0 0.0
    %2554 = vmatpush2.msra.mxu0 0.0
    %2555 = vmatprep.subr.mxu0 0.0
    %2556 = vmatpush2.msra.mxu0 0.0
    %2557 = vmatprep.subr.mxu0 0.0
    %2558 = vmatpush2.msra.mxu0 0.0
    %2559 = vmatprep.subr.mxu0 0.0
    %2560 = vmatpush2.msra.mxu0 0.0
    %2561 = vmatprep.subr.mxu0 0.0
    %2562 = vmatpush2.msra.mxu0 0.0
    %2563 = vmatprep.subr.mxu0 0.0
    %2564 = vmatpush2.msra.mxu0 0.0
    %2565 = vmatprep.subr.mxu0 0.0
    %2566 = vmatpush2.msra.mxu0 0.0
    %2567 = vmatprep.subr.mxu0 0.0
    %2568 = vmatpush2.msra.mxu0 0.0
    %2569 = vmatprep.subr.mxu0 0.0
    %2570 = vmatpush2.msra.mxu0 0.0
    %2571 = vmatprep.subr.mxu0 0.0
    %2572 = vmatpush2.msra.mxu0 0.0
    %2573 = vmatprep.subr.mxu0 0.0
    %2574 = vmatpush2.msra.mxu0 0.0
    %2575 = vmatprep.subr.mxu0 0.0
    %2576 = vmatpush2.msra.mxu0 0.0
    %2577 = vmatprep.subr.mxu0 0.0
    %2578 = vmatpush2.msra.mxu0 0.0
    %2579 = vmatprep.subr.mxu0 0.0
    %2580 = vmatpush2.msra.mxu0 0.0
    %2581 = vmatprep.subr.mxu0 0.0
    %2582 = vmatpush2.msra.mxu0 0.0
    %2583 = vmatprep.mubr.f32.mxu0 0.0
    %2584 = vmatmul.mubr.f32.gmra.mxu0 %v2517
    %v2585 = vpop.f32.mrf.mxu0
    %v2586 = vadd.f32 %v367, %v2585
    %v2587 = vpop.f32.mrf.mxu0
    %2588 = vdwg.mxu0
    %v2589 = vmul.f32 %v2513, %v2586
    %v2590 = vadd.f32 %v2433, %v2589
    %v2591 = vtanh.pop %v2590
    %v2592 = vsub.f32 1.0, %v2513
    %2594 = vrot.lane.b32.xlu0 %v2591, 64
    %v2595 = vpop.permute.xlu0 %2594
    %v2597 = vmul.f32 %v2592, %v2595
    %v2598 = vmul.f32 %v2513, %v2202
    %v2599 = vadd.f32 %v2597, %v2598
    %2600 = vmatprep.subr.mxu0 0.0
    %2601 = vmatpush1.msra.mxu0 0.0
    %2602 = vmatprep.subr.mxu0 0.0
    %2603 = vmatpush1.msra.mxu0 0.0
    %2604 = vmatprep.subr.mxu0 0.0
    %2605 = vmatpush1.msra.mxu0 0.0
    %2606 = vmatprep.subr.mxu0 0.0
    %2607 = vmatpush1.msra.mxu0 0.0
    %2608 = vmatprep.subr.mxu0 0.0
    %2609 = vmatpush1.msra.mxu0 0.0
    %2610 = vmatprep.subr.mxu0 0.0
    %2611 = vmatpush1.msra.mxu0 0.0
    %2612 = vmatprep.subr.mxu0 0.0
    %2613 = vmatpush1.msra.mxu0 0.0
    %2614 = vmatprep.subr.mxu0 0.0
    %2615 = vmatpush1.msra.mxu0 0.0
    %2616 = vmatprep.subr.mxu0 0.0
    %2617 = vmatpush1.msra.mxu0 %v582
    %2618 = vmatprep.subr.mxu0 0.0
    %2619 = vmatpush1.msra.mxu0 %v581
    %2620 = vmatprep.subr.mxu0 0.0
    %2621 = vmatpush1.msra.mxu0 %v580
    %2622 = vmatprep.subr.mxu0 0.0
    %2623 = vmatpush1.msra.mxu0 %v579
    %2624 = vmatprep.subr.mxu0 0.0
    %2625 = vmatpush1.msra.mxu0 %v578
    %2626 = vmatprep.subr.mxu0 0.0
    %2627 = vmatpush1.msra.mxu0 %v577
    %2628 = vmatprep.subr.mxu0 0.0
    %2629 = vmatpush1.msra.mxu0 %v576
    %2630 = vmatprep.subr.mxu0 0.0
    %2631 = vmatpush1.msra.mxu0 %v575
    %2632 = vmatprep.subr.mxu0 0.0
    %2633 = vmatpush2.msra.mxu0 0.0
    %2634 = vmatprep.subr.mxu0 0.0
    %2635 = vmatpush2.msra.mxu0 0.0
    %2636 = vmatprep.subr.mxu0 0.0
    %2637 = vmatpush2.msra.mxu0 0.0
    %2638 = vmatprep.subr.mxu0 0.0
    %2639 = vmatpush2.msra.mxu0 0.0
    %2640 = vmatprep.subr.mxu0 0.0
    %2641 = vmatpush2.msra.mxu0 0.0
    %2642 = vmatprep.subr.mxu0 0.0
    %2643 = vmatpush2.msra.mxu0 0.0
    %2644 = vmatprep.subr.mxu0 0.0
    %2645 = vmatpush2.msra.mxu0 0.0
    %2646 = vmatprep.subr.mxu0 0.0
    %2647 = vmatpush2.msra.mxu0 0.0
    %2648 = vmatprep.subr.mxu0 0.0
    %2649 = vmatpush2.msra.mxu0 0.0
    %2650 = vmatprep.subr.mxu0 0.0
    %2651 = vmatpush2.msra.mxu0 0.0
    %2652 = vmatprep.subr.mxu0 0.0
    %2653 = vmatpush2.msra.mxu0 0.0
    %2654 = vmatprep.subr.mxu0 0.0
    %2655 = vmatpush2.msra.mxu0 0.0
    %2656 = vmatprep.subr.mxu0 0.0
    %2657 = vmatpush2.msra.mxu0 0.0
    %2658 = vmatprep.subr.mxu0 0.0
    %2659 = vmatpush2.msra.mxu0 0.0
    %2660 = vmatprep.subr.mxu0 0.0
    %2661 = vmatpush2.msra.mxu0 0.0
    %2662 = vmatprep.subr.mxu0 0.0
    %2663 = vmatpush2.msra.mxu0 0.0
    %2664 = vmatprep.mubr.f32.mxu0 0.0
    %2665 = vmatmul.mubr.f32.gmra.mxu0 %v2364
    %v2666 = vpop.f32.mrf.mxu0
    %v2667 = vadd.f32 0.0, %v2666
    %v2668 = vpop.f32.mrf.mxu0
    %2669 = vdwg.mxu0
    %2670 = vmatprep.subr.mxu0 0.0
    %2671 = vmatpush1.msra.mxu0 0.0
    %2672 = vmatprep.subr.mxu0 0.0
    %2673 = vmatpush1.msra.mxu0 0.0
    %2674 = vmatprep.subr.mxu0 0.0
    %2675 = vmatpush1.msra.mxu0 0.0
    %2676 = vmatprep.subr.mxu0 0.0
    %2677 = vmatpush1.msra.mxu0 0.0
    %2678 = vmatprep.subr.mxu0 0.0
    %2679 = vmatpush1.msra.mxu0 0.0
    %2680 = vmatprep.subr.mxu0 0.0
    %2681 = vmatpush1.msra.mxu0 0.0
    %2682 = vmatprep.subr.mxu0 0.0
    %2683 = vmatpush1.msra.mxu0 0.0
    %2684 = vmatprep.subr.mxu0 0.0
    %2685 = vmatpush1.msra.mxu0 0.0
    %2686 = vmatprep.subr.mxu0 0.0
    %2687 = vmatpush1.msra.mxu0 %v660
    %2688 = vmatprep.subr.mxu0 0.0
    %2689 = vmatpush1.msra.mxu0 %v659
    %2690 = vmatprep.subr.mxu0 0.0
    %2691 = vmatpush1.msra.mxu0 %v658
    %2692 = vmatprep.subr.mxu0 0.0
    %2693 = vmatpush1.msra.mxu0 %v657
    %2694 = vmatprep.subr.mxu0 0.0
    %2695 = vmatpush1.msra.mxu0 %v656
    %2696 = vmatprep.subr.mxu0 0.0
    %2697 = vmatpush1.msra.mxu0 %v655
    %2698 = vmatprep.subr.mxu0 0.0
    %2699 = vmatpush1.msra.mxu0 %v654
    %2700 = vmatprep.subr.mxu0 0.0
    %2701 = vmatpush1.msra.mxu0 %v653
    %2702 = vmatprep.subr.mxu0 0.0
    %2703 = vmatpush2.msra.mxu0 0.0
    %2704 = vmatprep.subr.mxu0 0.0
    %2705 = vmatpush2.msra.mxu0 0.0
    %2706 = vmatprep.subr.mxu0 0.0
    %2707 = vmatpush2.msra.mxu0 0.0
    %2708 = vmatprep.subr.mxu0 0.0
    %2709 = vmatpush2.msra.mxu0 0.0
    %2710 = vmatprep.subr.mxu0 0.0
    %2711 = vmatpush2.msra.mxu0 0.0
    %2712 = vmatprep.subr.mxu0 0.0
    %2713 = vmatpush2.msra.mxu0 0.0
    %2714 = vmatprep.subr.mxu0 0.0
    %2715 = vmatpush2.msra.mxu0 0.0
    %2716 = vmatprep.subr.mxu0 0.0
    %2717 = vmatpush2.msra.mxu0 0.0
    %2718 = vmatprep.subr.mxu0 0.0
    %2719 = vmatpush2.msra.mxu0 0.0
    %2720 = vmatprep.subr.mxu0 0.0
    %2721 = vmatpush2.msra.mxu0 0.0
    %2722 = vmatprep.subr.mxu0 0.0
    %2723 = vmatpush2.msra.mxu0 0.0
    %2724 = vmatprep.subr.mxu0 0.0
    %2725 = vmatpush2.msra.mxu0 0.0
    %2726 = vmatprep.subr.mxu0 0.0
    %2727 = vmatpush2.msra.mxu0 0.0
    %2728 = vmatprep.subr.mxu0 0.0
    %2729 = vmatpush2.msra.mxu0 0.0
    %2730 = vmatprep.subr.mxu0 0.0
    %2731 = vmatpush2.msra.mxu0 0.0
    %2732 = vmatprep.subr.mxu0 0.0
    %2733 = vmatpush2.msra.mxu0 0.0
    %2734 = vmatprep.mubr.f32.mxu0 0.0
    %2735 = vmatmul.mubr.f32.gmra.mxu0 %v2364
    %v2736 = vpop.f32.mrf.mxu0
    %v2737 = vadd.f32 %v360, %v2736
    %v2738 = vpop.f32.mrf.mxu0
    %2739 = vdwg.mxu0
    %v2740 = vadd.f32 %v233, %v2667
    %v2741 = vxor.u32 %v2740, 2147483648
    %v2742 = vmul.f32 %v2741, 1.442695
    %v2743 = vpow.pop %v2742
    %v2744 = vadd.f32 %v2743, 1.0
    %v2745 = vrcp.pop %v2744
    %v2746 = vmul.f32 1.0, %v2745
    %v2747 = vmul.f32 %v2746, %v2737
    %v2748 = vadd.f32 %v347, %v2747
    %v2749 = vtanh.pop %v2748
    %v2750 = vsub.f32 1.0, %v2746
    %2752 = vrot.lane.b32.xlu0 %v2749, 64
    %v2753 = vpop.permute.xlu0 %2752
    %v2755 = vmul.f32 %v2750, %v2753
    %v2756 = vmul.f32 %v2746, %v2360
    %v2757 = vadd.f32 %v2755, %v2756
    %2759 = vrot.lane.b32.xlu0 %v2757, 64
    %v2760 = vpop.permute.xlu0 %2759
    %v2761 = vsel %vm403, %v2760, 0
    %2763 = vmatprep.subr.mxu0 0.0
    %2764 = vmatpush1.msra.mxu0 0.0
    %2765 = vmatprep.subr.mxu0 0.0
    %2766 = vmatpush1.msra.mxu0 0.0
    %2767 = vmatprep.subr.mxu0 0.0
    %2768 = vmatpush1.msra.mxu0 0.0
    %2769 = vmatprep.subr.mxu0 0.0
    %2770 = vmatpush1.msra.mxu0 0.0
    %2771 = vmatprep.subr.mxu0 0.0
    %2772 = vmatpush1.msra.mxu0 0.0
    %2773 = vmatprep.subr.mxu0 0.0
    %2774 = vmatpush1.msra.mxu0 0.0
    %2775 = vmatprep.subr.mxu0 0.0
    %2776 = vmatpush1.msra.mxu0 0.0
    %2777 = vmatprep.subr.mxu0 0.0
    %2778 = vmatpush1.msra.mxu0 0.0
    %2779 = vmatprep.subr.mxu0 0.0
    %2780 = vmatpush1.msra.mxu0 %v393
    %2781 = vmatprep.subr.mxu0 0.0
    %2782 = vmatpush1.msra.mxu0 %v392
    %2783 = vmatprep.subr.mxu0 0.0
    %2784 = vmatpush1.msra.mxu0 %v391
    %2785 = vmatprep.subr.mxu0 0.0
    %2786 = vmatpush1.msra.mxu0 %v390
    %2787 = vmatprep.subr.mxu0 0.0
    %2788 = vmatpush1.msra.mxu0 %v389
    %2789 = vmatprep.subr.mxu0 0.0
    %2790 = vmatpush1.msra.mxu0 %v388
    %2791 = vmatprep.subr.mxu0 0.0
    %2792 = vmatpush1.msra.mxu0 %v387
    %2793 = vmatprep.subr.mxu0 0.0
    %2794 = vmatpush1.msra.mxu0 %v386
    %2795 = vmatprep.subr.mxu0 0.0
    %2796 = vmatpush2.msra.mxu0 0.0
    %2797 = vmatprep.subr.mxu0 0.0
    %2798 = vmatpush2.msra.mxu0 0.0
    %2799 = vmatprep.subr.mxu0 0.0
    %2800 = vmatpush2.msra.mxu0 0.0
    %2801 = vmatprep.subr.mxu0 0.0
    %2802 = vmatpush2.msra.mxu0 0.0
    %2803 = vmatprep.subr.mxu0 0.0
    %2804 = vmatpush2.msra.mxu0 0.0
    %2805 = vmatprep.subr.mxu0 0.0
    %2806 = vmatpush2.msra.mxu0 0.0
    %2807 = vmatprep.subr.mxu0 0.0
    %2808 = vmatpush2.msra.mxu0 0.0
    %2809 = vmatprep.subr.mxu0 0.0
    %2810 = vmatpush2.msra.mxu0 0.0
    %2811 = vmatprep.subr.mxu0 0.0
    %2812 = vmatpush2.msra.mxu0 0.0
    %2813 = vmatprep.subr.mxu0 0.0
    %2814 = vmatpush2.msra.mxu0 0.0
    %2815 = vmatprep.subr.mxu0 0.0
    %2816 = vmatpush2.msra.mxu0 0.0
    %2817 = vmatprep.subr.mxu0 0.0
    %2818 = vmatpush2.msra.mxu0 0.0
    %2819 = vmatprep.subr.mxu0 0.0
    %2820 = vmatpush2.msra.mxu0 0.0
    %2821 = vmatprep.subr.mxu0 0.0
    %2822 = vmatpush2.msra.mxu0 0.0
    %2823 = vmatprep.subr.mxu0 0.0
    %2824 = vmatpush2.msra.mxu0 0.0
    %2825 = vmatprep.subr.mxu0 0.0
    %2826 = vmatpush2.msra.mxu0 0.0
    %2827 = vmatprep.mubr.f32.mxu0 0.0
    %2828 = vmatmul.mubr.f32.gmra.mxu0 %v2761
    %v2829 = vpop.f32.mrf.mxu0
    %v2830 = vadd.f32 %v398, %v2829
    %v2831 = vpop.f32.mrf.mxu0
    %2832 = vdwg.mxu0
    %v2834 = vsel %vm403, %v2760, %v2599
    %2835 = vmatprep.subr.mxu0 0.0
    %2836 = vmatpush1.msra.mxu0 %v841
    %2837 = vmatprep.subr.mxu0 0.0
    %2838 = vmatpush1.msra.mxu0 %v840
    %2839 = vmatprep.subr.mxu0 0.0
    %2840 = vmatpush1.msra.mxu0 %v839
    %2841 = vmatprep.subr.mxu0 0.0
    %2842 = vmatpush1.msra.mxu0 %v838
    %2843 = vmatprep.subr.mxu0 0.0
    %2844 = vmatpush1.msra.mxu0 %v837
    %2845 = vmatprep.subr.mxu0 0.0
    %2846 = vmatpush1.msra.mxu0 %v836
    %2847 = vmatprep.subr.mxu0 0.0
    %2848 = vmatpush1.msra.mxu0 %v835
    %2849 = vmatprep.subr.mxu0 0.0
    %2850 = vmatpush1.msra.mxu0 %v834
    %2851 = vmatprep.subr.mxu0 0.0
    %2852 = vmatpush1.msra.mxu0 %v833
    %2853 = vmatprep.subr.mxu0 0.0
    %2854 = vmatpush1.msra.mxu0 %v832
    %2855 = vmatprep.subr.mxu0 0.0
    %2856 = vmatpush1.msra.mxu0 %v831
    %2857 = vmatprep.subr.mxu0 0.0
    %2858 = vmatpush1.msra.mxu0 %v830
    %2859 = vmatprep.subr.mxu0 0.0
    %2860 = vmatpush1.msra.mxu0 %v829
    %2861 = vmatprep.subr.mxu0 0.0
    %2862 = vmatpush1.msra.mxu0 %v828
    %2863 = vmatprep.subr.mxu0 0.0
    %2864 = vmatpush1.msra.mxu0 %v827
    %2865 = vmatprep.subr.mxu0 0.0
    %2866 = vmatpush1.msra.mxu0 %v826
    %2867 = vmatprep.subr.mxu0 0.0
    %2868 = vmatpush2.msra.mxu0 0.0
    %2869 = vmatprep.subr.mxu0 0.0
    %2870 = vmatpush2.msra.mxu0 0.0
    %2871 = vmatprep.subr.mxu0 0.0
    %2872 = vmatpush2.msra.mxu0 0.0
    %2873 = vmatprep.subr.mxu0 0.0
    %2874 = vmatpush2.msra.mxu0 0.0
    %2875 = vmatprep.subr.mxu0 0.0
    %2876 = vmatpush2.msra.mxu0 0.0
    %2877 = vmatprep.subr.mxu0 0.0
    %2878 = vmatpush2.msra.mxu0 0.0
    %2879 = vmatprep.subr.mxu0 0.0
    %2880 = vmatpush2.msra.mxu0 0.0
    %2881 = vmatprep.subr.mxu0 0.0
    %2882 = vmatpush2.msra.mxu0 0.0
    %2883 = vmatprep.subr.mxu0 0.0
    %2884 = vmatpush2.msra.mxu0 0.0
    %2885 = vmatprep.subr.mxu0 0.0
    %2886 = vmatpush2.msra.mxu0 0.0
    %2887 = vmatprep.subr.mxu0 0.0
    %2888 = vmatpush2.msra.mxu0 0.0
    %2889 = vmatprep.subr.mxu0 0.0
    %2890 = vmatpush2.msra.mxu0 0.0
    %2891 = vmatprep.subr.mxu0 0.0
    %2892 = vmatpush2.msra.mxu0 0.0
    %2893 = vmatprep.subr.mxu0 0.0
    %2894 = vmatpush2.msra.mxu0 0.0
    %2895 = vmatprep.subr.mxu0 0.0
    %2896 = vmatpush2.msra.mxu0 0.0
    %2897 = vmatprep.subr.mxu0 0.0
    %2898 = vmatpush2.msra.mxu0 0.0
    %2899 = vmatprep.mubr.f32.mxu0 0.0
    %2900 = vmatmul.mubr.f32.gmra.mxu0 %v2834
    %v2901 = vpop.f32.mrf.mxu0
    %v2902 = vadd.f32 %v488, %v2901
    %v2903 = vpop.f32.mrf.mxu0
    %2904 = vdwg.mxu0
    %v2905 = vxor.u32 %v2902, 2147483648
    %v2906 = vmul.f32 %v2905, 1.442695
    %v2907 = vpow.pop %v2906
    %v2908 = vadd.f32 %v2907, 1.0
    %v2909 = vrcp.pop %v2908
    %v2910 = vmul.f32 1.0, %v2909
    %2912 = vrot.lane.b32.xlu0 %v2599, 64
    %v2913 = vpop.permute.xlu0 %2912
    %v2914 = vsel %vm403, %v2913, 0
    %2916 = vmatprep.subr.mxu0 0.0
    %2917 = vmatpush1.msra.mxu0 0.0
    %2918 = vmatprep.subr.mxu0 0.0
    %2919 = vmatpush1.msra.mxu0 0.0
    %2920 = vmatprep.subr.mxu0 0.0
    %2921 = vmatpush1.msra.mxu0 0.0
    %2922 = vmatprep.subr.mxu0 0.0
    %2923 = vmatpush1.msra.mxu0 0.0
    %2924 = vmatprep.subr.mxu0 0.0
    %2925 = vmatpush1.msra.mxu0 0.0
    %2926 = vmatprep.subr.mxu0 0.0
    %2927 = vmatpush1.msra.mxu0 0.0
    %2928 = vmatprep.subr.mxu0 0.0
    %2929 = vmatpush1.msra.mxu0 0.0
    %2930 = vmatprep.subr.mxu0 0.0
    %2931 = vmatpush1.msra.mxu0 0.0
    %2932 = vmatprep.subr.mxu0 0.0
    %2933 = vmatpush1.msra.mxu0 %v925
    %2934 = vmatprep.subr.mxu0 0.0
    %2935 = vmatpush1.msra.mxu0 %v924
    %2936 = vmatprep.subr.mxu0 0.0
    %2937 = vmatpush1.msra.mxu0 %v923
    %2938 = vmatprep.subr.mxu0 0.0
    %2939 = vmatpush1.msra.mxu0 %v922
    %2940 = vmatprep.subr.mxu0 0.0
    %2941 = vmatpush1.msra.mxu0 %v921
    %2942 = vmatprep.subr.mxu0 0.0
    %2943 = vmatpush1.msra.mxu0 %v920
    %2944 = vmatprep.subr.mxu0 0.0
    %2945 = vmatpush1.msra.mxu0 %v919
    %2946 = vmatprep.subr.mxu0 0.0
    %2947 = vmatpush1.msra.mxu0 %v918
    %2948 = vmatprep.subr.mxu0 0.0
    %2949 = vmatpush2.msra.mxu0 0.0
    %2950 = vmatprep.subr.mxu0 0.0
    %2951 = vmatpush2.msra.mxu0 0.0
    %2952 = vmatprep.subr.mxu0 0.0
    %2953 = vmatpush2.msra.mxu0 0.0
    %2954 = vmatprep.subr.mxu0 0.0
    %2955 = vmatpush2.msra.mxu0 0.0
    %2956 = vmatprep.subr.mxu0 0.0
    %2957 = vmatpush2.msra.mxu0 0.0
    %2958 = vmatprep.subr.mxu0 0.0
    %2959 = vmatpush2.msra.mxu0 0.0
    %2960 = vmatprep.subr.mxu0 0.0
    %2961 = vmatpush2.msra.mxu0 0.0
    %2962 = vmatprep.subr.mxu0 0.0
    %2963 = vmatpush2.msra.mxu0 0.0
    %2964 = vmatprep.subr.mxu0 0.0
    %2965 = vmatpush2.msra.mxu0 0.0
    %2966 = vmatprep.subr.mxu0 0.0
    %2967 = vmatpush2.msra.mxu0 0.0
    %2968 = vmatprep.subr.mxu0 0.0
    %2969 = vmatpush2.msra.mxu0 0.0
    %2970 = vmatprep.subr.mxu0 0.0
    %2971 = vmatpush2.msra.mxu0 0.0
    %2972 = vmatprep.subr.mxu0 0.0
    %2973 = vmatpush2.msra.mxu0 0.0
    %2974 = vmatprep.subr.mxu0 0.0
    %2975 = vmatpush2.msra.mxu0 0.0
    %2976 = vmatprep.subr.mxu0 0.0
    %2977 = vmatpush2.msra.mxu0 0.0
    %2978 = vmatprep.subr.mxu0 0.0
    %2979 = vmatpush2.msra.mxu0 0.0
    %2980 = vmatprep.mubr.f32.mxu0 0.0
    %2981 = vmatmul.mubr.f32.gmra.mxu0 %v2914
    %v2982 = vpop.f32.mrf.mxu0
    %v2983 = vadd.f32 %v367, %v2982
    %v2984 = vpop.f32.mrf.mxu0
    %2985 = vdwg.mxu0
    %v2986 = vmul.f32 %v2910, %v2983
    %v2987 = vadd.f32 %v2830, %v2986
    %v2988 = vtanh.pop %v2987
    %v2989 = vsub.f32 1.0, %v2910
    %2991 = vrot.lane.b32.xlu0 %v2988, 64
    %v2992 = vpop.permute.xlu0 %2991
    %v2994 = vmul.f32 %v2989, %v2992
    %v2995 = vmul.f32 %v2910, %v2599
    %v2996 = vadd.f32 %v2994, %v2995
    %2997 = vmatprep.subr.mxu0 0.0
    %2998 = vmatpush1.msra.mxu0 0.0
    %2999 = vmatprep.subr.mxu0 0.0
    %3000 = vmatpush1.msra.mxu0 0.0
    %3001 = vmatprep.subr.mxu0 0.0
    %3002 = vmatpush1.msra.mxu0 0.0
    %3003 = vmatprep.subr.mxu0 0.0
    %3004 = vmatpush1.msra.mxu0 0.0
    %3005 = vmatprep.subr.mxu0 0.0
    %3006 = vmatpush1.msra.mxu0 0.0
    %3007 = vmatprep.subr.mxu0 0.0
    %3008 = vmatpush1.msra.mxu0 0.0
    %3009 = vmatprep.subr.mxu0 0.0
    %3010 = vmatpush1.msra.mxu0 0.0
    %3011 = vmatprep.subr.mxu0 0.0
    %3012 = vmatpush1.msra.mxu0 0.0
    %3013 = vmatprep.subr.mxu0 0.0
    %3014 = vmatpush1.msra.mxu0 %v582
    %3015 = vmatprep.subr.mxu0 0.0
    %3016 = vmatpush1.msra.mxu0 %v581
    %3017 = vmatprep.subr.mxu0 0.0
    %3018 = vmatpush1.msra.mxu0 %v580
    %3019 = vmatprep.subr.mxu0 0.0
    %3020 = vmatpush1.msra.mxu0 %v579
    %3021 = vmatprep.subr.mxu0 0.0
    %3022 = vmatpush1.msra.mxu0 %v578
    %3023 = vmatprep.subr.mxu0 0.0
    %3024 = vmatpush1.msra.mxu0 %v577
    %3025 = vmatprep.subr.mxu0 0.0
    %3026 = vmatpush1.msra.mxu0 %v576
    %3027 = vmatprep.subr.mxu0 0.0
    %3028 = vmatpush1.msra.mxu0 %v575
    %3029 = vmatprep.subr.mxu0 0.0
    %3030 = vmatpush2.msra.mxu0 0.0
    %3031 = vmatprep.subr.mxu0 0.0
    %3032 = vmatpush2.msra.mxu0 0.0
    %3033 = vmatprep.subr.mxu0 0.0
    %3034 = vmatpush2.msra.mxu0 0.0
    %3035 = vmatprep.subr.mxu0 0.0
    %3036 = vmatpush2.msra.mxu0 0.0
    %3037 = vmatprep.subr.mxu0 0.0
    %3038 = vmatpush2.msra.mxu0 0.0
    %3039 = vmatprep.subr.mxu0 0.0
    %3040 = vmatpush2.msra.mxu0 0.0
    %3041 = vmatprep.subr.mxu0 0.0
    %3042 = vmatpush2.msra.mxu0 0.0
    %3043 = vmatprep.subr.mxu0 0.0
    %3044 = vmatpush2.msra.mxu0 0.0
    %3045 = vmatprep.subr.mxu0 0.0
    %3046 = vmatpush2.msra.mxu0 0.0
    %3047 = vmatprep.subr.mxu0 0.0
    %3048 = vmatpush2.msra.mxu0 0.0
    %3049 = vmatprep.subr.mxu0 0.0
    %3050 = vmatpush2.msra.mxu0 0.0
    %3051 = vmatprep.subr.mxu0 0.0
    %3052 = vmatpush2.msra.mxu0 0.0
    %3053 = vmatprep.subr.mxu0 0.0
    %3054 = vmatpush2.msra.mxu0 0.0
    %3055 = vmatprep.subr.mxu0 0.0
    %3056 = vmatpush2.msra.mxu0 0.0
    %3057 = vmatprep.subr.mxu0 0.0
    %3058 = vmatpush2.msra.mxu0 0.0
    %3059 = vmatprep.subr.mxu0 0.0
    %3060 = vmatpush2.msra.mxu0 0.0
    %3061 = vmatprep.mubr.f32.mxu0 0.0
    %3062 = vmatmul.mubr.f32.gmra.mxu0 %v2761
    %v3063 = vpop.f32.mrf.mxu0
    %v3064 = vadd.f32 0.0, %v3063
    %v3065 = vpop.f32.mrf.mxu0
    %3066 = vdwg.mxu0
    %3067 = vmatprep.subr.mxu0 0.0
    %3068 = vmatpush1.msra.mxu0 0.0
    %3069 = vmatprep.subr.mxu0 0.0
    %3070 = vmatpush1.msra.mxu0 0.0
    %3071 = vmatprep.subr.mxu0 0.0
    %3072 = vmatpush1.msra.mxu0 0.0
    %3073 = vmatprep.subr.mxu0 0.0
    %3074 = vmatpush1.msra.mxu0 0.0
    %3075 = vmatprep.subr.mxu0 0.0
    %3076 = vmatpush1.msra.mxu0 0.0
    %3077 = vmatprep.subr.mxu0 0.0
    %3078 = vmatpush1.msra.mxu0 0.0
    %3079 = vmatprep.subr.mxu0 0.0
    %3080 = vmatpush1.msra.mxu0 0.0
    %3081 = vmatprep.subr.mxu0 0.0
    %3082 = vmatpush1.msra.mxu0 0.0
    %3083 = vmatprep.subr.mxu0 0.0
    %3084 = vmatpush1.msra.mxu0 %v660
    %3085 = vmatprep.subr.mxu0 0.0
    %3086 = vmatpush1.msra.mxu0 %v659
    %3087 = vmatprep.subr.mxu0 0.0
    %3088 = vmatpush1.msra.mxu0 %v658
    %3089 = vmatprep.subr.mxu0 0.0
    %3090 = vmatpush1.msra.mxu0 %v657
    %3091 = vmatprep.subr.mxu0 0.0
    %3092 = vmatpush1.msra.mxu0 %v656
    %3093 = vmatprep.subr.mxu0 0.0
    %3094 = vmatpush1.msra.mxu0 %v655
    %3095 = vmatprep.subr.mxu0 0.0
    %3096 = vmatpush1.msra.mxu0 %v654
    %3097 = vmatprep.subr.mxu0 0.0
    %3098 = vmatpush1.msra.mxu0 %v653
    %3099 = vmatprep.subr.mxu0 0.0
    %3100 = vmatpush2.msra.mxu0 0.0
    %3101 = vmatprep.subr.mxu0 0.0
    %3102 = vmatpush2.msra.mxu0 0.0
    %3103 = vmatprep.subr.mxu0 0.0
    %3104 = vmatpush2.msra.mxu0 0.0
    %3105 = vmatprep.subr.mxu0 0.0
    %3106 = vmatpush2.msra.mxu0 0.0
    %3107 = vmatprep.subr.mxu0 0.0
    %3108 = vmatpush2.msra.mxu0 0.0
    %3109 = vmatprep.subr.mxu0 0.0
    %3110 = vmatpush2.msra.mxu0 0.0
    %3111 = vmatprep.subr.mxu0 0.0
    %3112 = vmatpush2.msra.mxu0 0.0
    %3113 = vmatprep.subr.mxu0 0.0
    %3114 = vmatpush2.msra.mxu0 0.0
    %3115 = vmatprep.subr.mxu0 0.0
    %3116 = vmatpush2.msra.mxu0 0.0
    %3117 = vmatprep.subr.mxu0 0.0
    %3118 = vmatpush2.msra.mxu0 0.0
    %3119 = vmatprep.subr.mxu0 0.0
    %3120 = vmatpush2.msra.mxu0 0.0
    %3121 = vmatprep.subr.mxu0 0.0
    %3122 = vmatpush2.msra.mxu0 0.0
    %3123 = vmatprep.subr.mxu0 0.0
    %3124 = vmatpush2.msra.mxu0 0.0
    %3125 = vmatprep.subr.mxu0 0.0
    %3126 = vmatpush2.msra.mxu0 0.0
    %3127 = vmatprep.subr.mxu0 0.0
    %3128 = vmatpush2.msra.mxu0 0.0
    %3129 = vmatprep.subr.mxu0 0.0
    %3130 = vmatpush2.msra.mxu0 0.0
    %3131 = vmatprep.mubr.f32.mxu0 0.0
    %3132 = vmatmul.mubr.f32.gmra.mxu0 %v2761
    %v3133 = vpop.f32.mrf.mxu0
    %v3134 = vadd.f32 %v360, %v3133
    %v3135 = vpop.f32.mrf.mxu0
    %3136 = vdwg.mxu0
    %v3137 = vadd.f32 %v238, %v3064
    %v3138 = vxor.u32 %v3137, 2147483648
    %v3139 = vmul.f32 %v3138, 1.442695
    %v3140 = vpow.pop %v3139
    %v3141 = vadd.f32 %v3140, 1.0
    %v3142 = vrcp.pop %v3141
    %v3143 = vmul.f32 1.0, %v3142
    %v3144 = vmul.f32 %v3143, %v3134
    %v3145 = vadd.f32 %v352, %v3144
    %v3146 = vtanh.pop %v3145
    %v3147 = vsub.f32 1.0, %v3143
    %3149 = vrot.lane.b32.xlu0 %v3146, 64
    %v3150 = vpop.permute.xlu0 %3149
    %v3152 = vmul.f32 %v3147, %v3150
    %v3153 = vmul.f32 %v3143, %v2757
    %v3154 = vadd.f32 %v3152, %v3153
    %3156 = vrot.lane.b32.xlu0 %v3154, 64
    %v3157 = vpop.permute.xlu0 %3156
    %v3158 = vsel %vm403, %v3157, 0
    %3160 = vmatprep.subr.mxu0 0.0
    %3161 = vmatpush1.msra.mxu0 0.0
    %3162 = vmatprep.subr.mxu0 0.0
    %3163 = vmatpush1.msra.mxu0 0.0
    %3164 = vmatprep.subr.mxu0 0.0
    %3165 = vmatpush1.msra.mxu0 0.0
    %3166 = vmatprep.subr.mxu0 0.0
    %3167 = vmatpush1.msra.mxu0 0.0
    %3168 = vmatprep.subr.mxu0 0.0
    %3169 = vmatpush1.msra.mxu0 0.0
    %3170 = vmatprep.subr.mxu0 0.0
    %3171 = vmatpush1.msra.mxu0 0.0
    %3172 = vmatprep.subr.mxu0 0.0
    %3173 = vmatpush1.msra.mxu0 0.0
    %3174 = vmatprep.subr.mxu0 0.0
    %3175 = vmatpush1.msra.mxu0 0.0
    %3176 = vmatprep.subr.mxu0 0.0
    %3177 = vmatpush1.msra.mxu0 %v393
    %3178 = vmatprep.subr.mxu0 0.0
    %3179 = vmatpush1.msra.mxu0 %v392
    %3180 = vmatprep.subr.mxu0 0.0
    %3181 = vmatpush1.msra.mxu0 %v391
    %3182 = vmatprep.subr.mxu0 0.0
    %3183 = vmatpush1.msra.mxu0 %v390
    %3184 = vmatprep.subr.mxu0 0.0
    %3185 = vmatpush1.msra.mxu0 %v389
    %3186 = vmatprep.subr.mxu0 0.0
    %3187 = vmatpush1.msra.mxu0 %v388
    %3188 = vmatprep.subr.mxu0 0.0
    %3189 = vmatpush1.msra.mxu0 %v387
    %3190 = vmatprep.subr.mxu0 0.0
    %3191 = vmatpush1.msra.mxu0 %v386
    %3192 = vmatprep.subr.mxu0 0.0
    %3193 = vmatpush2.msra.mxu0 0.0
    %3194 = vmatprep.subr.mxu0 0.0
    %3195 = vmatpush2.msra.mxu0 0.0
    %3196 = vmatprep.subr.mxu0 0.0
    %3197 = vmatpush2.msra.mxu0 0.0
    %3198 = vmatprep.subr.mxu0 0.0
    %3199 = vmatpush2.msra.mxu0 0.0
    %3200 = vmatprep.subr.mxu0 0.0
    %3201 = vmatpush2.msra.mxu0 0.0
    %3202 = vmatprep.subr.mxu0 0.0
    %3203 = vmatpush2.msra.mxu0 0.0
    %3204 = vmatprep.subr.mxu0 0.0
    %3205 = vmatpush2.msra.mxu0 0.0
    %3206 = vmatprep.subr.mxu0 0.0
    %3207 = vmatpush2.msra.mxu0 0.0
    %3208 = vmatprep.subr.mxu0 0.0
    %3209 = vmatpush2.msra.mxu0 0.0
    %3210 = vmatprep.subr.mxu0 0.0
    %3211 = vmatpush2.msra.mxu0 0.0
    %3212 = vmatprep.subr.mxu0 0.0
    %3213 = vmatpush2.msra.mxu0 0.0
    %3214 = vmatprep.subr.mxu0 0.0
    %3215 = vmatpush2.msra.mxu0 0.0
    %3216 = vmatprep.subr.mxu0 0.0
    %3217 = vmatpush2.msra.mxu0 0.0
    %3218 = vmatprep.subr.mxu0 0.0
    %3219 = vmatpush2.msra.mxu0 0.0
    %3220 = vmatprep.subr.mxu0 0.0
    %3221 = vmatpush2.msra.mxu0 0.0
    %3222 = vmatprep.subr.mxu0 0.0
    %3223 = vmatpush2.msra.mxu0 0.0
    %3224 = vmatprep.mubr.f32.mxu0 0.0
    %3225 = vmatmul.mubr.f32.gmra.mxu0 %v3158
    %v3226 = vpop.f32.mrf.mxu0
    %v3227 = vadd.f32 %v398, %v3226
    %v3228 = vpop.f32.mrf.mxu0
    %3229 = vdwg.mxu0
    %v3231 = vsel %vm403, %v3157, %v2996
    %3232 = vmatprep.subr.mxu0 0.0
    %3233 = vmatpush1.msra.mxu0 %v841
    %3234 = vmatprep.subr.mxu0 0.0
    %3235 = vmatpush1.msra.mxu0 %v840
    %3236 = vmatprep.subr.mxu0 0.0
    %3237 = vmatpush1.msra.mxu0 %v839
    %3238 = vmatprep.subr.mxu0 0.0
    %3239 = vmatpush1.msra.mxu0 %v838
    %3240 = vmatprep.subr.mxu0 0.0
    %3241 = vmatpush1.msra.mxu0 %v837
    %3242 = vmatprep.subr.mxu0 0.0
    %3243 = vmatpush1.msra.mxu0 %v836
    %3244 = vmatprep.subr.mxu0 0.0
    %3245 = vmatpush1.msra.mxu0 %v835
    %3246 = vmatprep.subr.mxu0 0.0
    %3247 = vmatpush1.msra.mxu0 %v834
    %3248 = vmatprep.subr.mxu0 0.0
    %3249 = vmatpush1.msra.mxu0 %v833
    %3250 = vmatprep.subr.mxu0 0.0
    %3251 = vmatpush1.msra.mxu0 %v832
    %3252 = vmatprep.subr.mxu0 0.0
    %3253 = vmatpush1.msra.mxu0 %v831
    %3254 = vmatprep.subr.mxu0 0.0
    %3255 = vmatpush1.msra.mxu0 %v830
    %3256 = vmatprep.subr.mxu0 0.0
    %3257 = vmatpush1.msra.mxu0 %v829
    %3258 = vmatprep.subr.mxu0 0.0
    %3259 = vmatpush1.msra.mxu0 %v828
    %3260 = vmatprep.subr.mxu0 0.0
    %3261 = vmatpush1.msra.mxu0 %v827
    %3262 = vmatprep.subr.mxu0 0.0
    %3263 = vmatpush1.msra.mxu0 %v826
    %3264 = vmatprep.subr.mxu0 0.0
    %3265 = vmatpush2.msra.mxu0 0.0
    %3266 = vmatprep.subr.mxu0 0.0
    %3267 = vmatpush2.msra.mxu0 0.0
    %3268 = vmatprep.subr.mxu0 0.0
    %3269 = vmatpush2.msra.mxu0 0.0
    %3270 = vmatprep.subr.mxu0 0.0
    %3271 = vmatpush2.msra.mxu0 0.0
    %3272 = vmatprep.subr.mxu0 0.0
    %3273 = vmatpush2.msra.mxu0 0.0
    %3274 = vmatprep.subr.mxu0 0.0
    %3275 = vmatpush2.msra.mxu0 0.0
    %3276 = vmatprep.subr.mxu0 0.0
    %3277 = vmatpush2.msra.mxu0 0.0
    %3278 = vmatprep.subr.mxu0 0.0
    %3279 = vmatpush2.msra.mxu0 0.0
    %3280 = vmatprep.subr.mxu0 0.0
    %3281 = vmatpush2.msra.mxu0 0.0
    %3282 = vmatprep.subr.mxu0 0.0
    %3283 = vmatpush2.msra.mxu0 0.0
    %3284 = vmatprep.subr.mxu0 0.0
    %3285 = vmatpush2.msra.mxu0 0.0
    %3286 = vmatprep.subr.mxu0 0.0
    %3287 = vmatpush2.msra.mxu0 0.0
    %3288 = vmatprep.subr.mxu0 0.0
    %3289 = vmatpush2.msra.mxu0 0.0
    %3290 = vmatprep.subr.mxu0 0.0
    %3291 = vmatpush2.msra.mxu0 0.0
    %3292 = vmatprep.subr.mxu0 0.0
    %3293 = vmatpush2.msra.mxu0 0.0
    %3294 = vmatprep.subr.mxu0 0.0
    %3295 = vmatpush2.msra.mxu0 0.0
    %3296 = vmatprep.mubr.f32.mxu0 0.0
    %3297 = vmatmul.mubr.f32.gmra.mxu0 %v3231
    %v3298 = vpop.f32.mrf.mxu0
    %v3299 = vadd.f32 %v488, %v3298
    %v3300 = vpop.f32.mrf.mxu0
    %3301 = vdwg.mxu0
    %v3302 = vxor.u32 %v3299, 2147483648
    %v3303 = vmul.f32 %v3302, 1.442695
    %v3304 = vpow.pop %v3303
    %v3305 = vadd.f32 %v3304, 1.0
    %v3306 = vrcp.pop %v3305
    %v3307 = vmul.f32 1.0, %v3306
    %3309 = vrot.lane.b32.xlu0 %v2996, 64
    %v3310 = vpop.permute.xlu0 %3309
    %v3311 = vsel %vm403, %v3310, 0
    %3313 = vmatprep.subr.mxu0 0.0
    %3314 = vmatpush1.msra.mxu0 0.0
    %3315 = vmatprep.subr.mxu0 0.0
    %3316 = vmatpush1.msra.mxu0 0.0
    %3317 = vmatprep.subr.mxu0 0.0
    %3318 = vmatpush1.msra.mxu0 0.0
    %3319 = vmatprep.subr.mxu0 0.0
    %3320 = vmatpush1.msra.mxu0 0.0
    %3321 = vmatprep.subr.mxu0 0.0
    %3322 = vmatpush1.msra.mxu0 0.0
    %3323 = vmatprep.subr.mxu0 0.0
    %3324 = vmatpush1.msra.mxu0 0.0
    %3325 = vmatprep.subr.mxu0 0.0
    %3326 = vmatpush1.msra.mxu0 0.0
    %3327 = vmatprep.subr.mxu0 0.0
    %3328 = vmatpush1.msra.mxu0 0.0
    %3329 = vmatprep.subr.mxu0 0.0
    %3330 = vmatpush1.msra.mxu0 %v925
    %3331 = vmatprep.subr.mxu0 0.0
    %3332 = vmatpush1.msra.mxu0 %v924
    %3333 = vmatprep.subr.mxu0 0.0
    %3334 = vmatpush1.msra.mxu0 %v923
    %3335 = vmatprep.subr.mxu0 0.0
    %3336 = vmatpush1.msra.mxu0 %v922
    %3337 = vmatprep.subr.mxu0 0.0
    %3338 = vmatpush1.msra.mxu0 %v921
    %3339 = vmatprep.subr.mxu0 0.0
    %3340 = vmatpush1.msra.mxu0 %v920
    %3341 = vmatprep.subr.mxu0 0.0
    %3342 = vmatpush1.msra.mxu0 %v919
    %3343 = vmatprep.subr.mxu0 0.0
    %3344 = vmatpush1.msra.mxu0 %v918
    %3345 = vmatprep.subr.mxu0 0.0
    %3346 = vmatpush2.msra.mxu0 0.0
    %3347 = vmatprep.subr.mxu0 0.0
    %3348 = vmatpush2.msra.mxu0 0.0
    %3349 = vmatprep.subr.mxu0 0.0
    %3350 = vmatpush2.msra.mxu0 0.0
    %3351 = vmatprep.subr.mxu0 0.0
    %3352 = vmatpush2.msra.mxu0 0.0
    %3353 = vmatprep.subr.mxu0 0.0
    %3354 = vmatpush2.msra.mxu0 0.0
    %3355 = vmatprep.subr.mxu0 0.0
    %3356 = vmatpush2.msra.mxu0 0.0
    %3357 = vmatprep.subr.mxu0 0.0
    %3358 = vmatpush2.msra.mxu0 0.0
    %3359 = vmatprep.subr.mxu0 0.0
    %3360 = vmatpush2.msra.mxu0 0.0
    %3361 = vmatprep.subr.mxu0 0.0
    %3362 = vmatpush2.msra.mxu0 0.0
    %3363 = vmatprep.subr.mxu0 0.0
    %3364 = vmatpush2.msra.mxu0 0.0
    %3365 = vmatprep.subr.mxu0 0.0
    %3366 = vmatpush2.msra.mxu0 0.0
    %3367 = vmatprep.subr.mxu0 0.0
    %3368 = vmatpush2.msra.mxu0 0.0
    %3369 = vmatprep.subr.mxu0 0.0
    %3370 = vmatpush2.msra.mxu0 0.0
    %3371 = vmatprep.subr.mxu0 0.0
    %3372 = vmatpush2.msra.mxu0 0.0
    %3373 = vmatprep.subr.mxu0 0.0
    %3374 = vmatpush2.msra.mxu0 0.0
    %3375 = vmatprep.subr.mxu0 0.0
    %3376 = vmatpush2.msra.mxu0 0.0
    %3377 = vmatprep.mubr.f32.mxu0 0.0
    %3378 = vmatmul.mubr.f32.gmra.mxu0 %v3311
    %v3379 = vpop.f32.mrf.mxu0
    %v3380 = vadd.f32 %v367, %v3379
    %v3381 = vpop.f32.mrf.mxu0
    %3382 = vdwg.mxu0
    %v3383 = vmul.f32 %v3307, %v3380
    %v3384 = vadd.f32 %v3227, %v3383
    %v3385 = vtanh.pop %v3384
    %v3386 = vsub.f32 1.0, %v3307
    %3388 = vrot.lane.b32.xlu0 %v3385, 64
    %v3389 = vpop.permute.xlu0 %3388
    %v3391 = vmul.f32 %v3386, %v3389
    %v3392 = vmul.f32 %v3307, %v2996
    %v3393 = vadd.f32 %v3391, %v3392
    %v3394 = vmax.f32 %v3393, 0.0
    %v3395 = vld [vmem:[%s14] sm:$0xff]
    %v3396 = vld [vmem:[%s14 + $0x8] sm:$0xff]
    %v3397 = vld [vmem:[%s14 + $0x10] sm:$0xff]
    %v3398 = vld [vmem:[%s14 + $0x18] sm:$0xff]
    %v3399 = vld [vmem:[%s14 + $0x20] sm:$0xff]
    %v3400 = vld [vmem:[%s14 + $0x28] sm:$0xff]
    %v3401 = vld [vmem:[%s14 + $0x30] sm:$0xff]
    %v3402 = vld [vmem:[%s14 + $0x38] sm:$0xff]
    %v3403 = vld [vmem:[%s15] sm:$0x1]
    %v3405 = vlaneseq
    %v3406 = vshrl.u32 %v3405, 7
    %v3407 = vsub.s32 0, %v3406
    %v3408 = vrot.slane %v3403, %v3407
    %3411 = vrot.lane.b32.xlu0 %v3394, 64
    %v3412 = vpop.permute.xlu0 %3411
    %v3413 = vsel %vm403, %v3412, 0
    %3415 = vmatprep.subr.mxu0 0.0
    %3416 = vmatpush1.msra.mxu0 0.0
    %3417 = vmatprep.subr.mxu0 0.0
    %3418 = vmatpush1.msra.mxu0 0.0
    %3419 = vmatprep.subr.mxu0 0.0
    %3420 = vmatpush1.msra.mxu0 0.0
    %3421 = vmatprep.subr.mxu0 0.0
    %3422 = vmatpush1.msra.mxu0 0.0
    %3423 = vmatprep.subr.mxu0 0.0
    %3424 = vmatpush1.msra.mxu0 0.0
    %3425 = vmatprep.subr.mxu0 0.0
    %3426 = vmatpush1.msra.mxu0 0.0
    %3427 = vmatprep.subr.mxu0 0.0
    %3428 = vmatpush1.msra.mxu0 0.0
    %3429 = vmatprep.subr.mxu0 0.0
    %3430 = vmatpush1.msra.mxu0 0.0
    %3431 = vmatprep.subr.mxu0 0.0
    %3432 = vmatpush1.msra.mxu0 %v3402
    %3433 = vmatprep.subr.mxu0 0.0
    %3434 = vmatpush1.msra.mxu0 %v3401
    %3435 = vmatprep.subr.mxu0 0.0
    %3436 = vmatpush1.msra.mxu0 %v3400
    %3437 = vmatprep.subr.mxu0 0.0
    %3438 = vmatpush1.msra.mxu0 %v3399
    %3439 = vmatprep.subr.mxu0 0.0
    %3440 = vmatpush1.msra.mxu0 %v3398
    %3441 = vmatprep.subr.mxu0 0.0
    %3442 = vmatpush1.msra.mxu0 %v3397
    %3443 = vmatprep.subr.mxu0 0.0
    %3444 = vmatpush1.msra.mxu0 %v3396
    %3445 = vmatprep.subr.mxu0 0.0
    %3446 = vmatpush1.msra.mxu0 %v3395
    %3447 = vmatprep.subr.mxu0 0.0
    %3448 = vmatpush2.msra.mxu0 0.0
    %3449 = vmatprep.subr.mxu0 0.0
    %3450 = vmatpush2.msra.mxu0 0.0
    %3451 = vmatprep.subr.mxu0 0.0
    %3452 = vmatpush2.msra.mxu0 0.0
    %3453 = vmatprep.subr.mxu0 0.0
    %3454 = vmatpush2.msra.mxu0 0.0
    %3455 = vmatprep.subr.mxu0 0.0
    %3456 = vmatpush2.msra.mxu0 0.0
    %3457 = vmatprep.subr.mxu0 0.0
    %3458 = vmatpush2.msra.mxu0 0.0
    %3459 = vmatprep.subr.mxu0 0.0
    %3460 = vmatpush2.msra.mxu0 0.0
    %3461 = vmatprep.subr.mxu0 0.0
    %3462 = vmatpush2.msra.mxu0 0.0
    %3463 = vmatprep.subr.mxu0 0.0
    %3464 = vmatpush2.msra.mxu0 0.0
    %3465 = vmatprep.subr.mxu0 0.0
    %3466 = vmatpush2.msra.mxu0 0.0
    %3467 = vmatprep.subr.mxu0 0.0
    %3468 = vmatpush2.msra.mxu0 0.0
    %3469 = vmatprep.subr.mxu0 0.0
    %3470 = vmatpush2.msra.mxu0 0.0
    %3471 = vmatprep.subr.mxu0 0.0
    %3472 = vmatpush2.msra.mxu0 0.0
    %3473 = vmatprep.subr.mxu0 0.0
    %3474 = vmatpush2.msra.mxu0 0.0
    %3475 = vmatprep.subr.mxu0 0.0
    %3476 = vmatpush2.msra.mxu0 0.0
    %3477 = vmatprep.subr.mxu0 0.0
    %3478 = vmatpush2.msra.mxu0 0.0
    %3479 = vmatprep.mubr.f32.mxu0 0.0
    %3480 = vmatmul.mubr.f32.gmra.mxu0 %v3413
    %v3481 = vpop.f32.mrf.mxu0
    %v3482 = vadd.f32 %v3408, %v3481
    %v3483 = vpop.f32.mrf.mxu0
    %3484 = vdwg.mxu0
    %vm3485 = vcmask 64512
    %3486 = vst.msk [vmem:[%s16] sm:$0xff] %vm3485, %v3482
    // Predicated region
    $region78: #{deep_rnn_forward.1} parent=1 // pred_check
      _
    $region79: #{deep_rnn_forward.1} parent=1 // pred_check_branch
      %3488 = sbr.rel (0) target = $region81
    $region80: #{deep_rnn_forward.1} parent=1 // pred_region
      _
    $region81: #{deep_rnn_forward.1} parent=1 // pred_fallthru
      _
    // Predicated region
    $region82: #{deep_rnn_forward.1} parent=1 // pred_check
      _
    $region83: #{deep_rnn_forward.1} parent=1 // pred_check_branch
      %3490 = sbr.rel (0) target = $region85
    $region84: #{deep_rnn_forward.1} parent=1 // pred_region
      _
    $region85: #{deep_rnn_forward.1} parent=1 // pred_fallthru
      _
    %3491 = vsyncpa [#allocation3], 1
    %3492 = vsyncpa [#allocation5], 1

</llo_original>
